<compile_context>
chip_gen: v5e
topology: v5e:2x2
jax: 0.10.0
libtpu: 0.0.40
codegen_flags: <defaults>
</compile_context>

<pallas_src>
import numpy as np

import jax
import jax.numpy as jnp
from jax.experimental import pallas as pl
from jax.experimental.pallas import tpu as pltpu


# ----------------------------------------------------------------------------
# Host-side helpers
# ----------------------------------------------------------------------------
def _tap_masks(H, W, K=5):
    """(K*K, H*W) float32 validity masks for 'same' conv taps, row t = kh*K+kw."""
    i = np.arange(H).reshape(H, 1)
    j = np.arange(W).reshape(1, W)
    rows = []
    for kh in range(K):
        for kw in range(K):
            dh, dw = kh - K // 2, kw - K // 2
            m = (i + dh >= 0) & (i + dh < H) & (j + dw >= 0) & (j + dw < W)
            rows.append(m.reshape(H * W))
    return np.stack(rows).astype(np.float32)


# ----------------------------------------------------------------------------
# Fused ConvBlock kernel (one grid step = one image)
# ----------------------------------------------------------------------------
def _make_kernel(H, W, dim, c1, has_y, has_z, K=5):
    HW = H * W
    taps = [(kh - K // 2, kw - K // 2) for kh in range(K) for kw in range(K)]
    nt = len(taps)  # 25

    def kernel(*refs):
        it = iter(refs)
        x_ref = next(it)                          # (1, 1, HW)
        y_ref = next(it) if has_y else None       # (1, dim-c1, HW)
        mask_ref = next(it)                       # (25, HW)
        w1_ref, b1_ref = next(it), next(it)       # (c1, 25), (c1, 1)
        w2_ref, b2_ref = next(it), next(it)       # (dim, 25*dim), (dim, 1)
        wl_ref, bl_ref = next(it), next(it)       # (cl, 25*dim), (cl, 1)
        out_ref = next(it)                        # (1, 1, HW)
        z_ref = next(it) if has_z else None       # (1, dim//2, HW)
        col_ref = next(it)                        # VMEM scratch (25*dim, HW)

        def tap_slab(a, t):
            """slab[c, p] = a[c, p + dh*W + dw] if (i+dh, j+dw) in-bounds else 0."""
            dh, dw = taps[t]
            off = dh * W + dw
            s = a if off == 0 else jnp.roll(a, -off, axis=1)
            if dh == 0 and dw == 0:
                return s
            return s * mask_ref[t:t + 1, :]       # (1, HW) mask broadcast over C

        def gemm(w, col):
            return jax.lax.dot_general(
                w, col, (((1,), (0,)), ((), ())),
                preferred_element_type=jnp.float32)

        # ---- conv1 (Cin = 1) + ReLU: im2col rows 0..24 of col scratch -------
        x0 = x_ref[0].astype(jnp.float32)                       # (1, HW)
        for t in range(nt):
            col_ref[t:t + 1, :] = tap_slab(x0, t)
        h1 = gemm(w1_ref[...], col_ref[0:nt, :]) + b1_ref[...]
        h1 = jnp.maximum(h1, 0.0)                                # (c1, HW)

        # ---- channel concat fused: conv2 input = [h1 ; y] on sublanes -------
        if has_y:
            a1 = jnp.concatenate([h1, y_ref[0].astype(jnp.float32)], axis=0)
        else:
            a1 = h1                                              # (dim, HW)

        # ---- conv2 + ReLU: single (dim, 200) x (200, HW) GEMM ----------------
        for t in range(nt):
            col_ref[t * dim:(t + 1) * dim, :] = tap_slab(a1, t)
        h2 = gemm(w2_ref[...], col_ref[...]) + b2_ref[...]
        h2 = jnp.maximum(h2, 0.0)                                # (dim, HW)

        # ---- conv3 + trans_embed: shared im2col, one GEMM --------------------
        for t in range(nt):
            col_ref[t * dim:(t + 1) * dim, :] = tap_slab(h2, t)
        last = gemm(wl_ref[...], col_ref[...]) + bl_ref[...]     # (1[+dim//2], HW)
        out_ref[0] = last[0:1, :]
        if has_z:
            z_ref[0] = last[1:, :]

    return kernel


# ----------------------------------------------------------------------------
# ConvBlock forward (mirrors the PyTorch module)
# ----------------------------------------------------------------------------
def convblock_forward(params, x, y):
    """x: (B, 1, H, W) NCHW; y: (B, dim//2, H, W) NCHW or None -> (out, z) NCHW."""
    B, _, H, W = x.shape
    HW = H * W
    c1 = params["w1"].shape[-1]
    dim = params["w2"].shape[-1]
    has_y = y is not None
    has_z = "wt" in params

    # GEMM-ready lane-dense weights: (Cout, 25*Cin), column index = t*Cin + ci.
    w1g = params["w1"].reshape(-1, c1).T                         # (c1, 25)
    w2g = params["w2"].reshape(-1, dim).T                        # (dim, 25*dim)
    if has_z:
        wt5 = jnp.pad(params["wt"], ((1, 1), (1, 1), (0, 0), (0, 0)))
        wl = jnp.concatenate([params["w3"], wt5], axis=-1)       # (5,5,dim,1+dim//2)
        bl = jnp.concatenate([params["b3"], params["bt"]])
    else:
        wl, bl = params["w3"], params["b3"]
    cl = wl.shape[-1]
    wlg = wl.reshape(-1, cl).T                                   # (cl, 25*dim)
    b1 = params["b1"].reshape(c1, 1)
    b2 = params["b2"].reshape(dim, 1)
    blg = bl.reshape(cl, 1)
    masks = jnp.asarray(_tap_masks(H, W))                        # (25, HW)

    # NCHW -> (B, C, H*W): free reshape; spatial stays lane-dense in-kernel.
    x_flat = x.reshape(B, 1, HW).astype(jnp.float32)

    inputs = [x_flat]
    in_specs = [pl.BlockSpec((1, 1, HW), lambda b: (b, 0, 0))]
    if has_y:
        cy = y.shape[1]
        y_flat = y.reshape(B, cy, HW).astype(jnp.float32)
        inputs.append(y_flat)
        in_specs.append(pl.BlockSpec((1, cy, HW), lambda b: (b, 0, 0)))
    small = [masks, w1g, b1, w2g, b2, wlg, blg]
    inputs += small
    in_specs += [pl.BlockSpec(a.shape, lambda b: (0, 0)) for a in small]

    out_shapes = [jax.ShapeDtypeStruct((B, 1, HW), jnp.float32)]
    out_specs = [pl.BlockSpec((1, 1, HW), lambda b: (b, 0, 0))]
    if has_z:
        cz = dim // 2
        out_shapes.append(jax.ShapeDtypeStruct((B, cz, HW), jnp.float32))
        out_specs.append(pl.BlockSpec((1, cz, HW), lambda b: (b, 0, 0)))

    kernel = _make_kernel(H, W, dim, c1, has_y, has_z)

    res = pl.pallas_call(
        kernel,
        out_shape=tuple(out_shapes),
        grid=(B,),
        in_specs=in_specs,
        out_specs=tuple(out_specs),
        scratch_shapes=[pltpu.VMEM((25 * dim, HW), jnp.float32)],  # ~200 KiB
        compiler_params=pltpu.CompilerParams(
            dimension_semantics=("parallel",)),
    )(*inputs)

    out = res[0].reshape(B, 1, H, W)
    z = res[1].reshape(B, dim // 2, H, W) if has_z else None
    return out, z


# ----------------------------------------------------------------------------
# Plain-JAX reference (lax.conv) for correctness checking
# ----------------------------------------------------------------------------
def reference_forward(params, x, y):
    dn = ("NHWC", "HWIO", "NHWC")

    def conv(a, w, b, pad):
        r = jax.lax.conv_general_dilated(a, w, (1, 1), [(pad, pad), (pad, pad)],
                                         dimension_numbers=dn)
        return r + b.reshape(1, 1, 1, -1)

    h = jax.nn.relu(conv(jnp.transpose(x, (0, 2, 3, 1)), params["w1"],
                         params["b1"], 2))
    if y is not None:
        h = jnp.concatenate([h, jnp.transpose(y, (0, 2, 3, 1))], axis=-1)
    h = jax.nn.relu(conv(h, params["w2"], params["b2"], 2))
    out = jnp.transpose(conv(h, params["w3"], params["b3"], 2), (0, 3, 1, 2))
    z = None
    if "wt" in params:
        z = jnp.transpose(conv(h, params["wt"], params["bt"], 1), (0, 3, 1, 2))
    return out, z


# ----------------------------------------------------------------------------
# Deterministic parameter init (shapes follow the PyTorch __init__).
# Weights stored HWIO = torch_weight.transpose(2, 3, 1, 0).
# ----------------------------------------------------------------------------
def init_params(key, dim, *, first=False, last=False):
    ks = jax.random.split(key, 8)

    def w(k, kh, kw, cin, cout, scale=0.1):
        return jax.random.normal(k, (kh, kw, cin, cout), jnp.float32) * scale

    c1 = dim if first else dim // 2
    p = {
        "w1": w(ks[0], 5, 5, 1, c1),
        "b1": jax.random.normal(ks[1], (c1,), jnp.float32) * 0.05,
        "w2": w(ks[2], 5, 5, dim, dim),
        "b2": jax.random.normal(ks[3], (dim,), jnp.float32) * 0.05,
        "w3": w(ks[4], 5, 5, dim, 1),
        "b3": jax.random.normal(ks[5], (1,), jnp.float32) * 0.05,
    }
    if not last:
        p["wt"] = w(ks[6], 3, 3, dim, dim // 2)
        p["bt"] = jax.random.normal(ks[7], (dim // 2,), jnp.float32) * 0.05
    return p


if __name__ == "__main__":
    key = jax.random.PRNGKey(0)
    B, dim, H, W = 2, 8, 16, 16

    k1, k2, k3 = jax.random.split(key, 3)
    x = jax.random.normal(k1, (B, 1, H, W), jnp.float32)
    y = jax.random.normal(k2, (B, dim // 2, H, W), jnp.float32)  # first=False path
    params = init_params(k3, dim, first=False, last=False)

    fwd = jax.jit(convblock_forward)
    out, z = fwd(params, x, y)
    jax.block_until_ready(out)
    jax.block_until_ready(z)

    assert out.shape == (B, 1, H, W), out.shape
    assert z.shape == (B, dim // 2, H, W), z.shape
    assert bool(jnp.all(jnp.isfinite(out))) and bool(jnp.all(jnp.isfinite(z)))

    # correctness vs plain-JAX conv reference (f32 end-to-end; loose tol only
    # covers MXU pass-precision differences between Pallas dot and XLA conv)
    ref_out, ref_z = reference_forward(params, x, y)
    assert bool(jnp.allclose(out, ref_out, atol=5e-2, rtol=5e-2)), \
        float(jnp.max(jnp.abs(out - ref_out)))
    assert bool(jnp.allclose(z, ref_z, atol=5e-2, rtol=5e-2)), \
        float(jnp.max(jnp.abs(z - ref_z)))

    print("KERNEL_OK")
</pallas_src>

<mosaic_0001>
module attributes {stable_mosaic.version = 11 : i64} {
  func.func @kernel(%arg0: i32, %arg1: memref<1x1x256xf32, #tpu.memory_space<vmem>>, %arg2: memref<1x4x256xf32, #tpu.memory_space<vmem>>, %arg3: memref<25x256xf32, #tpu.memory_space<vmem>>, %arg4: memref<4x25xf32, #tpu.memory_space<vmem>>, %arg5: memref<4x1xf32, #tpu.memory_space<vmem>>, %arg6: memref<8x200xf32, #tpu.memory_space<vmem>>, %arg7: memref<8x1xf32, #tpu.memory_space<vmem>>, %arg8: memref<5x200xf32, #tpu.memory_space<vmem>>, %arg9: memref<5x1xf32, #tpu.memory_space<vmem>>, %arg10: memref<1x1x256xf32, #tpu.memory_space<vmem>>, %arg11: memref<1x4x256xf32, #tpu.memory_space<vmem>>, %arg12: memref<200x256xf32, #tpu.memory_space<vmem>>) attributes {dimension_semantics = [#tpu.dimension_semantics<parallel>], iteration_bounds = array<i64: 2>, scalar_prefetch = 0 : i64, scratch_operands = 1 : i64, tpu.core_type = #tpu.core_type<tc>, window_params = [{transform_indices = @transform_0, window_bounds = array<i64: 1, 1, 256>}, {transform_indices = @transform_1, window_bounds = array<i64: 1, 4, 256>}, {pipeline_mode = #tpu.pipeline_mode<synchronous>, transform_indices = @transform_2, window_bounds = array<i64: 25, 256>}, {pipeline_mode = #tpu.pipeline_mode<synchronous>, transform_indices = @transform_3, window_bounds = array<i64: 4, 25>}, {pipeline_mode = #tpu.pipeline_mode<synchronous>, transform_indices = @transform_4, window_bounds = array<i64: 4, 1>}, {pipeline_mode = #tpu.pipeline_mode<synchronous>, transform_indices = @transform_5, window_bounds = array<i64: 8, 200>}, {pipeline_mode = #tpu.pipeline_mode<synchronous>, transform_indices = @transform_6, window_bounds = array<i64: 8, 1>}, {pipeline_mode = #tpu.pipeline_mode<synchronous>, transform_indices = @transform_7, window_bounds = array<i64: 5, 200>}, {pipeline_mode = #tpu.pipeline_mode<synchronous>, transform_indices = @transform_8, window_bounds = array<i64: 5, 1>}, {transform_indices = @transform_9, window_bounds = array<i64: 1, 1, 256>}, {transform_indices = @transform_10, window_bounds = array<i64: 1, 4, 256>}]} {
    %c0 = arith.constant 0 : index
    %c0_0 = arith.constant 0 : index
    %c0_1 = arith.constant 0 : index
    %0 = vector.load %arg1[%c0, %c0_0, %c0_1] : memref<1x1x256xf32, #tpu.memory_space<vmem>>, vector<1x1x256xf32>
    %1 = vector.shape_cast %0 : vector<1x1x256xf32> to vector<1x256xf32>
    %2 = vector.extract_strided_slice %1 {offsets = [0, 222], sizes = [1, 34], strides = [1, 1]} : vector<1x256xf32> to vector<1x34xf32>
    %3 = vector.extract_strided_slice %1 {offsets = [0, 0], sizes = [1, 222], strides = [1, 1]} : vector<1x256xf32> to vector<1x222xf32>
    %4 = tpu.concatenate %2, %3 in 1 : vector<1x34xf32>, vector<1x222xf32> -> vector<1x256xf32>
    %c0_2 = arith.constant 0 : index
    %c0_3 = arith.constant 0 : index
    %5 = vector.load %arg3[%c0_2, %c0_3] : memref<25x256xf32, #tpu.memory_space<vmem>>, vector<1x256xf32>
    %6 = arith.mulf %4, %5 : vector<1x256xf32>
    %c0_4 = arith.constant 0 : index
    %c0_5 = arith.constant 0 : index
    %7 = vector.load %arg12[%c0_4, %c0_5] : memref<200x256xf32, #tpu.memory_space<vmem>>, vector<1x256xf32>
    tpu.vector_store %arg12[%c0_4, %c0_5], %6 {strides = array<i32>} : memref<200x256xf32, #tpu.memory_space<vmem>>, vector<1x256xf32>,
    %8 = vector.extract_strided_slice %1 {offsets = [0, 223], sizes = [1, 33], strides = [1, 1]} : vector<1x256xf32> to vector<1x33xf32>
    %9 = vector.extract_strided_slice %1 {offsets = [0, 0], sizes = [1, 223], strides = [1, 1]} : vector<1x256xf32> to vector<1x223xf32>
    %10 = tpu.concatenate %8, %9 in 1 : vector<1x33xf32>, vector<1x223xf32> -> vector<1x256xf32>
    %c1 = arith.constant 1 : index
    %c0_6 = arith.constant 0 : index
    %11 = vector.load %arg3[%c1, %c0_6] : memref<25x256xf32, #tpu.memory_space<vmem>>, vector<1x256xf32>
    %12 = arith.mulf %10, %11 : vector<1x256xf32>
    %c1_7 = arith.constant 1 : index
    %c0_8 = arith.constant 0 : index
    %13 = vector.load %arg12[%c1_7, %c0_8] : memref<200x256xf32, #tpu.memory_space<vmem>>, vector<1x256xf32>
    tpu.vector_store %arg12[%c1_7, %c0_8], %12 {strides = array<i32>} : memref<200x256xf32, #tpu.memory_space<vmem>>, vector<1x256xf32>,
    %14 = vector.extract_strided_slice %1 {offsets = [0, 224], sizes = [1, 32], strides = [1, 1]} : vector<1x256xf32> to vector<1x32xf32>
    %15 = vector.extract_strided_slice %1 {offsets = [0, 0], sizes = [1, 224], strides = [1, 1]} : vector<1x256xf32> to vector<1x224xf32>
    %16 = tpu.concatenate %14, %15 in 1 : vector<1x32xf32>, vector<1x224xf32> -> vector<1x256xf32>
    %c2 = arith.constant 2 : index
    %c0_9 = arith.constant 0 : index
    %17 = vector.load %arg3[%c2, %c0_9] : memref<25x256xf32, #tpu.memory_space<vmem>>, vector<1x256xf32>
    %18 = arith.mulf %16, %17 : vector<1x256xf32>
    %c2_10 = arith.constant 2 : index
    %c0_11 = arith.constant 0 : index
    %19 = vector.load %arg12[%c2_10, %c0_11] : memref<200x256xf32, #tpu.memory_space<vmem>>, vector<1x256xf32>
    tpu.vector_store %arg12[%c2_10, %c0_11], %18 {strides = array<i32>} : memref<200x256xf32, #tpu.memory_space<vmem>>, vector<1x256xf32>,
    %20 = vector.extract_strided_slice %1 {offsets = [0, 225], sizes = [1, 31], strides = [1, 1]} : vector<1x256xf32> to vector<1x31xf32>
    %21 = vector.extract_strided_slice %1 {offsets = [0, 0], sizes = [1, 225], strides = [1, 1]} : vector<1x256xf32> to vector<1x225xf32>
    %22 = tpu.concatenate %20, %21 in 1 : vector<1x31xf32>, vector<1x225xf32> -> vector<1x256xf32>
    %c3 = arith.constant 3 : index
    %c0_12 = arith.constant 0 : index
    %23 = vector.load %arg3[%c3, %c0_12] : memref<25x256xf32, #tpu.memory_space<vmem>>, vector<1x256xf32>
    %24 = arith.mulf %22, %23 : vector<1x256xf32>
    %c3_13 = arith.constant 3 : index
    %c0_14 = arith.constant 0 : index
    %25 = vector.load %arg12[%c3_13, %c0_14] : memref<200x256xf32, #tpu.memory_space<vmem>>, vector<1x256xf32>
    tpu.vector_store %arg12[%c3_13, %c0_14], %24 {strides = array<i32>} : memref<200x256xf32, #tpu.memory_space<vmem>>, vector<1x256xf32>,
    %26 = vector.extract_strided_slice %1 {offsets = [0, 226], sizes = [1, 30], strides = [1, 1]} : vector<1x256xf32> to vector<1x30xf32>
    %27 = vector.extract_strided_slice %1 {offsets = [0, 0], sizes = [1, 226], strides = [1, 1]} : vector<1x256xf32> to vector<1x226xf32>
    %28 = tpu.concatenate %26, %27 in 1 : vector<1x30xf32>, vector<1x226xf32> -> vector<1x256xf32>
    %c4 = arith.constant 4 : index
    %c0_15 = arith.constant 0 : index
    %29 = vector.load %arg3[%c4, %c0_15] : memref<25x256xf32, #tpu.memory_space<vmem>>, vector<1x256xf32>
    %30 = arith.mulf %28, %29 : vector<1x256xf32>
    %c4_16 = arith.constant 4 : index
    %c0_17 = arith.constant 0 : index
    %31 = vector.load %arg12[%c4_16, %c0_17] : memref<200x256xf32, #tpu.memory_space<vmem>>, vector<1x256xf32>
    tpu.vector_store %arg12[%c4_16, %c0_17], %30 {strides = array<i32>} : memref<200x256xf32, #tpu.memory_space<vmem>>, vector<1x256xf32>,
    %32 = vector.extract_strided_slice %1 {offsets = [0, 238], sizes = [1, 18], strides = [1, 1]} : vector<1x256xf32> to vector<1x18xf32>
    %33 = vector.extract_strided_slice %1 {offsets = [0, 0], sizes = [1, 238], strides = [1, 1]} : vector<1x256xf32> to vector<1x238xf32>
    %34 = tpu.concatenate %32, %33 in 1 : vector<1x18xf32>, vector<1x238xf32> -> vector<1x256xf32>
    %c5 = arith.constant 5 : index
    %c0_18 = arith.constant 0 : index
    %35 = vector.load %arg3[%c5, %c0_18] : memref<25x256xf32, #tpu.memory_space<vmem>>, vector<1x256xf32>
    %36 = arith.mulf %34, %35 : vector<1x256xf32>
    %c5_19 = arith.constant 5 : index
    %c0_20 = arith.constant 0 : index
    %37 = vector.load %arg12[%c5_19, %c0_20] : memref<200x256xf32, #tpu.memory_space<vmem>>, vector<1x256xf32>
    tpu.vector_store %arg12[%c5_19, %c0_20], %36 {strides = array<i32>} : memref<200x256xf32, #tpu.memory_space<vmem>>, vector<1x256xf32>,
    %38 = vector.extract_strided_slice %1 {offsets = [0, 239], sizes = [1, 17], strides = [1, 1]} : vector<1x256xf32> to vector<1x17xf32>
    %39 = vector.extract_strided_slice %1 {offsets = [0, 0], sizes = [1, 239], strides = [1, 1]} : vector<1x256xf32> to vector<1x239xf32>
    %40 = tpu.concatenate %38, %39 in 1 : vector<1x17xf32>, vector<1x239xf32> -> vector<1x256xf32>
    %c6 = arith.constant 6 : index
    %c0_21 = arith.constant 0 : index
    %41 = vector.load %arg3[%c6, %c0_21] : memref<25x256xf32, #tpu.memory_space<vmem>>, vector<1x256xf32>
    %42 = arith.mulf %40, %41 : vector<1x256xf32>
    %c6_22 = arith.constant 6 : index
    %c0_23 = arith.constant 0 : index
    %43 = vector.load %arg12[%c6_22, %c0_23] : memref<200x256xf32, #tpu.memory_space<vmem>>, vector<1x256xf32>
    tpu.vector_store %arg12[%c6_22, %c0_23], %42 {strides = array<i32>} : memref<200x256xf32, #tpu.memory_space<vmem>>, vector<1x256xf32>,
    %44 = vector.extract_strided_slice %1 {offsets = [0, 240], sizes = [1, 16], strides = [1, 1]} : vector<1x256xf32> to vector<1x16xf32>
    %45 = vector.extract_strided_slice %1 {offsets = [0, 0], sizes = [1, 240], strides = [1, 1]} : vector<1x256xf32> to vector<1x240xf32>
    %46 = tpu.concatenate %44, %45 in 1 : vector<1x16xf32>, vector<1x240xf32> -> vector<1x256xf32>
    %c7 = arith.constant 7 : index
    %c0_24 = arith.constant 0 : index
    %47 = vector.load %arg3[%c7, %c0_24] : memref<25x256xf32, #tpu.memory_space<vmem>>, vector<1x256xf32>
    %48 = arith.mulf %46, %47 : vector<1x256xf32>
    %c7_25 = arith.constant 7 : index
    %c0_26 = arith.constant 0 : index
    %49 = vector.load %arg12[%c7_25, %c0_26] : memref<200x256xf32, #tpu.memory_space<vmem>>, vector<1x256xf32>
    tpu.vector_store %arg12[%c7_25, %c0_26], %48 {strides = array<i32>} : memref<200x256xf32, #tpu.memory_space<vmem>>, vector<1x256xf32>,
    %50 = vector.extract_strided_slice %1 {offsets = [0, 241], sizes = [1, 15], strides = [1, 1]} : vector<1x256xf32> to vector<1x15xf32>
    %51 = vector.extract_strided_slice %1 {offsets = [0, 0], sizes = [1, 241], strides = [1, 1]} : vector<1x256xf32> to vector<1x241xf32>
    %52 = tpu.concatenate %50, %51 in 1 : vector<1x15xf32>, vector<1x241xf32> -> vector<1x256xf32>
    %c8 = arith.constant 8 : index
    %c0_27 = arith.constant 0 : index
    %53 = vector.load %arg3[%c8, %c0_27] : memref<25x256xf32, #tpu.memory_space<vmem>>, vector<1x256xf32>
    %54 = arith.mulf %52, %53 : vector<1x256xf32>
    %c8_28 = arith.constant 8 : index
    %c0_29 = arith.constant 0 : index
    %55 = vector.load %arg12[%c8_28, %c0_29] : memref<200x256xf32, #tpu.memory_space<vmem>>, vector<1x256xf32>
    tpu.vector_store %arg12[%c8_28, %c0_29], %54 {strides = array<i32>} : memref<200x256xf32, #tpu.memory_space<vmem>>, vector<1x256xf32>,
    %56 = vector.extract_strided_slice %1 {offsets = [0, 242], sizes = [1, 14], strides = [1, 1]} : vector<1x256xf32> to vector<1x14xf32>
    %57 = vector.extract_strided_slice %1 {offsets = [0, 0], sizes = [1, 242], strides = [1, 1]} : vector<1x256xf32> to vector<1x242xf32>
    %58 = tpu.concatenate %56, %57 in 1 : vector<1x14xf32>, vector<1x242xf32> -> vector<1x256xf32>
    %c9 = arith.constant 9 : index
    %c0_30 = arith.constant 0 : index
    %59 = vector.load %arg3[%c9, %c0_30] : memref<25x256xf32, #tpu.memory_space<vmem>>, vector<1x256xf32>
    %60 = arith.mulf %58, %59 : vector<1x256xf32>
    %c9_31 = arith.constant 9 : index
    %c0_32 = arith.constant 0 : index
    %61 = vector.load %arg12[%c9_31, %c0_32] : memref<200x256xf32, #tpu.memory_space<vmem>>, vector<1x256xf32>
    tpu.vector_store %arg12[%c9_31, %c0_32], %60 {strides = array<i32>} : memref<200x256xf32, #tpu.memory_space<vmem>>, vector<1x256xf32>,
    %62 = vector.extract_strided_slice %1 {offsets = [0, 254], sizes = [1, 2], strides = [1, 1]} : vector<1x256xf32> to vector<1x2xf32>
    %63 = vector.extract_strided_slice %1 {offsets = [0, 0], sizes = [1, 254], strides = [1, 1]} : vector<1x256xf32> to vector<1x254xf32>
    %64 = tpu.concatenate %62, %63 in 1 : vector<1x2xf32>, vector<1x254xf32> -> vector<1x256xf32>
    %c10 = arith.constant 10 : index
    %c0_33 = arith.constant 0 : index
    %65 = vector.load %arg3[%c10, %c0_33] : memref<25x256xf32, #tpu.memory_space<vmem>>, vector<1x256xf32>
    %66 = arith.mulf %64, %65 : vector<1x256xf32>
    %c10_34 = arith.constant 10 : index
    %c0_35 = arith.constant 0 : index
    %67 = vector.load %arg12[%c10_34, %c0_35] : memref<200x256xf32, #tpu.memory_space<vmem>>, vector<1x256xf32>
    tpu.vector_store %arg12[%c10_34, %c0_35], %66 {strides = array<i32>} : memref<200x256xf32, #tpu.memory_space<vmem>>, vector<1x256xf32>,
    %68 = vector.extract_strided_slice %1 {offsets = [0, 255], sizes = [1, 1], strides = [1, 1]} : vector<1x256xf32> to vector<1x1xf32>
    %69 = vector.extract_strided_slice %1 {offsets = [0, 0], sizes = [1, 255], strides = [1, 1]} : vector<1x256xf32> to vector<1x255xf32>
    %70 = tpu.concatenate %68, %69 in 1 : vector<1x1xf32>, vector<1x255xf32> -> vector<1x256xf32>
    %c11 = arith.constant 11 : index
    %c0_36 = arith.constant 0 : index
    %71 = vector.load %arg3[%c11, %c0_36] : memref<25x256xf32, #tpu.memory_space<vmem>>, vector<1x256xf32>
    %72 = arith.mulf %70, %71 : vector<1x256xf32>
    %c11_37 = arith.constant 11 : index
    %c0_38 = arith.constant 0 : index
    %73 = vector.load %arg12[%c11_37, %c0_38] : memref<200x256xf32, #tpu.memory_space<vmem>>, vector<1x256xf32>
    tpu.vector_store %arg12[%c11_37, %c0_38], %72 {strides = array<i32>} : memref<200x256xf32, #tpu.memory_space<vmem>>, vector<1x256xf32>,
    %c12 = arith.constant 12 : index
    %c0_39 = arith.constant 0 : index
    %74 = vector.load %arg12[%c12, %c0_39] : memref<200x256xf32, #tpu.memory_space<vmem>>, vector<1x256xf32>
    tpu.vector_store %arg12[%c12, %c0_39], %1 {strides = array<i32>} : memref<200x256xf32, #tpu.memory_space<vmem>>, vector<1x256xf32>,
    %75 = vector.extract_strided_slice %1 {offsets = [0, 1], sizes = [1, 255], strides = [1, 1]} : vector<1x256xf32> to vector<1x255xf32>
    %76 = vector.extract_strided_slice %1 {offsets = [0, 0], sizes = [1, 1], strides = [1, 1]} : vector<1x256xf32> to vector<1x1xf32>
    %77 = tpu.concatenate %75, %76 in 1 : vector<1x255xf32>, vector<1x1xf32> -> vector<1x256xf32>
    %c13 = arith.constant 13 : index
    %c0_40 = arith.constant 0 : index
    %78 = vector.load %arg3[%c13, %c0_40] : memref<25x256xf32, #tpu.memory_space<vmem>>, vector<1x256xf32>
    %79 = arith.mulf %77, %78 : vector<1x256xf32>
    %c13_41 = arith.constant 13 : index
    %c0_42 = arith.constant 0 : index
    %80 = vector.load %arg12[%c13_41, %c0_42] : memref<200x256xf32, #tpu.memory_space<vmem>>, vector<1x256xf32>
    tpu.vector_store %arg12[%c13_41, %c0_42], %79 {strides = array<i32>} : memref<200x256xf32, #tpu.memory_space<vmem>>, vector<1x256xf32>,
    %81 = vector.extract_strided_slice %1 {offsets = [0, 2], sizes = [1, 254], strides = [1, 1]} : vector<1x256xf32> to vector<1x254xf32>
    %82 = vector.extract_strided_slice %1 {offsets = [0, 0], sizes = [1, 2], strides = [1, 1]} : vector<1x256xf32> to vector<1x2xf32>
    %83 = tpu.concatenate %81, %82 in 1 : vector<1x254xf32>, vector<1x2xf32> -> vector<1x256xf32>
    %c14 = arith.constant 14 : index
    %c0_43 = arith.constant 0 : index
    %84 = vector.load %arg3[%c14, %c0_43] : memref<25x256xf32, #tpu.memory_space<vmem>>, vector<1x256xf32>
    %85 = arith.mulf %83, %84 : vector<1x256xf32>
    %c14_44 = arith.constant 14 : index
    %c0_45 = arith.constant 0 : index
    %86 = vector.load %arg12[%c14_44, %c0_45] : memref<200x256xf32, #tpu.memory_space<vmem>>, vector<1x256xf32>
    tpu.vector_store %arg12[%c14_44, %c0_45], %85 {strides = array<i32>} : memref<200x256xf32, #tpu.memory_space<vmem>>, vector<1x256xf32>,
    %87 = vector.extract_strided_slice %1 {offsets = [0, 14], sizes = [1, 242], strides = [1, 1]} : vector<1x256xf32> to vector<1x242xf32>
    %88 = vector.extract_strided_slice %1 {offsets = [0, 0], sizes = [1, 14], strides = [1, 1]} : vector<1x256xf32> to vector<1x14xf32>
    %89 = tpu.concatenate %87, %88 in 1 : vector<1x242xf32>, vector<1x14xf32> -> vector<1x256xf32>
    %c15 = arith.constant 15 : index
    %c0_46 = arith.constant 0 : index
    %90 = vector.load %arg3[%c15, %c0_46] : memref<25x256xf32, #tpu.memory_space<vmem>>, vector<1x256xf32>
    %91 = arith.mulf %89, %90 : vector<1x256xf32>
    %c15_47 = arith.constant 15 : index
    %c0_48 = arith.constant 0 : index
    %92 = vector.load %arg12[%c15_47, %c0_48] : memref<200x256xf32, #tpu.memory_space<vmem>>, vector<1x256xf32>
    tpu.vector_store %arg12[%c15_47, %c0_48], %91 {strides = array<i32>} : memref<200x256xf32, #tpu.memory_space<vmem>>, vector<1x256xf32>,
    %93 = vector.extract_strided_slice %1 {offsets = [0, 15], sizes = [1, 241], strides = [1, 1]} : vector<1x256xf32> to vector<1x241xf32>
    %94 = vector.extract_strided_slice %1 {offsets = [0, 0], sizes = [1, 15], strides = [1, 1]} : vector<1x256xf32> to vector<1x15xf32>
    %95 = tpu.concatenate %93, %94 in 1 : vector<1x241xf32>, vector<1x15xf32> -> vector<1x256xf32>
    %c16 = arith.constant 16 : index
    %c0_49 = arith.constant 0 : index
    %96 = vector.load %arg3[%c16, %c0_49] : memref<25x256xf32, #tpu.memory_space<vmem>>, vector<1x256xf32>
    %97 = arith.mulf %95, %96 : vector<1x256xf32>
    %c16_50 = arith.constant 16 : index
    %c0_51 = arith.constant 0 : index
    %98 = vector.load %arg12[%c16_50, %c0_51] : memref<200x256xf32, #tpu.memory_space<vmem>>, vector<1x256xf32>
    tpu.vector_store %arg12[%c16_50, %c0_51], %97 {strides = array<i32>} : memref<200x256xf32, #tpu.memory_space<vmem>>, vector<1x256xf32>,
    %99 = vector.extract_strided_slice %1 {offsets = [0, 16], sizes = [1, 240], strides = [1, 1]} : vector<1x256xf32> to vector<1x240xf32>
    %100 = vector.extract_strided_slice %1 {offsets = [0, 0], sizes = [1, 16], strides = [1, 1]} : vector<1x256xf32> to vector<1x16xf32>
    %101 = tpu.concatenate %99, %100 in 1 : vector<1x240xf32>, vector<1x16xf32> -> vector<1x256xf32>
    %c17 = arith.constant 17 : index
    %c0_52 = arith.constant 0 : index
    %102 = vector.load %arg3[%c17, %c0_52] : memref<25x256xf32, #tpu.memory_space<vmem>>, vector<1x256xf32>
    %103 = arith.mulf %101, %102 : vector<1x256xf32>
    %c17_53 = arith.constant 17 : index
    %c0_54 = arith.constant 0 : index
    %104 = vector.load %arg12[%c17_53, %c0_54] : memref<200x256xf32, #tpu.memory_space<vmem>>, vector<1x256xf32>
    tpu.vector_store %arg12[%c17_53, %c0_54], %103 {strides = array<i32>} : memref<200x256xf32, #tpu.memory_space<vmem>>, vector<1x256xf32>,
    %105 = vector.extract_strided_slice %1 {offsets = [0, 17], sizes = [1, 239], strides = [1, 1]} : vector<1x256xf32> to vector<1x239xf32>
    %106 = vector.extract_strided_slice %1 {offsets = [0, 0], sizes = [1, 17], strides = [1, 1]} : vector<1x256xf32> to vector<1x17xf32>
    %107 = tpu.concatenate %105, %106 in 1 : vector<1x239xf32>, vector<1x17xf32> -> vector<1x256xf32>
    %c18 = arith.constant 18 : index
    %c0_55 = arith.constant 0 : index
    %108 = vector.load %arg3[%c18, %c0_55] : memref<25x256xf32, #tpu.memory_space<vmem>>, vector<1x256xf32>
    %109 = arith.mulf %107, %108 : vector<1x256xf32>
    %c18_56 = arith.constant 18 : index
    %c0_57 = arith.constant 0 : index
    %110 = vector.load %arg12[%c18_56, %c0_57] : memref<200x256xf32, #tpu.memory_space<vmem>>, vector<1x256xf32>
    tpu.vector_store %arg12[%c18_56, %c0_57], %109 {strides = array<i32>} : memref<200x256xf32, #tpu.memory_space<vmem>>, vector<1x256xf32>,
    %111 = vector.extract_strided_slice %1 {offsets = [0, 18], sizes = [1, 238], strides = [1, 1]} : vector<1x256xf32> to vector<1x238xf32>
    %112 = vector.extract_strided_slice %1 {offsets = [0, 0], sizes = [1, 18], strides = [1, 1]} : vector<1x256xf32> to vector<1x18xf32>
    %113 = tpu.concatenate %111, %112 in 1 : vector<1x238xf32>, vector<1x18xf32> -> vector<1x256xf32>
    %c19 = arith.constant 19 : index
    %c0_58 = arith.constant 0 : index
    %114 = vector.load %arg3[%c19, %c0_58] : memref<25x256xf32, #tpu.memory_space<vmem>>, vector<1x256xf32>
    %115 = arith.mulf %113, %114 : vector<1x256xf32>
    %c19_59 = arith.constant 19 : index
    %c0_60 = arith.constant 0 : index
    %116 = vector.load %arg12[%c19_59, %c0_60] : memref<200x256xf32, #tpu.memory_space<vmem>>, vector<1x256xf32>
    tpu.vector_store %arg12[%c19_59, %c0_60], %115 {strides = array<i32>} : memref<200x256xf32, #tpu.memory_space<vmem>>, vector<1x256xf32>,
    %117 = vector.extract_strided_slice %1 {offsets = [0, 30], sizes = [1, 226], strides = [1, 1]} : vector<1x256xf32> to vector<1x226xf32>
    %118 = vector.extract_strided_slice %1 {offsets = [0, 0], sizes = [1, 30], strides = [1, 1]} : vector<1x256xf32> to vector<1x30xf32>
    %119 = tpu.concatenate %117, %118 in 1 : vector<1x226xf32>, vector<1x30xf32> -> vector<1x256xf32>
    %c20 = arith.constant 20 : index
    %c0_61 = arith.constant 0 : index
    %120 = vector.load %arg3[%c20, %c0_61] : memref<25x256xf32, #tpu.memory_space<vmem>>, vector<1x256xf32>
    %121 = arith.mulf %119, %120 : vector<1x256xf32>
    %c20_62 = arith.constant 20 : index
    %c0_63 = arith.constant 0 : index
    %122 = vector.load %arg12[%c20_62, %c0_63] : memref<200x256xf32, #tpu.memory_space<vmem>>, vector<1x256xf32>
    tpu.vector_store %arg12[%c20_62, %c0_63], %121 {strides = array<i32>} : memref<200x256xf32, #tpu.memory_space<vmem>>, vector<1x256xf32>,
    %123 = vector.extract_strided_slice %1 {offsets = [0, 31], sizes = [1, 225], strides = [1, 1]} : vector<1x256xf32> to vector<1x225xf32>
    %124 = vector.extract_strided_slice %1 {offsets = [0, 0], sizes = [1, 31], strides = [1, 1]} : vector<1x256xf32> to vector<1x31xf32>
    %125 = tpu.concatenate %123, %124 in 1 : vector<1x225xf32>, vector<1x31xf32> -> vector<1x256xf32>
    %c21 = arith.constant 21 : index
    %c0_64 = arith.constant 0 : index
    %126 = vector.load %arg3[%c21, %c0_64] : memref<25x256xf32, #tpu.memory_space<vmem>>, vector<1x256xf32>
    %127 = arith.mulf %125, %126 : vector<1x256xf32>
    %c21_65 = arith.constant 21 : index
    %c0_66 = arith.constant 0 : index
    %128 = vector.load %arg12[%c21_65, %c0_66] : memref<200x256xf32, #tpu.memory_space<vmem>>, vector<1x256xf32>
    tpu.vector_store %arg12[%c21_65, %c0_66], %127 {strides = array<i32>} : memref<200x256xf32, #tpu.memory_space<vmem>>, vector<1x256xf32>,
    %129 = vector.extract_strided_slice %1 {offsets = [0, 32], sizes = [1, 224], strides = [1, 1]} : vector<1x256xf32> to vector<1x224xf32>
    %130 = vector.extract_strided_slice %1 {offsets = [0, 0], sizes = [1, 32], strides = [1, 1]} : vector<1x256xf32> to vector<1x32xf32>
    %131 = tpu.concatenate %129, %130 in 1 : vector<1x224xf32>, vector<1x32xf32> -> vector<1x256xf32>
    %c22 = arith.constant 22 : index
    %c0_67 = arith.constant 0 : index
    %132 = vector.load %arg3[%c22, %c0_67] : memref<25x256xf32, #tpu.memory_space<vmem>>, vector<1x256xf32>
    %133 = arith.mulf %131, %132 : vector<1x256xf32>
    %c22_68 = arith.constant 22 : index
    %c0_69 = arith.constant 0 : index
    %134 = vector.load %arg12[%c22_68, %c0_69] : memref<200x256xf32, #tpu.memory_space<vmem>>, vector<1x256xf32>
    tpu.vector_store %arg12[%c22_68, %c0_69], %133 {strides = array<i32>} : memref<200x256xf32, #tpu.memory_space<vmem>>, vector<1x256xf32>,
    %135 = vector.extract_strided_slice %1 {offsets = [0, 33], sizes = [1, 223], strides = [1, 1]} : vector<1x256xf32> to vector<1x223xf32>
    %136 = vector.extract_strided_slice %1 {offsets = [0, 0], sizes = [1, 33], strides = [1, 1]} : vector<1x256xf32> to vector<1x33xf32>
    %137 = tpu.concatenate %135, %136 in 1 : vector<1x223xf32>, vector<1x33xf32> -> vector<1x256xf32>
    %c23 = arith.constant 23 : index
    %c0_70 = arith.constant 0 : index
    %138 = vector.load %arg3[%c23, %c0_70] : memref<25x256xf32, #tpu.memory_space<vmem>>, vector<1x256xf32>
    %139 = arith.mulf %137, %138 : vector<1x256xf32>
    %c23_71 = arith.constant 23 : index
    %c0_72 = arith.constant 0 : index
    %140 = vector.load %arg12[%c23_71, %c0_72] : memref<200x256xf32, #tpu.memory_space<vmem>>, vector<1x256xf32>
    tpu.vector_store %arg12[%c23_71, %c0_72], %139 {strides = array<i32>} : memref<200x256xf32, #tpu.memory_space<vmem>>, vector<1x256xf32>,
    %141 = vector.extract_strided_slice %1 {offsets = [0, 34], sizes = [1, 222], strides = [1, 1]} : vector<1x256xf32> to vector<1x222xf32>
    %142 = vector.extract_strided_slice %1 {offsets = [0, 0], sizes = [1, 34], strides = [1, 1]} : vector<1x256xf32> to vector<1x34xf32>
    %143 = tpu.concatenate %141, %142 in 1 : vector<1x222xf32>, vector<1x34xf32> -> vector<1x256xf32>
    %c24 = arith.constant 24 : index
    %c0_73 = arith.constant 0 : index
    %144 = vector.load %arg3[%c24, %c0_73] : memref<25x256xf32, #tpu.memory_space<vmem>>, vector<1x256xf32>
    %145 = arith.mulf %143, %144 : vector<1x256xf32>
    %c24_74 = arith.constant 24 : index
    %c0_75 = arith.constant 0 : index
    %146 = vector.load %arg12[%c24_74, %c0_75] : memref<200x256xf32, #tpu.memory_space<vmem>>, vector<1x256xf32>
    tpu.vector_store %arg12[%c24_74, %c0_75], %145 {strides = array<i32>} : memref<200x256xf32, #tpu.memory_space<vmem>>, vector<1x256xf32>,
    %c0_76 = arith.constant 0 : index
    %c0_77 = arith.constant 0 : index
    %147 = vector.load %arg4[%c0_76, %c0_77] : memref<4x25xf32, #tpu.memory_space<vmem>>, vector<4x25xf32>
    %c0_78 = arith.constant 0 : index
    %c0_79 = arith.constant 0 : index
    %148 = vector.load %arg12[%c0_78, %c0_79] : memref<200x256xf32, #tpu.memory_space<vmem>>, vector<25x256xf32>
    %cst = arith.constant dense<0.000000e+00> : vector<4x256xf32>
    %149 = tpu.matmul %147, %148, %cst {dimension_numbers = #tpu.dot_dimension_numbers<[1], [0], [0], [1], [0, 0, 1, 1], [], []>} : vector<4x25xf32>, vector<25x256xf32>, vector<4x256xf32> -> vector<4x256xf32>
    %c0_80 = arith.constant 0 : index
    %c0_81 = arith.constant 0 : index
    %150 = vector.load %arg5[%c0_80, %c0_81] : memref<4x1xf32, #tpu.memory_space<vmem>>, vector<4x1xf32>
    %151 = vector.broadcast %150 : vector<4x1xf32> to vector<4x256xf32>
    %152 = arith.addf %149, %151 : vector<4x256xf32>
    %cst_82 = arith.constant 0.000000e+00 : f32
    %153 = vector.broadcast %cst_82 : f32 to vector<4x256xf32>
    %154 = arith.maximumf %152, %153 : vector<4x256xf32>
    %c0_83 = arith.constant 0 : index
    %c0_84 = arith.constant 0 : index
    %c0_85 = arith.constant 0 : index
    %155 = vector.load %arg2[%c0_83, %c0_84, %c0_85] : memref<1x4x256xf32, #tpu.memory_space<vmem>>, vector<1x4x256xf32>
    %156 = vector.shape_cast %155 : vector<1x4x256xf32> to vector<4x256xf32>
    %157 = tpu.concatenate %154, %156 in 0 : vector<4x256xf32>, vector<4x256xf32> -> vector<8x256xf32>
    %158 = vector.extract_strided_slice %157 {offsets = [0, 222], sizes = [8, 34], strides = [1, 1]} : vector<8x256xf32> to vector<8x34xf32>
    %159 = vector.extract_strided_slice %157 {offsets = [0, 0], sizes = [8, 222], strides = [1, 1]} : vector<8x256xf32> to vector<8x222xf32>
    %160 = tpu.concatenate %158, %159 in 1 : vector<8x34xf32>, vector<8x222xf32> -> vector<8x256xf32>
    %c0_86 = arith.constant 0 : index
    %c0_87 = arith.constant 0 : index
    %161 = vector.load %arg3[%c0_86, %c0_87] : memref<25x256xf32, #tpu.memory_space<vmem>>, vector<1x256xf32>
    %162 = vector.broadcast %161 : vector<1x256xf32> to vector<8x256xf32>
    %163 = arith.mulf %160, %162 : vector<8x256xf32>
    %c0_88 = arith.constant 0 : index
    %c0_89 = arith.constant 0 : index
    %164 = vector.load %arg12[%c0_88, %c0_89] : memref<200x256xf32, #tpu.memory_space<vmem>>, vector<8x256xf32>
    tpu.vector_store %arg12[%c0_88, %c0_89], %163 {strides = array<i32>} : memref<200x256xf32, #tpu.memory_space<vmem>>, vector<8x256xf32>,
    %165 = vector.extract_strided_slice %157 {offsets = [0, 223], sizes = [8, 33], strides = [1, 1]} : vector<8x256xf32> to vector<8x33xf32>
    %166 = vector.extract_strided_slice %157 {offsets = [0, 0], sizes = [8, 223], strides = [1, 1]} : vector<8x256xf32> to vector<8x223xf32>
    %167 = tpu.concatenate %165, %166 in 1 : vector<8x33xf32>, vector<8x223xf32> -> vector<8x256xf32>
    %c1_90 = arith.constant 1 : index
    %c0_91 = arith.constant 0 : index
    %168 = vector.load %arg3[%c1_90, %c0_91] : memref<25x256xf32, #tpu.memory_space<vmem>>, vector<1x256xf32>
    %169 = vector.broadcast %168 : vector<1x256xf32> to vector<8x256xf32>
    %170 = arith.mulf %167, %169 : vector<8x256xf32>
    %c8_92 = arith.constant 8 : index
    %c0_93 = arith.constant 0 : index
    %171 = vector.load %arg12[%c8_92, %c0_93] : memref<200x256xf32, #tpu.memory_space<vmem>>, vector<8x256xf32>
    tpu.vector_store %arg12[%c8_92, %c0_93], %170 {strides = array<i32>} : memref<200x256xf32, #tpu.memory_space<vmem>>, vector<8x256xf32>,
    %172 = vector.extract_strided_slice %157 {offsets = [0, 224], sizes = [8, 32], strides = [1, 1]} : vector<8x256xf32> to vector<8x32xf32>
    %173 = vector.extract_strided_slice %157 {offsets = [0, 0], sizes = [8, 224], strides = [1, 1]} : vector<8x256xf32> to vector<8x224xf32>
    %174 = tpu.concatenate %172, %173 in 1 : vector<8x32xf32>, vector<8x224xf32> -> vector<8x256xf32>
    %c2_94 = arith.constant 2 : index
    %c0_95 = arith.constant 0 : index
    %175 = vector.load %arg3[%c2_94, %c0_95] : memref<25x256xf32, #tpu.memory_space<vmem>>, vector<1x256xf32>
    %176 = vector.broadcast %175 : vector<1x256xf32> to vector<8x256xf32>
    %177 = arith.mulf %174, %176 : vector<8x256xf32>
    %c16_96 = arith.constant 16 : index
    %c0_97 = arith.constant 0 : index
    %178 = vector.load %arg12[%c16_96, %c0_97] : memref<200x256xf32, #tpu.memory_space<vmem>>, vector<8x256xf32>
    tpu.vector_store %arg12[%c16_96, %c0_97], %177 {strides = array<i32>} : memref<200x256xf32, #tpu.memory_space<vmem>>, vector<8x256xf32>,
    %179 = vector.extract_strided_slice %157 {offsets = [0, 225], sizes = [8, 31], strides = [1, 1]} : vector<8x256xf32> to vector<8x31xf32>
    %180 = vector.extract_strided_slice %157 {offsets = [0, 0], sizes = [8, 225], strides = [1, 1]} : vector<8x256xf32> to vector<8x225xf32>
    %181 = tpu.concatenate %179, %180 in 1 : vector<8x31xf32>, vector<8x225xf32> -> vector<8x256xf32>
    %c3_98 = arith.constant 3 : index
    %c0_99 = arith.constant 0 : index
    %182 = vector.load %arg3[%c3_98, %c0_99] : memref<25x256xf32, #tpu.memory_space<vmem>>, vector<1x256xf32>
    %183 = vector.broadcast %182 : vector<1x256xf32> to vector<8x256xf32>
    %184 = arith.mulf %181, %183 : vector<8x256xf32>
    %c24_100 = arith.constant 24 : index
    %c0_101 = arith.constant 0 : index
    %185 = vector.load %arg12[%c24_100, %c0_101] : memref<200x256xf32, #tpu.memory_space<vmem>>, vector<8x256xf32>
    tpu.vector_store %arg12[%c24_100, %c0_101], %184 {strides = array<i32>} : memref<200x256xf32, #tpu.memory_space<vmem>>, vector<8x256xf32>,
    %186 = vector.extract_strided_slice %157 {offsets = [0, 226], sizes = [8, 30], strides = [1, 1]} : vector<8x256xf32> to vector<8x30xf32>
    %187 = vector.extract_strided_slice %157 {offsets = [0, 0], sizes = [8, 226], strides = [1, 1]} : vector<8x256xf32> to vector<8x226xf32>
    %188 = tpu.concatenate %186, %187 in 1 : vector<8x30xf32>, vector<8x226xf32> -> vector<8x256xf32>
    %c4_102 = arith.constant 4 : index
    %c0_103 = arith.constant 0 : index
    %189 = vector.load %arg3[%c4_102, %c0_103] : memref<25x256xf32, #tpu.memory_space<vmem>>, vector<1x256xf32>
    %190 = vector.broadcast %189 : vector<1x256xf32> to vector<8x256xf32>
    %191 = arith.mulf %188, %190 : vector<8x256xf32>
    %c32 = arith.constant 32 : index
    %c0_104 = arith.constant 0 : index
    %192 = vector.load %arg12[%c32, %c0_104] : memref<200x256xf32, #tpu.memory_space<vmem>>, vector<8x256xf32>
    tpu.vector_store %arg12[%c32, %c0_104], %191 {strides = array<i32>} : memref<200x256xf32, #tpu.memory_space<vmem>>, vector<8x256xf32>,
    %193 = vector.extract_strided_slice %157 {offsets = [0, 238], sizes = [8, 18], strides = [1, 1]} : vector<8x256xf32> to vector<8x18xf32>
    %194 = vector.extract_strided_slice %157 {offsets = [0, 0], sizes = [8, 238], strides = [1, 1]} : vector<8x256xf32> to vector<8x238xf32>
    %195 = tpu.concatenate %193, %194 in 1 : vector<8x18xf32>, vector<8x238xf32> -> vector<8x256xf32>
    %c5_105 = arith.constant 5 : index
    %c0_106 = arith.constant 0 : index
    %196 = vector.load %arg3[%c5_105, %c0_106] : memref<25x256xf32, #tpu.memory_space<vmem>>, vector<1x256xf32>
    %197 = vector.broadcast %196 : vector<1x256xf32> to vector<8x256xf32>
    %198 = arith.mulf %195, %197 : vector<8x256xf32>
    %c40 = arith.constant 40 : index
    %c0_107 = arith.constant 0 : index
    %199 = vector.load %arg12[%c40, %c0_107] : memref<200x256xf32, #tpu.memory_space<vmem>>, vector<8x256xf32>
    tpu.vector_store %arg12[%c40, %c0_107], %198 {strides = array<i32>} : memref<200x256xf32, #tpu.memory_space<vmem>>, vector<8x256xf32>,
    %200 = vector.extract_strided_slice %157 {offsets = [0, 239], sizes = [8, 17], strides = [1, 1]} : vector<8x256xf32> to vector<8x17xf32>
    %201 = vector.extract_strided_slice %157 {offsets = [0, 0], sizes = [8, 239], strides = [1, 1]} : vector<8x256xf32> to vector<8x239xf32>
    %202 = tpu.concatenate %200, %201 in 1 : vector<8x17xf32>, vector<8x239xf32> -> vector<8x256xf32>
    %c6_108 = arith.constant 6 : index
    %c0_109 = arith.constant 0 : index
    %203 = vector.load %arg3[%c6_108, %c0_109] : memref<25x256xf32, #tpu.memory_space<vmem>>, vector<1x256xf32>
    %204 = vector.broadcast %203 : vector<1x256xf32> to vector<8x256xf32>
    %205 = arith.mulf %202, %204 : vector<8x256xf32>
    %c48 = arith.constant 48 : index
    %c0_110 = arith.constant 0 : index
    %206 = vector.load %arg12[%c48, %c0_110] : memref<200x256xf32, #tpu.memory_space<vmem>>, vector<8x256xf32>
    tpu.vector_store %arg12[%c48, %c0_110], %205 {strides = array<i32>} : memref<200x256xf32, #tpu.memory_space<vmem>>, vector<8x256xf32>,
    %207 = vector.extract_strided_slice %157 {offsets = [0, 240], sizes = [8, 16], strides = [1, 1]} : vector<8x256xf32> to vector<8x16xf32>
    %208 = vector.extract_strided_slice %157 {offsets = [0, 0], sizes = [8, 240], strides = [1, 1]} : vector<8x256xf32> to vector<8x240xf32>
    %209 = tpu.concatenate %207, %208 in 1 : vector<8x16xf32>, vector<8x240xf32> -> vector<8x256xf32>
    %c7_111 = arith.constant 7 : index
    %c0_112 = arith.constant 0 : index
    %210 = vector.load %arg3[%c7_111, %c0_112] : memref<25x256xf32, #tpu.memory_space<vmem>>, vector<1x256xf32>
    %211 = vector.broadcast %210 : vector<1x256xf32> to vector<8x256xf32>
    %212 = arith.mulf %209, %211 : vector<8x256xf32>
    %c56 = arith.constant 56 : index
    %c0_113 = arith.constant 0 : index
    %213 = vector.load %arg12[%c56, %c0_113] : memref<200x256xf32, #tpu.memory_space<vmem>>, vector<8x256xf32>
    tpu.vector_store %arg12[%c56, %c0_113], %212 {strides = array<i32>} : memref<200x256xf32, #tpu.memory_space<vmem>>, vector<8x256xf32>,
    %214 = vector.extract_strided_slice %157 {offsets = [0, 241], sizes = [8, 15], strides = [1, 1]} : vector<8x256xf32> to vector<8x15xf32>
    %215 = vector.extract_strided_slice %157 {offsets = [0, 0], sizes = [8, 241], strides = [1, 1]} : vector<8x256xf32> to vector<8x241xf32>
    %216 = tpu.concatenate %214, %215 in 1 : vector<8x15xf32>, vector<8x241xf32> -> vector<8x256xf32>
    %c8_114 = arith.constant 8 : index
    %c0_115 = arith.constant 0 : index
    %217 = vector.load %arg3[%c8_114, %c0_115] : memref<25x256xf32, #tpu.memory_space<vmem>>, vector<1x256xf32>
    %218 = vector.broadcast %217 : vector<1x256xf32> to vector<8x256xf32>
    %219 = arith.mulf %216, %218 : vector<8x256xf32>
    %c64 = arith.constant 64 : index
    %c0_116 = arith.constant 0 : index
    %220 = vector.load %arg12[%c64, %c0_116] : memref<200x256xf32, #tpu.memory_space<vmem>>, vector<8x256xf32>
    tpu.vector_store %arg12[%c64, %c0_116], %219 {strides = array<i32>} : memref<200x256xf32, #tpu.memory_space<vmem>>, vector<8x256xf32>,
    %221 = vector.extract_strided_slice %157 {offsets = [0, 242], sizes = [8, 14], strides = [1, 1]} : vector<8x256xf32> to vector<8x14xf32>
    %222 = vector.extract_strided_slice %157 {offsets = [0, 0], sizes = [8, 242], strides = [1, 1]} : vector<8x256xf32> to vector<8x242xf32>
    %223 = tpu.concatenate %221, %222 in 1 : vector<8x14xf32>, vector<8x242xf32> -> vector<8x256xf32>
    %c9_117 = arith.constant 9 : index
    %c0_118 = arith.constant 0 : index
    %224 = vector.load %arg3[%c9_117, %c0_118] : memref<25x256xf32, #tpu.memory_space<vmem>>, vector<1x256xf32>
    %225 = vector.broadcast %224 : vector<1x256xf32> to vector<8x256xf32>
    %226 = arith.mulf %223, %225 : vector<8x256xf32>
    %c72 = arith.constant 72 : index
    %c0_119 = arith.constant 0 : index
    %227 = vector.load %arg12[%c72, %c0_119] : memref<200x256xf32, #tpu.memory_space<vmem>>, vector<8x256xf32>
    tpu.vector_store %arg12[%c72, %c0_119], %226 {strides = array<i32>} : memref<200x256xf32, #tpu.memory_space<vmem>>, vector<8x256xf32>,
    %228 = vector.extract_strided_slice %157 {offsets = [0, 254], sizes = [8, 2], strides = [1, 1]} : vector<8x256xf32> to vector<8x2xf32>
    %229 = vector.extract_strided_slice %157 {offsets = [0, 0], sizes = [8, 254], strides = [1, 1]} : vector<8x256xf32> to vector<8x254xf32>
    %230 = tpu.concatenate %228, %229 in 1 : vector<8x2xf32>, vector<8x254xf32> -> vector<8x256xf32>
    %c10_120 = arith.constant 10 : index
    %c0_121 = arith.constant 0 : index
    %231 = vector.load %arg3[%c10_120, %c0_121] : memref<25x256xf32, #tpu.memory_space<vmem>>, vector<1x256xf32>
    %232 = vector.broadcast %231 : vector<1x256xf32> to vector<8x256xf32>
    %233 = arith.mulf %230, %232 : vector<8x256xf32>
    %c80 = arith.constant 80 : index
    %c0_122 = arith.constant 0 : index
    %234 = vector.load %arg12[%c80, %c0_122] : memref<200x256xf32, #tpu.memory_space<vmem>>, vector<8x256xf32>
    tpu.vector_store %arg12[%c80, %c0_122], %233 {strides = array<i32>} : memref<200x256xf32, #tpu.memory_space<vmem>>, vector<8x256xf32>,
    %235 = vector.extract_strided_slice %157 {offsets = [0, 255], sizes = [8, 1], strides = [1, 1]} : vector<8x256xf32> to vector<8x1xf32>
    %236 = vector.extract_strided_slice %157 {offsets = [0, 0], sizes = [8, 255], strides = [1, 1]} : vector<8x256xf32> to vector<8x255xf32>
    %237 = tpu.concatenate %235, %236 in 1 : vector<8x1xf32>, vector<8x255xf32> -> vector<8x256xf32>
    %c11_123 = arith.constant 11 : index
    %c0_124 = arith.constant 0 : index
    %238 = vector.load %arg3[%c11_123, %c0_124] : memref<25x256xf32, #tpu.memory_space<vmem>>, vector<1x256xf32>
    %239 = vector.broadcast %238 : vector<1x256xf32> to vector<8x256xf32>
    %240 = arith.mulf %237, %239 : vector<8x256xf32>
    %c88 = arith.constant 88 : index
    %c0_125 = arith.constant 0 : index
    %241 = vector.load %arg12[%c88, %c0_125] : memref<200x256xf32, #tpu.memory_space<vmem>>, vector<8x256xf32>
    tpu.vector_store %arg12[%c88, %c0_125], %240 {strides = array<i32>} : memref<200x256xf32, #tpu.memory_space<vmem>>, vector<8x256xf32>,
    %c96 = arith.constant 96 : index
    %c0_126 = arith.constant 0 : index
    %242 = vector.load %arg12[%c96, %c0_126] : memref<200x256xf32, #tpu.memory_space<vmem>>, vector<8x256xf32>
    tpu.vector_store %arg12[%c96, %c0_126], %157 {strides = array<i32>} : memref<200x256xf32, #tpu.memory_space<vmem>>, vector<8x256xf32>,
    %243 = vector.extract_strided_slice %157 {offsets = [0, 1], sizes = [8, 255], strides = [1, 1]} : vector<8x256xf32> to vector<8x255xf32>
    %244 = vector.extract_strided_slice %157 {offsets = [0, 0], sizes = [8, 1], strides = [1, 1]} : vector<8x256xf32> to vector<8x1xf32>
    %245 = tpu.concatenate %243, %244 in 1 : vector<8x255xf32>, vector<8x1xf32> -> vector<8x256xf32>
    %c13_127 = arith.constant 13 : index
    %c0_128 = arith.constant 0 : index
    %246 = vector.load %arg3[%c13_127, %c0_128] : memref<25x256xf32, #tpu.memory_space<vmem>>, vector<1x256xf32>
    %247 = vector.broadcast %246 : vector<1x256xf32> to vector<8x256xf32>
    %248 = arith.mulf %245, %247 : vector<8x256xf32>
    %c104 = arith.constant 104 : index
    %c0_129 = arith.constant 0 : index
    %249 = vector.load %arg12[%c104, %c0_129] : memref<200x256xf32, #tpu.memory_space<vmem>>, vector<8x256xf32>
    tpu.vector_store %arg12[%c104, %c0_129], %248 {strides = array<i32>} : memref<200x256xf32, #tpu.memory_space<vmem>>, vector<8x256xf32>,
    %250 = vector.extract_strided_slice %157 {offsets = [0, 2], sizes = [8, 254], strides = [1, 1]} : vector<8x256xf32> to vector<8x254xf32>
    %251 = vector.extract_strided_slice %157 {offsets = [0, 0], sizes = [8, 2], strides = [1, 1]} : vector<8x256xf32> to vector<8x2xf32>
    %252 = tpu.concatenate %250, %251 in 1 : vector<8x254xf32>, vector<8x2xf32> -> vector<8x256xf32>
    %c14_130 = arith.constant 14 : index
    %c0_131 = arith.constant 0 : index
    %253 = vector.load %arg3[%c14_130, %c0_131] : memref<25x256xf32, #tpu.memory_space<vmem>>, vector<1x256xf32>
    %254 = vector.broadcast %253 : vector<1x256xf32> to vector<8x256xf32>
    %255 = arith.mulf %252, %254 : vector<8x256xf32>
    %c112 = arith.constant 112 : index
    %c0_132 = arith.constant 0 : index
    %256 = vector.load %arg12[%c112, %c0_132] : memref<200x256xf32, #tpu.memory_space<vmem>>, vector<8x256xf32>
    tpu.vector_store %arg12[%c112, %c0_132], %255 {strides = array<i32>} : memref<200x256xf32, #tpu.memory_space<vmem>>, vector<8x256xf32>,
    %257 = vector.extract_strided_slice %157 {offsets = [0, 14], sizes = [8, 242], strides = [1, 1]} : vector<8x256xf32> to vector<8x242xf32>
    %258 = vector.extract_strided_slice %157 {offsets = [0, 0], sizes = [8, 14], strides = [1, 1]} : vector<8x256xf32> to vector<8x14xf32>
    %259 = tpu.concatenate %257, %258 in 1 : vector<8x242xf32>, vector<8x14xf32> -> vector<8x256xf32>
    %c15_133 = arith.constant 15 : index
    %c0_134 = arith.constant 0 : index
    %260 = vector.load %arg3[%c15_133, %c0_134] : memref<25x256xf32, #tpu.memory_space<vmem>>, vector<1x256xf32>
    %261 = vector.broadcast %260 : vector<1x256xf32> to vector<8x256xf32>
    %262 = arith.mulf %259, %261 : vector<8x256xf32>
    %c120 = arith.constant 120 : index
    %c0_135 = arith.constant 0 : index
    %263 = vector.load %arg12[%c120, %c0_135] : memref<200x256xf32, #tpu.memory_space<vmem>>, vector<8x256xf32>
    tpu.vector_store %arg12[%c120, %c0_135], %262 {strides = array<i32>} : memref<200x256xf32, #tpu.memory_space<vmem>>, vector<8x256xf32>,
    %264 = vector.extract_strided_slice %157 {offsets = [0, 15], sizes = [8, 241], strides = [1, 1]} : vector<8x256xf32> to vector<8x241xf32>
    %265 = vector.extract_strided_slice %157 {offsets = [0, 0], sizes = [8, 15], strides = [1, 1]} : vector<8x256xf32> to vector<8x15xf32>
    %266 = tpu.concatenate %264, %265 in 1 : vector<8x241xf32>, vector<8x15xf32> -> vector<8x256xf32>
    %c16_136 = arith.constant 16 : index
    %c0_137 = arith.constant 0 : index
    %267 = vector.load %arg3[%c16_136, %c0_137] : memref<25x256xf32, #tpu.memory_space<vmem>>, vector<1x256xf32>
    %268 = vector.broadcast %267 : vector<1x256xf32> to vector<8x256xf32>
    %269 = arith.mulf %266, %268 : vector<8x256xf32>
    %c128 = arith.constant 128 : index
    %c0_138 = arith.constant 0 : index
    %270 = vector.load %arg12[%c128, %c0_138] : memref<200x256xf32, #tpu.memory_space<vmem>>, vector<8x256xf32>
    tpu.vector_store %arg12[%c128, %c0_138], %269 {strides = array<i32>} : memref<200x256xf32, #tpu.memory_space<vmem>>, vector<8x256xf32>,
    %271 = vector.extract_strided_slice %157 {offsets = [0, 16], sizes = [8, 240], strides = [1, 1]} : vector<8x256xf32> to vector<8x240xf32>
    %272 = vector.extract_strided_slice %157 {offsets = [0, 0], sizes = [8, 16], strides = [1, 1]} : vector<8x256xf32> to vector<8x16xf32>
    %273 = tpu.concatenate %271, %272 in 1 : vector<8x240xf32>, vector<8x16xf32> -> vector<8x256xf32>
    %c17_139 = arith.constant 17 : index
    %c0_140 = arith.constant 0 : index
    %274 = vector.load %arg3[%c17_139, %c0_140] : memref<25x256xf32, #tpu.memory_space<vmem>>, vector<1x256xf32>
    %275 = vector.broadcast %274 : vector<1x256xf32> to vector<8x256xf32>
    %276 = arith.mulf %273, %275 : vector<8x256xf32>
    %c136 = arith.constant 136 : index
    %c0_141 = arith.constant 0 : index
    %277 = vector.load %arg12[%c136, %c0_141] : memref<200x256xf32, #tpu.memory_space<vmem>>, vector<8x256xf32>
    tpu.vector_store %arg12[%c136, %c0_141], %276 {strides = array<i32>} : memref<200x256xf32, #tpu.memory_space<vmem>>, vector<8x256xf32>,
    %278 = vector.extract_strided_slice %157 {offsets = [0, 17], sizes = [8, 239], strides = [1, 1]} : vector<8x256xf32> to vector<8x239xf32>
    %279 = vector.extract_strided_slice %157 {offsets = [0, 0], sizes = [8, 17], strides = [1, 1]} : vector<8x256xf32> to vector<8x17xf32>
    %280 = tpu.concatenate %278, %279 in 1 : vector<8x239xf32>, vector<8x17xf32> -> vector<8x256xf32>
    %c18_142 = arith.constant 18 : index
    %c0_143 = arith.constant 0 : index
    %281 = vector.load %arg3[%c18_142, %c0_143] : memref<25x256xf32, #tpu.memory_space<vmem>>, vector<1x256xf32>
    %282 = vector.broadcast %281 : vector<1x256xf32> to vector<8x256xf32>
    %283 = arith.mulf %280, %282 : vector<8x256xf32>
    %c144 = arith.constant 144 : index
    %c0_144 = arith.constant 0 : index
    %284 = vector.load %arg12[%c144, %c0_144] : memref<200x256xf32, #tpu.memory_space<vmem>>, vector<8x256xf32>
    tpu.vector_store %arg12[%c144, %c0_144], %283 {strides = array<i32>} : memref<200x256xf32, #tpu.memory_space<vmem>>, vector<8x256xf32>,
    %285 = vector.extract_strided_slice %157 {offsets = [0, 18], sizes = [8, 238], strides = [1, 1]} : vector<8x256xf32> to vector<8x238xf32>
    %286 = vector.extract_strided_slice %157 {offsets = [0, 0], sizes = [8, 18], strides = [1, 1]} : vector<8x256xf32> to vector<8x18xf32>
    %287 = tpu.concatenate %285, %286 in 1 : vector<8x238xf32>, vector<8x18xf32> -> vector<8x256xf32>
    %c19_145 = arith.constant 19 : index
    %c0_146 = arith.constant 0 : index
    %288 = vector.load %arg3[%c19_145, %c0_146] : memref<25x256xf32, #tpu.memory_space<vmem>>, vector<1x256xf32>
    %289 = vector.broadcast %288 : vector<1x256xf32> to vector<8x256xf32>
    %290 = arith.mulf %287, %289 : vector<8x256xf32>
    %c152 = arith.constant 152 : index
    %c0_147 = arith.constant 0 : index
    %291 = vector.load %arg12[%c152, %c0_147] : memref<200x256xf32, #tpu.memory_space<vmem>>, vector<8x256xf32>
    tpu.vector_store %arg12[%c152, %c0_147], %290 {strides = array<i32>} : memref<200x256xf32, #tpu.memory_space<vmem>>, vector<8x256xf32>,
    %292 = vector.extract_strided_slice %157 {offsets = [0, 30], sizes = [8, 226], strides = [1, 1]} : vector<8x256xf32> to vector<8x226xf32>
    %293 = vector.extract_strided_slice %157 {offsets = [0, 0], sizes = [8, 30], strides = [1, 1]} : vector<8x256xf32> to vector<8x30xf32>
    %294 = tpu.concatenate %292, %293 in 1 : vector<8x226xf32>, vector<8x30xf32> -> vector<8x256xf32>
    %c20_148 = arith.constant 20 : index
    %c0_149 = arith.constant 0 : index
    %295 = vector.load %arg3[%c20_148, %c0_149] : memref<25x256xf32, #tpu.memory_space<vmem>>, vector<1x256xf32>
    %296 = vector.broadcast %295 : vector<1x256xf32> to vector<8x256xf32>
    %297 = arith.mulf %294, %296 : vector<8x256xf32>
    %c160 = arith.constant 160 : index
    %c0_150 = arith.constant 0 : index
    %298 = vector.load %arg12[%c160, %c0_150] : memref<200x256xf32, #tpu.memory_space<vmem>>, vector<8x256xf32>
    tpu.vector_store %arg12[%c160, %c0_150], %297 {strides = array<i32>} : memref<200x256xf32, #tpu.memory_space<vmem>>, vector<8x256xf32>,
    %299 = vector.extract_strided_slice %157 {offsets = [0, 31], sizes = [8, 225], strides = [1, 1]} : vector<8x256xf32> to vector<8x225xf32>
    %300 = vector.extract_strided_slice %157 {offsets = [0, 0], sizes = [8, 31], strides = [1, 1]} : vector<8x256xf32> to vector<8x31xf32>
    %301 = tpu.concatenate %299, %300 in 1 : vector<8x225xf32>, vector<8x31xf32> -> vector<8x256xf32>
    %c21_151 = arith.constant 21 : index
    %c0_152 = arith.constant 0 : index
    %302 = vector.load %arg3[%c21_151, %c0_152] : memref<25x256xf32, #tpu.memory_space<vmem>>, vector<1x256xf32>
    %303 = vector.broadcast %302 : vector<1x256xf32> to vector<8x256xf32>
    %304 = arith.mulf %301, %303 : vector<8x256xf32>
    %c168 = arith.constant 168 : index
    %c0_153 = arith.constant 0 : index
    %305 = vector.load %arg12[%c168, %c0_153] : memref<200x256xf32, #tpu.memory_space<vmem>>, vector<8x256xf32>
    tpu.vector_store %arg12[%c168, %c0_153], %304 {strides = array<i32>} : memref<200x256xf32, #tpu.memory_space<vmem>>, vector<8x256xf32>,
    %306 = vector.extract_strided_slice %157 {offsets = [0, 32], sizes = [8, 224], strides = [1, 1]} : vector<8x256xf32> to vector<8x224xf32>
    %307 = vector.extract_strided_slice %157 {offsets = [0, 0], sizes = [8, 32], strides = [1, 1]} : vector<8x256xf32> to vector<8x32xf32>
    %308 = tpu.concatenate %306, %307 in 1 : vector<8x224xf32>, vector<8x32xf32> -> vector<8x256xf32>
    %c22_154 = arith.constant 22 : index
    %c0_155 = arith.constant 0 : index
    %309 = vector.load %arg3[%c22_154, %c0_155] : memref<25x256xf32, #tpu.memory_space<vmem>>, vector<1x256xf32>
    %310 = vector.broadcast %309 : vector<1x256xf32> to vector<8x256xf32>
    %311 = arith.mulf %308, %310 : vector<8x256xf32>
    %c176 = arith.constant 176 : index
    %c0_156 = arith.constant 0 : index
    %312 = vector.load %arg12[%c176, %c0_156] : memref<200x256xf32, #tpu.memory_space<vmem>>, vector<8x256xf32>
    tpu.vector_store %arg12[%c176, %c0_156], %311 {strides = array<i32>} : memref<200x256xf32, #tpu.memory_space<vmem>>, vector<8x256xf32>,
    %313 = vector.extract_strided_slice %157 {offsets = [0, 33], sizes = [8, 223], strides = [1, 1]} : vector<8x256xf32> to vector<8x223xf32>
    %314 = vector.extract_strided_slice %157 {offsets = [0, 0], sizes = [8, 33], strides = [1, 1]} : vector<8x256xf32> to vector<8x33xf32>
    %315 = tpu.concatenate %313, %314 in 1 : vector<8x223xf32>, vector<8x33xf32> -> vector<8x256xf32>
    %c23_157 = arith.constant 23 : index
    %c0_158 = arith.constant 0 : index
    %316 = vector.load %arg3[%c23_157, %c0_158] : memref<25x256xf32, #tpu.memory_space<vmem>>, vector<1x256xf32>
    %317 = vector.broadcast %316 : vector<1x256xf32> to vector<8x256xf32>
    %318 = arith.mulf %315, %317 : vector<8x256xf32>
    %c184 = arith.constant 184 : index
    %c0_159 = arith.constant 0 : index
    %319 = vector.load %arg12[%c184, %c0_159] : memref<200x256xf32, #tpu.memory_space<vmem>>, vector<8x256xf32>
    tpu.vector_store %arg12[%c184, %c0_159], %318 {strides = array<i32>} : memref<200x256xf32, #tpu.memory_space<vmem>>, vector<8x256xf32>,
    %320 = vector.extract_strided_slice %157 {offsets = [0, 34], sizes = [8, 222], strides = [1, 1]} : vector<8x256xf32> to vector<8x222xf32>
    %321 = vector.extract_strided_slice %157 {offsets = [0, 0], sizes = [8, 34], strides = [1, 1]} : vector<8x256xf32> to vector<8x34xf32>
    %322 = tpu.concatenate %320, %321 in 1 : vector<8x222xf32>, vector<8x34xf32> -> vector<8x256xf32>
    %c24_160 = arith.constant 24 : index
    %c0_161 = arith.constant 0 : index
    %323 = vector.load %arg3[%c24_160, %c0_161] : memref<25x256xf32, #tpu.memory_space<vmem>>, vector<1x256xf32>
    %324 = vector.broadcast %323 : vector<1x256xf32> to vector<8x256xf32>
    %325 = arith.mulf %322, %324 : vector<8x256xf32>
    %c192 = arith.constant 192 : index
    %c0_162 = arith.constant 0 : index
    %326 = vector.load %arg12[%c192, %c0_162] : memref<200x256xf32, #tpu.memory_space<vmem>>, vector<8x256xf32>
    tpu.vector_store %arg12[%c192, %c0_162], %325 {strides = array<i32>} : memref<200x256xf32, #tpu.memory_space<vmem>>, vector<8x256xf32>,
    %c0_163 = arith.constant 0 : index
    %c0_164 = arith.constant 0 : index
    %327 = vector.load %arg6[%c0_163, %c0_164] : memref<8x200xf32, #tpu.memory_space<vmem>>, vector<8x200xf32>
    %c0_165 = arith.constant 0 : index
    %c0_166 = arith.constant 0 : index
    %328 = vector.load %arg12[%c0_165, %c0_166] : memref<200x256xf32, #tpu.memory_space<vmem>>, vector<200x256xf32>
    %cst_167 = arith.constant dense<0.000000e+00> : vector<8x256xf32>
    %329 = tpu.matmul %327, %328, %cst_167 {dimension_numbers = #tpu.dot_dimension_numbers<[1], [0], [0], [1], [0, 0, 1, 1], [], []>} : vector<8x200xf32>, vector<200x256xf32>, vector<8x256xf32> -> vector<8x256xf32>
    %c0_168 = arith.constant 0 : index
    %c0_169 = arith.constant 0 : index
    %330 = vector.load %arg7[%c0_168, %c0_169] : memref<8x1xf32, #tpu.memory_space<vmem>>, vector<8x1xf32>
    %331 = vector.broadcast %330 : vector<8x1xf32> to vector<8x256xf32>
    %332 = arith.addf %329, %331 : vector<8x256xf32>
    %cst_170 = arith.constant 0.000000e+00 : f32
    %333 = vector.broadcast %cst_170 : f32 to vector<8x256xf32>
    %334 = arith.maximumf %332, %333 : vector<8x256xf32>
    %335 = vector.extract_strided_slice %334 {offsets = [0, 222], sizes = [8, 34], strides = [1, 1]} : vector<8x256xf32> to vector<8x34xf32>
    %336 = vector.extract_strided_slice %334 {offsets = [0, 0], sizes = [8, 222], strides = [1, 1]} : vector<8x256xf32> to vector<8x222xf32>
    %337 = tpu.concatenate %335, %336 in 1 : vector<8x34xf32>, vector<8x222xf32> -> vector<8x256xf32>
    %c0_171 = arith.constant 0 : index
    %c0_172 = arith.constant 0 : index
    %338 = vector.load %arg3[%c0_171, %c0_172] : memref<25x256xf32, #tpu.memory_space<vmem>>, vector<1x256xf32>
    %339 = vector.broadcast %338 : vector<1x256xf32> to vector<8x256xf32>
    %340 = arith.mulf %337, %339 : vector<8x256xf32>
    %c0_173 = arith.constant 0 : index
    %c0_174 = arith.constant 0 : index
    %341 = vector.load %arg12[%c0_173, %c0_174] : memref<200x256xf32, #tpu.memory_space<vmem>>, vector<8x256xf32>
    tpu.vector_store %arg12[%c0_173, %c0_174], %340 {strides = array<i32>} : memref<200x256xf32, #tpu.memory_space<vmem>>, vector<8x256xf32>,
    %342 = vector.extract_strided_slice %334 {offsets = [0, 223], sizes = [8, 33], strides = [1, 1]} : vector<8x256xf32> to vector<8x33xf32>
    %343 = vector.extract_strided_slice %334 {offsets = [0, 0], sizes = [8, 223], strides = [1, 1]} : vector<8x256xf32> to vector<8x223xf32>
    %344 = tpu.concatenate %342, %343 in 1 : vector<8x33xf32>, vector<8x223xf32> -> vector<8x256xf32>
    %c1_175 = arith.constant 1 : index
    %c0_176 = arith.constant 0 : index
    %345 = vector.load %arg3[%c1_175, %c0_176] : memref<25x256xf32, #tpu.memory_space<vmem>>, vector<1x256xf32>
    %346 = vector.broadcast %345 : vector<1x256xf32> to vector<8x256xf32>
    %347 = arith.mulf %344, %346 : vector<8x256xf32>
    %c8_177 = arith.constant 8 : index
    %c0_178 = arith.constant 0 : index
    %348 = vector.load %arg12[%c8_177, %c0_178] : memref<200x256xf32, #tpu.memory_space<vmem>>, vector<8x256xf32>
    tpu.vector_store %arg12[%c8_177, %c0_178], %347 {strides = array<i32>} : memref<200x256xf32, #tpu.memory_space<vmem>>, vector<8x256xf32>,
    %349 = vector.extract_strided_slice %334 {offsets = [0, 224], sizes = [8, 32], strides = [1, 1]} : vector<8x256xf32> to vector<8x32xf32>
    %350 = vector.extract_strided_slice %334 {offsets = [0, 0], sizes = [8, 224], strides = [1, 1]} : vector<8x256xf32> to vector<8x224xf32>
    %351 = tpu.concatenate %349, %350 in 1 : vector<8x32xf32>, vector<8x224xf32> -> vector<8x256xf32>
    %c2_179 = arith.constant 2 : index
    %c0_180 = arith.constant 0 : index
    %352 = vector.load %arg3[%c2_179, %c0_180] : memref<25x256xf32, #tpu.memory_space<vmem>>, vector<1x256xf32>
    %353 = vector.broadcast %352 : vector<1x256xf32> to vector<8x256xf32>
    %354 = arith.mulf %351, %353 : vector<8x256xf32>
    %c16_181 = arith.constant 16 : index
    %c0_182 = arith.constant 0 : index
    %355 = vector.load %arg12[%c16_181, %c0_182] : memref<200x256xf32, #tpu.memory_space<vmem>>, vector<8x256xf32>
    tpu.vector_store %arg12[%c16_181, %c0_182], %354 {strides = array<i32>} : memref<200x256xf32, #tpu.memory_space<vmem>>, vector<8x256xf32>,
    %356 = vector.extract_strided_slice %334 {offsets = [0, 225], sizes = [8, 31], strides = [1, 1]} : vector<8x256xf32> to vector<8x31xf32>
    %357 = vector.extract_strided_slice %334 {offsets = [0, 0], sizes = [8, 225], strides = [1, 1]} : vector<8x256xf32> to vector<8x225xf32>
    %358 = tpu.concatenate %356, %357 in 1 : vector<8x31xf32>, vector<8x225xf32> -> vector<8x256xf32>
    %c3_183 = arith.constant 3 : index
    %c0_184 = arith.constant 0 : index
    %359 = vector.load %arg3[%c3_183, %c0_184] : memref<25x256xf32, #tpu.memory_space<vmem>>, vector<1x256xf32>
    %360 = vector.broadcast %359 : vector<1x256xf32> to vector<8x256xf32>
    %361 = arith.mulf %358, %360 : vector<8x256xf32>
    %c24_185 = arith.constant 24 : index
    %c0_186 = arith.constant 0 : index
    %362 = vector.load %arg12[%c24_185, %c0_186] : memref<200x256xf32, #tpu.memory_space<vmem>>, vector<8x256xf32>
    tpu.vector_store %arg12[%c24_185, %c0_186], %361 {strides = array<i32>} : memref<200x256xf32, #tpu.memory_space<vmem>>, vector<8x256xf32>,
    %363 = vector.extract_strided_slice %334 {offsets = [0, 226], sizes = [8, 30], strides = [1, 1]} : vector<8x256xf32> to vector<8x30xf32>
    %364 = vector.extract_strided_slice %334 {offsets = [0, 0], sizes = [8, 226], strides = [1, 1]} : vector<8x256xf32> to vector<8x226xf32>
    %365 = tpu.concatenate %363, %364 in 1 : vector<8x30xf32>, vector<8x226xf32> -> vector<8x256xf32>
    %c4_187 = arith.constant 4 : index
    %c0_188 = arith.constant 0 : index
    %366 = vector.load %arg3[%c4_187, %c0_188] : memref<25x256xf32, #tpu.memory_space<vmem>>, vector<1x256xf32>
    %367 = vector.broadcast %366 : vector<1x256xf32> to vector<8x256xf32>
    %368 = arith.mulf %365, %367 : vector<8x256xf32>
    %c32_189 = arith.constant 32 : index
    %c0_190 = arith.constant 0 : index
    %369 = vector.load %arg12[%c32_189, %c0_190] : memref<200x256xf32, #tpu.memory_space<vmem>>, vector<8x256xf32>
    tpu.vector_store %arg12[%c32_189, %c0_190], %368 {strides = array<i32>} : memref<200x256xf32, #tpu.memory_space<vmem>>, vector<8x256xf32>,
    %370 = vector.extract_strided_slice %334 {offsets = [0, 238], sizes = [8, 18], strides = [1, 1]} : vector<8x256xf32> to vector<8x18xf32>
    %371 = vector.extract_strided_slice %334 {offsets = [0, 0], sizes = [8, 238], strides = [1, 1]} : vector<8x256xf32> to vector<8x238xf32>
    %372 = tpu.concatenate %370, %371 in 1 : vector<8x18xf32>, vector<8x238xf32> -> vector<8x256xf32>
    %c5_191 = arith.constant 5 : index
    %c0_192 = arith.constant 0 : index
    %373 = vector.load %arg3[%c5_191, %c0_192] : memref<25x256xf32, #tpu.memory_space<vmem>>, vector<1x256xf32>
    %374 = vector.broadcast %373 : vector<1x256xf32> to vector<8x256xf32>
    %375 = arith.mulf %372, %374 : vector<8x256xf32>
    %c40_193 = arith.constant 40 : index
    %c0_194 = arith.constant 0 : index
    %376 = vector.load %arg12[%c40_193, %c0_194] : memref<200x256xf32, #tpu.memory_space<vmem>>, vector<8x256xf32>
    tpu.vector_store %arg12[%c40_193, %c0_194], %375 {strides = array<i32>} : memref<200x256xf32, #tpu.memory_space<vmem>>, vector<8x256xf32>,
    %377 = vector.extract_strided_slice %334 {offsets = [0, 239], sizes = [8, 17], strides = [1, 1]} : vector<8x256xf32> to vector<8x17xf32>
    %378 = vector.extract_strided_slice %334 {offsets = [0, 0], sizes = [8, 239], strides = [1, 1]} : vector<8x256xf32> to vector<8x239xf32>
    %379 = tpu.concatenate %377, %378 in 1 : vector<8x17xf32>, vector<8x239xf32> -> vector<8x256xf32>
    %c6_195 = arith.constant 6 : index
    %c0_196 = arith.constant 0 : index
    %380 = vector.load %arg3[%c6_195, %c0_196] : memref<25x256xf32, #tpu.memory_space<vmem>>, vector<1x256xf32>
    %381 = vector.broadcast %380 : vector<1x256xf32> to vector<8x256xf32>
    %382 = arith.mulf %379, %381 : vector<8x256xf32>
    %c48_197 = arith.constant 48 : index
    %c0_198 = arith.constant 0 : index
    %383 = vector.load %arg12[%c48_197, %c0_198] : memref<200x256xf32, #tpu.memory_space<vmem>>, vector<8x256xf32>
    tpu.vector_store %arg12[%c48_197, %c0_198], %382 {strides = array<i32>} : memref<200x256xf32, #tpu.memory_space<vmem>>, vector<8x256xf32>,
    %384 = vector.extract_strided_slice %334 {offsets = [0, 240], sizes = [8, 16], strides = [1, 1]} : vector<8x256xf32> to vector<8x16xf32>
    %385 = vector.extract_strided_slice %334 {offsets = [0, 0], sizes = [8, 240], strides = [1, 1]} : vector<8x256xf32> to vector<8x240xf32>
    %386 = tpu.concatenate %384, %385 in 1 : vector<8x16xf32>, vector<8x240xf32> -> vector<8x256xf32>
    %c7_199 = arith.constant 7 : index
    %c0_200 = arith.constant 0 : index
    %387 = vector.load %arg3[%c7_199, %c0_200] : memref<25x256xf32, #tpu.memory_space<vmem>>, vector<1x256xf32>
    %388 = vector.broadcast %387 : vector<1x256xf32> to vector<8x256xf32>
    %389 = arith.mulf %386, %388 : vector<8x256xf32>
    %c56_201 = arith.constant 56 : index
    %c0_202 = arith.constant 0 : index
    %390 = vector.load %arg12[%c56_201, %c0_202] : memref<200x256xf32, #tpu.memory_space<vmem>>, vector<8x256xf32>
    tpu.vector_store %arg12[%c56_201, %c0_202], %389 {strides = array<i32>} : memref<200x256xf32, #tpu.memory_space<vmem>>, vector<8x256xf32>,
    %391 = vector.extract_strided_slice %334 {offsets = [0, 241], sizes = [8, 15], strides = [1, 1]} : vector<8x256xf32> to vector<8x15xf32>
    %392 = vector.extract_strided_slice %334 {offsets = [0, 0], sizes = [8, 241], strides = [1, 1]} : vector<8x256xf32> to vector<8x241xf32>
    %393 = tpu.concatenate %391, %392 in 1 : vector<8x15xf32>, vector<8x241xf32> -> vector<8x256xf32>
    %c8_203 = arith.constant 8 : index
    %c0_204 = arith.constant 0 : index
    %394 = vector.load %arg3[%c8_203, %c0_204] : memref<25x256xf32, #tpu.memory_space<vmem>>, vector<1x256xf32>
    %395 = vector.broadcast %394 : vector<1x256xf32> to vector<8x256xf32>
    %396 = arith.mulf %393, %395 : vector<8x256xf32>
    %c64_205 = arith.constant 64 : index
    %c0_206 = arith.constant 0 : index
    %397 = vector.load %arg12[%c64_205, %c0_206] : memref<200x256xf32, #tpu.memory_space<vmem>>, vector<8x256xf32>
    tpu.vector_store %arg12[%c64_205, %c0_206], %396 {strides = array<i32>} : memref<200x256xf32, #tpu.memory_space<vmem>>, vector<8x256xf32>,
    %398 = vector.extract_strided_slice %334 {offsets = [0, 242], sizes = [8, 14], strides = [1, 1]} : vector<8x256xf32> to vector<8x14xf32>
    %399 = vector.extract_strided_slice %334 {offsets = [0, 0], sizes = [8, 242], strides = [1, 1]} : vector<8x256xf32> to vector<8x242xf32>
    %400 = tpu.concatenate %398, %399 in 1 : vector<8x14xf32>, vector<8x242xf32> -> vector<8x256xf32>
    %c9_207 = arith.constant 9 : index
    %c0_208 = arith.constant 0 : index
    %401 = vector.load %arg3[%c9_207, %c0_208] : memref<25x256xf32, #tpu.memory_space<vmem>>, vector<1x256xf32>
    %402 = vector.broadcast %401 : vector<1x256xf32> to vector<8x256xf32>
    %403 = arith.mulf %400, %402 : vector<8x256xf32>
    %c72_209 = arith.constant 72 : index
    %c0_210 = arith.constant 0 : index
    %404 = vector.load %arg12[%c72_209, %c0_210] : memref<200x256xf32, #tpu.memory_space<vmem>>, vector<8x256xf32>
    tpu.vector_store %arg12[%c72_209, %c0_210], %403 {strides = array<i32>} : memref<200x256xf32, #tpu.memory_space<vmem>>, vector<8x256xf32>,
    %405 = vector.extract_strided_slice %334 {offsets = [0, 254], sizes = [8, 2], strides = [1, 1]} : vector<8x256xf32> to vector<8x2xf32>
    %406 = vector.extract_strided_slice %334 {offsets = [0, 0], sizes = [8, 254], strides = [1, 1]} : vector<8x256xf32> to vector<8x254xf32>
    %407 = tpu.concatenate %405, %406 in 1 : vector<8x2xf32>, vector<8x254xf32> -> vector<8x256xf32>
    %c10_211 = arith.constant 10 : index
    %c0_212 = arith.constant 0 : index
    %408 = vector.load %arg3[%c10_211, %c0_212] : memref<25x256xf32, #tpu.memory_space<vmem>>, vector<1x256xf32>
    %409 = vector.broadcast %408 : vector<1x256xf32> to vector<8x256xf32>
    %410 = arith.mulf %407, %409 : vector<8x256xf32>
    %c80_213 = arith.constant 80 : index
    %c0_214 = arith.constant 0 : index
    %411 = vector.load %arg12[%c80_213, %c0_214] : memref<200x256xf32, #tpu.memory_space<vmem>>, vector<8x256xf32>
    tpu.vector_store %arg12[%c80_213, %c0_214], %410 {strides = array<i32>} : memref<200x256xf32, #tpu.memory_space<vmem>>, vector<8x256xf32>,
    %412 = vector.extract_strided_slice %334 {offsets = [0, 255], sizes = [8, 1], strides = [1, 1]} : vector<8x256xf32> to vector<8x1xf32>
    %413 = vector.extract_strided_slice %334 {offsets = [0, 0], sizes = [8, 255], strides = [1, 1]} : vector<8x256xf32> to vector<8x255xf32>
    %414 = tpu.concatenate %412, %413 in 1 : vector<8x1xf32>, vector<8x255xf32> -> vector<8x256xf32>
    %c11_215 = arith.constant 11 : index
    %c0_216 = arith.constant 0 : index
    %415 = vector.load %arg3[%c11_215, %c0_216] : memref<25x256xf32, #tpu.memory_space<vmem>>, vector<1x256xf32>
    %416 = vector.broadcast %415 : vector<1x256xf32> to vector<8x256xf32>
    %417 = arith.mulf %414, %416 : vector<8x256xf32>
    %c88_217 = arith.constant 88 : index
    %c0_218 = arith.constant 0 : index
    %418 = vector.load %arg12[%c88_217, %c0_218] : memref<200x256xf32, #tpu.memory_space<vmem>>, vector<8x256xf32>
    tpu.vector_store %arg12[%c88_217, %c0_218], %417 {strides = array<i32>} : memref<200x256xf32, #tpu.memory_space<vmem>>, vector<8x256xf32>,
    %c96_219 = arith.constant 96 : index
    %c0_220 = arith.constant 0 : index
    %419 = vector.load %arg12[%c96_219, %c0_220] : memref<200x256xf32, #tpu.memory_space<vmem>>, vector<8x256xf32>
    tpu.vector_store %arg12[%c96_219, %c0_220], %334 {strides = array<i32>} : memref<200x256xf32, #tpu.memory_space<vmem>>, vector<8x256xf32>,
    %420 = vector.extract_strided_slice %334 {offsets = [0, 1], sizes = [8, 255], strides = [1, 1]} : vector<8x256xf32> to vector<8x255xf32>
    %421 = vector.extract_strided_slice %334 {offsets = [0, 0], sizes = [8, 1], strides = [1, 1]} : vector<8x256xf32> to vector<8x1xf32>
    %422 = tpu.concatenate %420, %421 in 1 : vector<8x255xf32>, vector<8x1xf32> -> vector<8x256xf32>
    %c13_221 = arith.constant 13 : index
    %c0_222 = arith.constant 0 : index
    %423 = vector.load %arg3[%c13_221, %c0_222] : memref<25x256xf32, #tpu.memory_space<vmem>>, vector<1x256xf32>
    %424 = vector.broadcast %423 : vector<1x256xf32> to vector<8x256xf32>
    %425 = arith.mulf %422, %424 : vector<8x256xf32>
    %c104_223 = arith.constant 104 : index
    %c0_224 = arith.constant 0 : index
    %426 = vector.load %arg12[%c104_223, %c0_224] : memref<200x256xf32, #tpu.memory_space<vmem>>, vector<8x256xf32>
    tpu.vector_store %arg12[%c104_223, %c0_224], %425 {strides = array<i32>} : memref<200x256xf32, #tpu.memory_space<vmem>>, vector<8x256xf32>,
    %427 = vector.extract_strided_slice %334 {offsets = [0, 2], sizes = [8, 254], strides = [1, 1]} : vector<8x256xf32> to vector<8x254xf32>
    %428 = vector.extract_strided_slice %334 {offsets = [0, 0], sizes = [8, 2], strides = [1, 1]} : vector<8x256xf32> to vector<8x2xf32>
    %429 = tpu.concatenate %427, %428 in 1 : vector<8x254xf32>, vector<8x2xf32> -> vector<8x256xf32>
    %c14_225 = arith.constant 14 : index
    %c0_226 = arith.constant 0 : index
    %430 = vector.load %arg3[%c14_225, %c0_226] : memref<25x256xf32, #tpu.memory_space<vmem>>, vector<1x256xf32>
    %431 = vector.broadcast %430 : vector<1x256xf32> to vector<8x256xf32>
    %432 = arith.mulf %429, %431 : vector<8x256xf32>
    %c112_227 = arith.constant 112 : index
    %c0_228 = arith.constant 0 : index
    %433 = vector.load %arg12[%c112_227, %c0_228] : memref<200x256xf32, #tpu.memory_space<vmem>>, vector<8x256xf32>
    tpu.vector_store %arg12[%c112_227, %c0_228], %432 {strides = array<i32>} : memref<200x256xf32, #tpu.memory_space<vmem>>, vector<8x256xf32>,
    %434 = vector.extract_strided_slice %334 {offsets = [0, 14], sizes = [8, 242], strides = [1, 1]} : vector<8x256xf32> to vector<8x242xf32>
    %435 = vector.extract_strided_slice %334 {offsets = [0, 0], sizes = [8, 14], strides = [1, 1]} : vector<8x256xf32> to vector<8x14xf32>
    %436 = tpu.concatenate %434, %435 in 1 : vector<8x242xf32>, vector<8x14xf32> -> vector<8x256xf32>
    %c15_229 = arith.constant 15 : index
    %c0_230 = arith.constant 0 : index
    %437 = vector.load %arg3[%c15_229, %c0_230] : memref<25x256xf32, #tpu.memory_space<vmem>>, vector<1x256xf32>
    %438 = vector.broadcast %437 : vector<1x256xf32> to vector<8x256xf32>
    %439 = arith.mulf %436, %438 : vector<8x256xf32>
    %c120_231 = arith.constant 120 : index
    %c0_232 = arith.constant 0 : index
    %440 = vector.load %arg12[%c120_231, %c0_232] : memref<200x256xf32, #tpu.memory_space<vmem>>, vector<8x256xf32>
    tpu.vector_store %arg12[%c120_231, %c0_232], %439 {strides = array<i32>} : memref<200x256xf32, #tpu.memory_space<vmem>>, vector<8x256xf32>,
    %441 = vector.extract_strided_slice %334 {offsets = [0, 15], sizes = [8, 241], strides = [1, 1]} : vector<8x256xf32> to vector<8x241xf32>
    %442 = vector.extract_strided_slice %334 {offsets = [0, 0], sizes = [8, 15], strides = [1, 1]} : vector<8x256xf32> to vector<8x15xf32>
    %443 = tpu.concatenate %441, %442 in 1 : vector<8x241xf32>, vector<8x15xf32> -> vector<8x256xf32>
    %c16_233 = arith.constant 16 : index
    %c0_234 = arith.constant 0 : index
    %444 = vector.load %arg3[%c16_233, %c0_234] : memref<25x256xf32, #tpu.memory_space<vmem>>, vector<1x256xf32>
    %445 = vector.broadcast %444 : vector<1x256xf32> to vector<8x256xf32>
    %446 = arith.mulf %443, %445 : vector<8x256xf32>
    %c128_235 = arith.constant 128 : index
    %c0_236 = arith.constant 0 : index
    %447 = vector.load %arg12[%c128_235, %c0_236] : memref<200x256xf32, #tpu.memory_space<vmem>>, vector<8x256xf32>
    tpu.vector_store %arg12[%c128_235, %c0_236], %446 {strides = array<i32>} : memref<200x256xf32, #tpu.memory_space<vmem>>, vector<8x256xf32>,
    %448 = vector.extract_strided_slice %334 {offsets = [0, 16], sizes = [8, 240], strides = [1, 1]} : vector<8x256xf32> to vector<8x240xf32>
    %449 = vector.extract_strided_slice %334 {offsets = [0, 0], sizes = [8, 16], strides = [1, 1]} : vector<8x256xf32> to vector<8x16xf32>
    %450 = tpu.concatenate %448, %449 in 1 : vector<8x240xf32>, vector<8x16xf32> -> vector<8x256xf32>
    %c17_237 = arith.constant 17 : index
    %c0_238 = arith.constant 0 : index
    %451 = vector.load %arg3[%c17_237, %c0_238] : memref<25x256xf32, #tpu.memory_space<vmem>>, vector<1x256xf32>
    %452 = vector.broadcast %451 : vector<1x256xf32> to vector<8x256xf32>
    %453 = arith.mulf %450, %452 : vector<8x256xf32>
    %c136_239 = arith.constant 136 : index
    %c0_240 = arith.constant 0 : index
    %454 = vector.load %arg12[%c136_239, %c0_240] : memref<200x256xf32, #tpu.memory_space<vmem>>, vector<8x256xf32>
    tpu.vector_store %arg12[%c136_239, %c0_240], %453 {strides = array<i32>} : memref<200x256xf32, #tpu.memory_space<vmem>>, vector<8x256xf32>,
    %455 = vector.extract_strided_slice %334 {offsets = [0, 17], sizes = [8, 239], strides = [1, 1]} : vector<8x256xf32> to vector<8x239xf32>
    %456 = vector.extract_strided_slice %334 {offsets = [0, 0], sizes = [8, 17], strides = [1, 1]} : vector<8x256xf32> to vector<8x17xf32>
    %457 = tpu.concatenate %455, %456 in 1 : vector<8x239xf32>, vector<8x17xf32> -> vector<8x256xf32>
    %c18_241 = arith.constant 18 : index
    %c0_242 = arith.constant 0 : index
    %458 = vector.load %arg3[%c18_241, %c0_242] : memref<25x256xf32, #tpu.memory_space<vmem>>, vector<1x256xf32>
    %459 = vector.broadcast %458 : vector<1x256xf32> to vector<8x256xf32>
    %460 = arith.mulf %457, %459 : vector<8x256xf32>
    %c144_243 = arith.constant 144 : index
    %c0_244 = arith.constant 0 : index
    %461 = vector.load %arg12[%c144_243, %c0_244] : memref<200x256xf32, #tpu.memory_space<vmem>>, vector<8x256xf32>
    tpu.vector_store %arg12[%c144_243, %c0_244], %460 {strides = array<i32>} : memref<200x256xf32, #tpu.memory_space<vmem>>, vector<8x256xf32>,
    %462 = vector.extract_strided_slice %334 {offsets = [0, 18], sizes = [8, 238], strides = [1, 1]} : vector<8x256xf32> to vector<8x238xf32>
    %463 = vector.extract_strided_slice %334 {offsets = [0, 0], sizes = [8, 18], strides = [1, 1]} : vector<8x256xf32> to vector<8x18xf32>
    %464 = tpu.concatenate %462, %463 in 1 : vector<8x238xf32>, vector<8x18xf32> -> vector<8x256xf32>
    %c19_245 = arith.constant 19 : index
    %c0_246 = arith.constant 0 : index
    %465 = vector.load %arg3[%c19_245, %c0_246] : memref<25x256xf32, #tpu.memory_space<vmem>>, vector<1x256xf32>
    %466 = vector.broadcast %465 : vector<1x256xf32> to vector<8x256xf32>
    %467 = arith.mulf %464, %466 : vector<8x256xf32>
    %c152_247 = arith.constant 152 : index
    %c0_248 = arith.constant 0 : index
    %468 = vector.load %arg12[%c152_247, %c0_248] : memref<200x256xf32, #tpu.memory_space<vmem>>, vector<8x256xf32>
    tpu.vector_store %arg12[%c152_247, %c0_248], %467 {strides = array<i32>} : memref<200x256xf32, #tpu.memory_space<vmem>>, vector<8x256xf32>,
    %469 = vector.extract_strided_slice %334 {offsets = [0, 30], sizes = [8, 226], strides = [1, 1]} : vector<8x256xf32> to vector<8x226xf32>
    %470 = vector.extract_strided_slice %334 {offsets = [0, 0], sizes = [8, 30], strides = [1, 1]} : vector<8x256xf32> to vector<8x30xf32>
    %471 = tpu.concatenate %469, %470 in 1 : vector<8x226xf32>, vector<8x30xf32> -> vector<8x256xf32>
    %c20_249 = arith.constant 20 : index
    %c0_250 = arith.constant 0 : index
    %472 = vector.load %arg3[%c20_249, %c0_250] : memref<25x256xf32, #tpu.memory_space<vmem>>, vector<1x256xf32>
    %473 = vector.broadcast %472 : vector<1x256xf32> to vector<8x256xf32>
    %474 = arith.mulf %471, %473 : vector<8x256xf32>
    %c160_251 = arith.constant 160 : index
    %c0_252 = arith.constant 0 : index
    %475 = vector.load %arg12[%c160_251, %c0_252] : memref<200x256xf32, #tpu.memory_space<vmem>>, vector<8x256xf32>
    tpu.vector_store %arg12[%c160_251, %c0_252], %474 {strides = array<i32>} : memref<200x256xf32, #tpu.memory_space<vmem>>, vector<8x256xf32>,
    %476 = vector.extract_strided_slice %334 {offsets = [0, 31], sizes = [8, 225], strides = [1, 1]} : vector<8x256xf32> to vector<8x225xf32>
    %477 = vector.extract_strided_slice %334 {offsets = [0, 0], sizes = [8, 31], strides = [1, 1]} : vector<8x256xf32> to vector<8x31xf32>
    %478 = tpu.concatenate %476, %477 in 1 : vector<8x225xf32>, vector<8x31xf32> -> vector<8x256xf32>
    %c21_253 = arith.constant 21 : index
    %c0_254 = arith.constant 0 : index
    %479 = vector.load %arg3[%c21_253, %c0_254] : memref<25x256xf32, #tpu.memory_space<vmem>>, vector<1x256xf32>
    %480 = vector.broadcast %479 : vector<1x256xf32> to vector<8x256xf32>
    %481 = arith.mulf %478, %480 : vector<8x256xf32>
    %c168_255 = arith.constant 168 : index
    %c0_256 = arith.constant 0 : index
    %482 = vector.load %arg12[%c168_255, %c0_256] : memref<200x256xf32, #tpu.memory_space<vmem>>, vector<8x256xf32>
    tpu.vector_store %arg12[%c168_255, %c0_256], %481 {strides = array<i32>} : memref<200x256xf32, #tpu.memory_space<vmem>>, vector<8x256xf32>,
    %483 = vector.extract_strided_slice %334 {offsets = [0, 32], sizes = [8, 224], strides = [1, 1]} : vector<8x256xf32> to vector<8x224xf32>
    %484 = vector.extract_strided_slice %334 {offsets = [0, 0], sizes = [8, 32], strides = [1, 1]} : vector<8x256xf32> to vector<8x32xf32>
    %485 = tpu.concatenate %483, %484 in 1 : vector<8x224xf32>, vector<8x32xf32> -> vector<8x256xf32>
    %c22_257 = arith.constant 22 : index
    %c0_258 = arith.constant 0 : index
    %486 = vector.load %arg3[%c22_257, %c0_258] : memref<25x256xf32, #tpu.memory_space<vmem>>, vector<1x256xf32>
    %487 = vector.broadcast %486 : vector<1x256xf32> to vector<8x256xf32>
    %488 = arith.mulf %485, %487 : vector<8x256xf32>
    %c176_259 = arith.constant 176 : index
    %c0_260 = arith.constant 0 : index
    %489 = vector.load %arg12[%c176_259, %c0_260] : memref<200x256xf32, #tpu.memory_space<vmem>>, vector<8x256xf32>
    tpu.vector_store %arg12[%c176_259, %c0_260], %488 {strides = array<i32>} : memref<200x256xf32, #tpu.memory_space<vmem>>, vector<8x256xf32>,
    %490 = vector.extract_strided_slice %334 {offsets = [0, 33], sizes = [8, 223], strides = [1, 1]} : vector<8x256xf32> to vector<8x223xf32>
    %491 = vector.extract_strided_slice %334 {offsets = [0, 0], sizes = [8, 33], strides = [1, 1]} : vector<8x256xf32> to vector<8x33xf32>
    %492 = tpu.concatenate %490, %491 in 1 : vector<8x223xf32>, vector<8x33xf32> -> vector<8x256xf32>
    %c23_261 = arith.constant 23 : index
    %c0_262 = arith.constant 0 : index
    %493 = vector.load %arg3[%c23_261, %c0_262] : memref<25x256xf32, #tpu.memory_space<vmem>>, vector<1x256xf32>
    %494 = vector.broadcast %493 : vector<1x256xf32> to vector<8x256xf32>
    %495 = arith.mulf %492, %494 : vector<8x256xf32>
    %c184_263 = arith.constant 184 : index
    %c0_264 = arith.constant 0 : index
    %496 = vector.load %arg12[%c184_263, %c0_264] : memref<200x256xf32, #tpu.memory_space<vmem>>, vector<8x256xf32>
    tpu.vector_store %arg12[%c184_263, %c0_264], %495 {strides = array<i32>} : memref<200x256xf32, #tpu.memory_space<vmem>>, vector<8x256xf32>,
    %497 = vector.extract_strided_slice %334 {offsets = [0, 34], sizes = [8, 222], strides = [1, 1]} : vector<8x256xf32> to vector<8x222xf32>
    %498 = vector.extract_strided_slice %334 {offsets = [0, 0], sizes = [8, 34], strides = [1, 1]} : vector<8x256xf32> to vector<8x34xf32>
    %499 = tpu.concatenate %497, %498 in 1 : vector<8x222xf32>, vector<8x34xf32> -> vector<8x256xf32>
    %c24_265 = arith.constant 24 : index
    %c0_266 = arith.constant 0 : index
    %500 = vector.load %arg3[%c24_265, %c0_266] : memref<25x256xf32, #tpu.memory_space<vmem>>, vector<1x256xf32>
    %501 = vector.broadcast %500 : vector<1x256xf32> to vector<8x256xf32>
    %502 = arith.mulf %499, %501 : vector<8x256xf32>
    %c192_267 = arith.constant 192 : index
    %c0_268 = arith.constant 0 : index
    %503 = vector.load %arg12[%c192_267, %c0_268] : memref<200x256xf32, #tpu.memory_space<vmem>>, vector<8x256xf32>
    tpu.vector_store %arg12[%c192_267, %c0_268], %502 {strides = array<i32>} : memref<200x256xf32, #tpu.memory_space<vmem>>, vector<8x256xf32>,
    %c0_269 = arith.constant 0 : index
    %c0_270 = arith.constant 0 : index
    %504 = vector.load %arg8[%c0_269, %c0_270] : memref<5x200xf32, #tpu.memory_space<vmem>>, vector<5x200xf32>
    %c0_271 = arith.constant 0 : index
    %c0_272 = arith.constant 0 : index
    %505 = vector.load %arg12[%c0_271, %c0_272] : memref<200x256xf32, #tpu.memory_space<vmem>>, vector<200x256xf32>
    %cst_273 = arith.constant dense<0.000000e+00> : vector<5x256xf32>
    %506 = tpu.matmul %504, %505, %cst_273 {dimension_numbers = #tpu.dot_dimension_numbers<[1], [0], [0], [1], [0, 0, 1, 1], [], []>} : vector<5x200xf32>, vector<200x256xf32>, vector<5x256xf32> -> vector<5x256xf32>
    %c0_274 = arith.constant 0 : index
    %c0_275 = arith.constant 0 : index
    %507 = vector.load %arg9[%c0_274, %c0_275] : memref<5x1xf32, #tpu.memory_space<vmem>>, vector<5x1xf32>
    %508 = vector.broadcast %507 : vector<5x1xf32> to vector<5x256xf32>
    %509 = arith.addf %506, %508 : vector<5x256xf32>
    %510 = vector.extract_strided_slice %509 {offsets = [0, 0], sizes = [1, 256], strides = [1, 1]} : vector<5x256xf32> to vector<1x256xf32>
    %c0_276 = arith.constant 0 : index
    %c0_277 = arith.constant 0 : index
    %c0_278 = arith.constant 0 : index
    %511 = vector.load %arg10[%c0_276, %c0_277, %c0_278] : memref<1x1x256xf32, #tpu.memory_space<vmem>>, vector<1x1x256xf32>
    %512 = vector.shape_cast %511 : vector<1x1x256xf32> to vector<1x256xf32>
    %513 = vector.shape_cast %510 : vector<1x256xf32> to vector<1x1x256xf32>
    tpu.vector_store %arg10[%c0_276, %c0_277, %c0_278], %513 {strides = array<i32>} : memref<1x1x256xf32, #tpu.memory_space<vmem>>, vector<1x1x256xf32>,
    %514 = vector.extract_strided_slice %509 {offsets = [1, 0], sizes = [4, 256], strides = [1, 1]} : vector<5x256xf32> to vector<4x256xf32>
    %c0_279 = arith.constant 0 : index
    %c0_280 = arith.constant 0 : index
    %c0_281 = arith.constant 0 : index
    %515 = vector.load %arg11[%c0_279, %c0_280, %c0_281] : memref<1x4x256xf32, #tpu.memory_space<vmem>>, vector<1x4x256xf32>
    %516 = vector.shape_cast %515 : vector<1x4x256xf32> to vector<4x256xf32>
    %517 = vector.shape_cast %514 : vector<4x256xf32> to vector<1x4x256xf32>
    tpu.vector_store %arg11[%c0_279, %c0_280, %c0_281], %517 {strides = array<i32>} : memref<1x4x256xf32, #tpu.memory_space<vmem>>, vector<1x4x256xf32>,
    return
  }
  func.func @transform_0(%arg0: i32) -> (i32, i32, i32) {
    %c0_i32 = arith.constant 0 : i32
    %c0_i32_0 = arith.constant 0 : i32
    %c0_i32_1 = arith.constant 0 : i32
    return %arg0, %c0_i32, %c0_i32_0 : i32, i32, i32
  }
  func.func @transform_1(%arg0: i32) -> (i32, i32, i32) {
    %c0_i32 = arith.constant 0 : i32
    %c0_i32_0 = arith.constant 0 : i32
    %c0_i32_1 = arith.constant 0 : i32
    return %arg0, %c0_i32, %c0_i32_0 : i32, i32, i32
  }
  func.func @transform_2(%arg0: i32) -> (i32, i32) {
    %c0_i32 = arith.constant 0 : i32
    %c0_i32_0 = arith.constant 0 : i32
    %c0_i32_1 = arith.constant 0 : i32
    return %c0_i32, %c0_i32_0 : i32, i32
  }
  func.func @transform_3(%arg0: i32) -> (i32, i32) {
    %c0_i32 = arith.constant 0 : i32
    %c0_i32_0 = arith.constant 0 : i32
    %c0_i32_1 = arith.constant 0 : i32
    return %c0_i32, %c0_i32_0 : i32, i32
  }
  func.func @transform_4(%arg0: i32) -> (i32, i32) {
    %c0_i32 = arith.constant 0 : i32
    %c0_i32_0 = arith.constant 0 : i32
    %c0_i32_1 = arith.constant 0 : i32
    return %c0_i32, %c0_i32_0 : i32, i32
  }
  func.func @transform_5(%arg0: i32) -> (i32, i32) {
    %c0_i32 = arith.constant 0 : i32
    %c0_i32_0 = arith.constant 0 : i32
    %c0_i32_1 = arith.constant 0 : i32
    return %c0_i32, %c0_i32_0 : i32, i32
  }
  func.func @transform_6(%arg0: i32) -> (i32, i32) {
    %c0_i32 = arith.constant 0 : i32
    %c0_i32_0 = arith.constant 0 : i32
    %c0_i32_1 = arith.constant 0 : i32
    return %c0_i32, %c0_i32_0 : i32, i32
  }
  func.func @transform_7(%arg0: i32) -> (i32, i32) {
    %c0_i32 = arith.constant 0 : i32
    %c0_i32_0 = arith.constant 0 : i32
    %c0_i32_1 = arith.constant 0 : i32
    return %c0_i32, %c0_i32_0 : i32, i32
  }
  func.func @transform_8(%arg0: i32) -> (i32, i32) {
    %c0_i32 = arith.constant 0 : i32
    %c0_i32_0 = arith.constant 0 : i32
    %c0_i32_1 = arith.constant 0 : i32
    return %c0_i32, %c0_i32_0 : i32, i32
  }
  func.func @transform_9(%arg0: i32) -> (i32, i32, i32) {
    %c0_i32 = arith.constant 0 : i32
    %c0_i32_0 = arith.constant 0 : i32
    %c0_i32_1 = arith.constant 0 : i32
    return %arg0, %c0_i32, %c0_i32_0 : i32, i32, i32
  }
  func.func @transform_10(%arg0: i32) -> (i32, i32, i32) {
    %c0_i32 = arith.constant 0 : i32
    %c0_i32_0 = arith.constant 0 : i32
    %c0_i32_1 = arith.constant 0 : i32
    return %arg0, %c0_i32, %c0_i32_0 : i32, i32, i32
  }
}

</mosaic_0001>

<llo_original>
// kernel: convblock_forward.1
$region0: #{convblock_forward.1}
  #allocation0 [shape = 'u32[]', space=smem, size = 0x4, offset = 0x4, fixed_abs, tag = 'smem constant byte address 0x4 - core index']
  #allocation1 [shape = 'u32[72,128]{1,0:T(1,128)}', space=vmem, size = 0x9000, scoped, tag = 'internal scratch']
  #allocation2 [shape = 'f32[200,256]{1,0:T(8,128)}', space=vmem, size = 0x32000, scoped, tag = 'scratch operand']
  %s0 = inlined_call_operand.vmem [shape: f32[2,1,256], index: 0, kind: input, shape index: {}]
  %s1 = inlined_call_operand.vmem [shape: f32[2,4,256], index: 1, kind: input, shape index: {}]
  %s2 = inlined_call_operand.vmem [shape: f32[25,256], index: 2, kind: input, shape index: {}]
  %s3 = inlined_call_operand.vmem [shape: f32[4,25], index: 3, kind: input, shape index: {}]
  %s4 = inlined_call_operand.vmem [shape: f32[4,1], index: 4, kind: input, shape index: {}]
  %s5 = inlined_call_operand.vmem [shape: f32[8,200], index: 5, kind: input, shape index: {}]
  %s6 = inlined_call_operand.vmem [shape: f32[8,1], index: 6, kind: input, shape index: {}]
  %s7 = inlined_call_operand.vmem [shape: f32[5,200], index: 7, kind: input, shape index: {}]
  %s8 = inlined_call_operand.vmem [shape: f32[5,1], index: 8, kind: input, shape index: {}]
  %s9 = inlined_call_operand.vmem [shape: f32[2,1,256], index: 9, kind: output, shape index: {0}]
  %s10 = inlined_call_operand.vmem [shape: f32[2,4,256], index: 10, kind: output, shape index: {1}]
  %11 = xla_tuple %s9, %s10
  %s12 = sld [smem:[#allocation0]]
  $region77: #{convblock_forward.1} parent=0
    _
  %s14 = ssub.s32 1, %s12
  %s15 = scalar_select 0, %s14, %s12
  loop: start=0, step=1, limit=4
  $region2: #{convblock_forward.1} parent=0 // loop_pre_header
    _
  $region3: #{convblock_forward.1} parent=0 // loop_header
    %s17 = sphi 0, %s21
    %p18 = scmp.ge.s32.totalorder %s17, 4
    %s27 = sphi 0, %s29
    %s30 = sphi 0, %s27
    %s31 = sphi 0, %s30
    %s47 = sphi 0, %s31
    %s53 = sphi 0, %s55
    %s56 = sphi 0, %s53
    %s57 = sphi 0, %s56
    %s73 = sphi 0, %s57
    %s77 = sphi 0, %s77
    %s79 = sphi 0, %s77
    %s80 = sphi 0, %s79
    %s94 = sphi 0, %s80
    %s98 = sphi 0, %s98
    %s100 = sphi 0, %s98
    %s101 = sphi 0, %s100
    %s115 = sphi 0, %s101
    %s119 = sphi 0, %s119
    %s121 = sphi 0, %s119
    %s122 = sphi 0, %s121
    %s136 = sphi 0, %s122
    %s140 = sphi 0, %s140
    %s142 = sphi 0, %s140
    %s143 = sphi 0, %s142
    %s157 = sphi 0, %s143
    %s161 = sphi 0, %s161
    %s163 = sphi 0, %s161
    %s164 = sphi 0, %s163
    %s178 = sphi 0, %s164
    %s182 = sphi 0, %s182
    %s184 = sphi 0, %s182
    %s185 = sphi 0, %s184
    %s199 = sphi 0, %s185
    %s203 = sphi 0, %s203
    %s205 = sphi 0, %s203
    %s206 = sphi 0, %s205
    %s220 = sphi 0, %s206
    %s226 = sphi 0, %s228
    %s229 = sphi 0, %s226
    %s230 = sphi 0, %s229
    %s246 = sphi 0, %s230
    %s252 = sphi 0, %s254
    %s255 = sphi 0, %s252
    %s256 = sphi 0, %s255
    %s272 = sphi 0, %s256
  $region4: #{convblock_forward.1} parent=0 // loop_header_branch
    %20 = sbr.rel (%p18) target = $region8
  $region5: #{convblock_forward.1} parent=0 // loop_body
    %s22 = ssub.s32 %s17, 1
    %s23 = ssub.s32 %s17, 2
    %s24 = sadd.s32 %s17, 1
    %s25 = ssub.s32 %s17, %s24
    %p26 = scmp.eq.s32.totalorder %s25, 0
    %s28 = sadd.s32 %s27, 1
    %s29 = scalar_select %p26, %s27, %s28
    %p32 = pneg %p26
    %p33 = scmp.eq.s32.totalorder %s17, 1
    %p34 = por %p32, %p33
    %p35 = scmp.ne.s32.totalorder %s27, %s30
    %p36 = scmp.eq.s32.totalorder %s17, 0
    %p37 = por %p35, %p36
    %p38 = scmp.ne.s32.totalorder %s27, %s30
    %p39 = scmp.eq.s32.totalorder %s22, 1
    %p40 = por %p38, %p39
    %p41 = scmp.ne.s32.totalorder %s30, %s31
    %p42 = scmp.eq.s32.totalorder %s22, 0
    %p43 = por %p41, %p42
    %p44 = scmp.ne.s32.totalorder %s30, %s31
    %p45 = scmp.eq.s32.totalorder %s23, 1
    %p46 = por %p44, %p45
    %p48 = scmp.ne.s32.totalorder %s31, %s47
    %p49 = scmp.eq.s32.totalorder %s23, 0
    %p50 = por %p48, %p49
    %s51 = ssub.s32 %s17, %s24
    %p52 = scmp.eq.s32.totalorder %s51, 0
    %s54 = sadd.s32 %s53, 1
    %s55 = scalar_select %p52, %s53, %s54
    %p58 = pneg %p52
    %p59 = scmp.eq.s32.totalorder %s17, 1
    %p60 = por %p58, %p59
    %p61 = scmp.ne.s32.totalorder %s53, %s56
    %p62 = scmp.eq.s32.totalorder %s17, 0
    %p63 = por %p61, %p62
    %p64 = scmp.ne.s32.totalorder %s53, %s56
    %p65 = scmp.eq.s32.totalorder %s22, 1
    %p66 = por %p64, %p65
    %p67 = scmp.ne.s32.totalorder %s56, %s57
    %p68 = scmp.eq.s32.totalorder %s22, 0
    %p69 = por %p67, %p68
    %p70 = scmp.ne.s32.totalorder %s56, %s57
    %p71 = scmp.eq.s32.totalorder %s23, 1
    %p72 = por %p70, %p71
    %p74 = scmp.ne.s32.totalorder %s57, %s73
    %p75 = scmp.eq.s32.totalorder %s23, 0
    %p76 = por %p74, %p75
    %s78 = sadd.s32 %s77, 1
    %p81 = scmp.eq.s32.totalorder %s17, 1
    %p82 = scmp.ne.s32.totalorder %s77, %s79
    %p83 = scmp.eq.s32.totalorder %s17, 0
    %p84 = por %p82, %p83
    %p85 = scmp.ne.s32.totalorder %s77, %s79
    %p86 = scmp.eq.s32.totalorder %s22, 1
    %p87 = por %p85, %p86
    %p88 = scmp.ne.s32.totalorder %s79, %s80
    %p89 = scmp.eq.s32.totalorder %s22, 0
    %p90 = por %p88, %p89
    %p91 = scmp.ne.s32.totalorder %s79, %s80
    %p92 = scmp.eq.s32.totalorder %s23, 1
    %p93 = por %p91, %p92
    %p95 = scmp.ne.s32.totalorder %s80, %s94
    %p96 = scmp.eq.s32.totalorder %s23, 0
    %p97 = por %p95, %p96
    %s99 = sadd.s32 %s98, 1
    %p102 = scmp.eq.s32.totalorder %s17, 1
    %p103 = scmp.ne.s32.totalorder %s98, %s100
    %p104 = scmp.eq.s32.totalorder %s17, 0
    %p105 = por %p103, %p104
    %p106 = scmp.ne.s32.totalorder %s98, %s100
    %p107 = scmp.eq.s32.totalorder %s22, 1
    %p108 = por %p106, %p107
    %p109 = scmp.ne.s32.totalorder %s100, %s101
    %p110 = scmp.eq.s32.totalorder %s22, 0
    %p111 = por %p109, %p110
    %p112 = scmp.ne.s32.totalorder %s100, %s101
    %p113 = scmp.eq.s32.totalorder %s23, 1
    %p114 = por %p112, %p113
    %p116 = scmp.ne.s32.totalorder %s101, %s115
    %p117 = scmp.eq.s32.totalorder %s23, 0
    %p118 = por %p116, %p117
    %s120 = sadd.s32 %s119, 1
    %p123 = scmp.eq.s32.totalorder %s17, 1
    %p124 = scmp.ne.s32.totalorder %s119, %s121
    %p125 = scmp.eq.s32.totalorder %s17, 0
    %p126 = por %p124, %p125
    %p127 = scmp.ne.s32.totalorder %s119, %s121
    %p128 = scmp.eq.s32.totalorder %s22, 1
    %p129 = por %p127, %p128
    %p130 = scmp.ne.s32.totalorder %s121, %s122
    %p131 = scmp.eq.s32.totalorder %s22, 0
    %p132 = por %p130, %p131
    %p133 = scmp.ne.s32.totalorder %s121, %s122
    %p134 = scmp.eq.s32.totalorder %s23, 1
    %p135 = por %p133, %p134
    %p137 = scmp.ne.s32.totalorder %s122, %s136
    %p138 = scmp.eq.s32.totalorder %s23, 0
    %p139 = por %p137, %p138
    %s141 = sadd.s32 %s140, 1
    %p144 = scmp.eq.s32.totalorder %s17, 1
    %p145 = scmp.ne.s32.totalorder %s140, %s142
    %p146 = scmp.eq.s32.totalorder %s17, 0
    %p147 = por %p145, %p146
    %p148 = scmp.ne.s32.totalorder %s140, %s142
    %p149 = scmp.eq.s32.totalorder %s22, 1
    %p150 = por %p148, %p149
    %p151 = scmp.ne.s32.totalorder %s142, %s143
    %p152 = scmp.eq.s32.totalorder %s22, 0
    %p153 = por %p151, %p152
    %p154 = scmp.ne.s32.totalorder %s142, %s143
    %p155 = scmp.eq.s32.totalorder %s23, 1
    %p156 = por %p154, %p155
    %p158 = scmp.ne.s32.totalorder %s143, %s157
    %p159 = scmp.eq.s32.totalorder %s23, 0
    %p160 = por %p158, %p159
    %s162 = sadd.s32 %s161, 1
    %p165 = scmp.eq.s32.totalorder %s17, 1
    %p166 = scmp.ne.s32.totalorder %s161, %s163
    %p167 = scmp.eq.s32.totalorder %s17, 0
    %p168 = por %p166, %p167
    %p169 = scmp.ne.s32.totalorder %s161, %s163
    %p170 = scmp.eq.s32.totalorder %s22, 1
    %p171 = por %p169, %p170
    %p172 = scmp.ne.s32.totalorder %s163, %s164
    %p173 = scmp.eq.s32.totalorder %s22, 0
    %p174 = por %p172, %p173
    %p175 = scmp.ne.s32.totalorder %s163, %s164
    %p176 = scmp.eq.s32.totalorder %s23, 1
    %p177 = por %p175, %p176
    %p179 = scmp.ne.s32.totalorder %s164, %s178
    %p180 = scmp.eq.s32.totalorder %s23, 0
    %p181 = por %p179, %p180
    %s183 = sadd.s32 %s182, 1
    %p186 = scmp.eq.s32.totalorder %s17, 1
    %p187 = scmp.ne.s32.totalorder %s182, %s184
    %p188 = scmp.eq.s32.totalorder %s17, 0
    %p189 = por %p187, %p188
    %p190 = scmp.ne.s32.totalorder %s182, %s184
    %p191 = scmp.eq.s32.totalorder %s22, 1
    %p192 = por %p190, %p191
    %p193 = scmp.ne.s32.totalorder %s184, %s185
    %p194 = scmp.eq.s32.totalorder %s22, 0
    %p195 = por %p193, %p194
    %p196 = scmp.ne.s32.totalorder %s184, %s185
    %p197 = scmp.eq.s32.totalorder %s23, 1
    %p198 = por %p196, %p197
    %p200 = scmp.ne.s32.totalorder %s185, %s199
    %p201 = scmp.eq.s32.totalorder %s23, 0
    %p202 = por %p200, %p201
    %s204 = sadd.s32 %s203, 1
    %p207 = scmp.eq.s32.totalorder %s17, 1
    %p208 = scmp.ne.s32.totalorder %s203, %s205
    %p209 = scmp.eq.s32.totalorder %s17, 0
    %p210 = por %p208, %p209
    %p211 = scmp.ne.s32.totalorder %s203, %s205
    %p212 = scmp.eq.s32.totalorder %s22, 1
    %p213 = por %p211, %p212
    %p214 = scmp.ne.s32.totalorder %s205, %s206
    %p215 = scmp.eq.s32.totalorder %s22, 0
    %p216 = por %p214, %p215
    %p217 = scmp.ne.s32.totalorder %s205, %s206
    %p218 = scmp.eq.s32.totalorder %s23, 1
    %p219 = por %p217, %p218
    %p221 = scmp.ne.s32.totalorder %s206, %s220
    %p222 = scmp.eq.s32.totalorder %s23, 0
    %p223 = por %p221, %p222
    %s224 = ssub.s32 %s17, %s24
    %p225 = scmp.eq.s32.totalorder %s224, 0
    %s227 = sadd.s32 %s226, 1
    %s228 = scalar_select %p225, %s226, %s227
    %p231 = pneg %p225
    %p232 = scmp.eq.s32.totalorder %s17, 1
    %p233 = por %p231, %p232
    %p234 = scmp.ne.s32.totalorder %s226, %s229
    %p235 = scmp.eq.s32.totalorder %s17, 0
    %p236 = por %p234, %p235
    %p237 = scmp.ne.s32.totalorder %s226, %s229
    %p238 = scmp.eq.s32.totalorder %s22, 1
    %p239 = por %p237, %p238
    %p240 = scmp.ne.s32.totalorder %s229, %s230
    %p241 = scmp.eq.s32.totalorder %s22, 0
    %p242 = por %p240, %p241
    %p243 = scmp.ne.s32.totalorder %s229, %s230
    %p244 = scmp.eq.s32.totalorder %s23, 1
    %p245 = por %p243, %p244
    %p247 = scmp.ne.s32.totalorder %s230, %s246
    %p248 = scmp.eq.s32.totalorder %s23, 0
    %p249 = por %p247, %p248
    %s250 = ssub.s32 %s17, %s24
    %p251 = scmp.eq.s32.totalorder %s250, 0
    %s253 = sadd.s32 %s252, 1
    %s254 = scalar_select %p251, %s252, %s253
    %p257 = pneg %p251
    %p258 = scmp.eq.s32.totalorder %s17, 1
    %p259 = por %p257, %p258
    %p260 = scmp.ne.s32.totalorder %s252, %s255
    %p261 = scmp.eq.s32.totalorder %s17, 0
    %p262 = por %p260, %p261
    %p263 = scmp.ne.s32.totalorder %s252, %s255
    %p264 = scmp.eq.s32.totalorder %s22, 1
    %p265 = por %p263, %p264
    %p266 = scmp.ne.s32.totalorder %s255, %s256
    %p267 = scmp.eq.s32.totalorder %s22, 0
    %p268 = por %p266, %p267
    %p269 = scmp.ne.s32.totalorder %s255, %s256
    %p270 = scmp.eq.s32.totalorder %s23, 1
    %p271 = por %p269, %p270
    %p273 = scmp.ne.s32.totalorder %s256, %s272
    %p274 = scmp.eq.s32.totalorder %s23, 0
    %p275 = por %p273, %p274
    %p276 = scmp.le.s32.totalorder 1, %s17
    %p277 = scmp.lt.s32.totalorder %s17, 3
    %p278 = pnand %p276, %p277
    %p279 = pneg %p278
    // Predicated region
    $region9: #{convblock_forward.1} parent=5 // pred_check
      _
    $region10: #{convblock_forward.1} parent=5 // pred_check_branch
      %281 = sbr.rel (%p278) target = $region12
    $region11: #{convblock_forward.1} parent=5 // pred_region
      %s282 = ssub.s32 %s17, 1
      // Predicated region
      $region13: #{convblock_forward.1} parent=11 // pred_check
        %p283 = pneg %p90
      $region14: #{convblock_forward.1} parent=11 // pred_check_branch
        %285 = sbr.rel (%p283) target = $region16
      $region15: #{convblock_forward.1} parent=11 // pred_region
        _
      $region16: #{convblock_forward.1} parent=11 // pred_fallthru
        _
      // Predicated region
      $region17: #{convblock_forward.1} parent=11 // pred_check
        %p286 = pneg %p111
      $region18: #{convblock_forward.1} parent=11 // pred_check_branch
        %288 = sbr.rel (%p286) target = $region20
      $region19: #{convblock_forward.1} parent=11 // pred_region
        _
      $region20: #{convblock_forward.1} parent=11 // pred_fallthru
        _
      // Predicated region
      $region21: #{convblock_forward.1} parent=11 // pred_check
        %p289 = pneg %p132
      $region22: #{convblock_forward.1} parent=11 // pred_check_branch
        %291 = sbr.rel (%p289) target = $region24
      $region23: #{convblock_forward.1} parent=11 // pred_region
        _
      $region24: #{convblock_forward.1} parent=11 // pred_fallthru
        _
      // Predicated region
      $region25: #{convblock_forward.1} parent=11 // pred_check
        %p292 = pneg %p153
      $region26: #{convblock_forward.1} parent=11 // pred_check_branch
        %294 = sbr.rel (%p292) target = $region28
      $region27: #{convblock_forward.1} parent=11 // pred_region
        _
      $region28: #{convblock_forward.1} parent=11 // pred_fallthru
        _
      // Predicated region
      $region29: #{convblock_forward.1} parent=11 // pred_check
        %p295 = pneg %p174
      $region30: #{convblock_forward.1} parent=11 // pred_check_branch
        %297 = sbr.rel (%p295) target = $region32
      $region31: #{convblock_forward.1} parent=11 // pred_region
        _
      $region32: #{convblock_forward.1} parent=11 // pred_fallthru
        _
      // Predicated region
      $region33: #{convblock_forward.1} parent=11 // pred_check
        %p298 = pneg %p195
      $region34: #{convblock_forward.1} parent=11 // pred_check_branch
        %300 = sbr.rel (%p298) target = $region36
      $region35: #{convblock_forward.1} parent=11 // pred_region
        _
      $region36: #{convblock_forward.1} parent=11 // pred_fallthru
        _
      // Predicated region
      $region37: #{convblock_forward.1} parent=11 // pred_check
        %p301 = pneg %p216
      $region38: #{convblock_forward.1} parent=11 // pred_check_branch
        %303 = sbr.rel (%p301) target = $region40
      $region39: #{convblock_forward.1} parent=11 // pred_region
        _
      $region40: #{convblock_forward.1} parent=11 // pred_fallthru
        _
    $region12: #{convblock_forward.1} parent=5 // pred_fallthru
      _
    %p304 = scmp.lt.s32.totalorder %s17, 2
    // Predicated region
    $region41: #{convblock_forward.1} parent=5 // pred_check
      %p305 = pneg %p304
    $region42: #{convblock_forward.1} parent=5 // pred_check_branch
      %307 = sbr.rel (%p305) target = $region44
    $region43: #{convblock_forward.1} parent=5 // pred_region
      // Predicated region
      $region45: #{convblock_forward.1} parent=43 // pred_check
        %p308 = pneg %p37
      $region46: #{convblock_forward.1} parent=43 // pred_check_branch
        %310 = sbr.rel (%p308) target = $region48
      $region47: #{convblock_forward.1} parent=43 // pred_region
        %p311 = scmp.lt.s32.totalorder %s17, 1
        %s312 = scalar_select %p311, %s17, 1
        %s313 = smul.addr %s312, 2
        %s314 = scalar_lea.vmem %s0, %s313
      $region48: #{convblock_forward.1} parent=43 // pred_fallthru
        _
      // Predicated region
      $region49: #{convblock_forward.1} parent=43 // pred_check
        %p315 = pneg %p63
      $region50: #{convblock_forward.1} parent=43 // pred_check_branch
        %317 = sbr.rel (%p315) target = $region52
      $region51: #{convblock_forward.1} parent=43 // pred_region
        %p318 = scmp.lt.s32.totalorder %s17, 1
        %s319 = scalar_select %p318, %s17, 1
        %s320 = smul.addr %s319, 2
        %s321 = smul.addr %s320, 4
        %s322 = scalar_lea.vmem %s1, %s321
      $region52: #{convblock_forward.1} parent=43 // pred_fallthru
        _
    $region44: #{convblock_forward.1} parent=5 // pred_fallthru
      _
    %p323 = scmp.le.s32.totalorder 1, %s17
    %p324 = scmp.lt.s32.totalorder %s17, 3
    %p325 = pnand %p323, %p324
    %p326 = pneg %p325
    // Predicated region
    $region53: #{convblock_forward.1} parent=5 // pred_check
      _
    $region54: #{convblock_forward.1} parent=5 // pred_check_branch
      %328 = sbr.rel (%p325) target = $region56
    $region55: #{convblock_forward.1} parent=5 // pred_region
      %s329 = ssub.s32 %s17, 1
      %p330 = scmp.lt.s32.totalorder %s22, 1
      %s331 = scalar_select %p330, %s22, 1
      %s332 = smul.addr %s331, 2
      %s333 = scalar_lea.vmem %s0, %s332
      %p334 = pneg %p43
      %p335 = pneg %p40
      %p336 = scmp.lt.s32.totalorder %s22, 1
      %s337 = scalar_select %p336, %s22, 1
      %s338 = smul.addr %s337, 2
      %s339 = smul.addr %s338, 4
      %s340 = scalar_lea.vmem %s1, %s339
      %p341 = pneg %p69
      %p342 = pneg %p66
      %p343 = pneg %p90
      %p344 = pneg %p87
      %p345 = pneg %p111
      %p346 = pneg %p108
      %p347 = pneg %p132
      %p348 = pneg %p129
      %p349 = pneg %p153
      %p350 = pneg %p150
      %p351 = pneg %p174
      %p352 = pneg %p171
      %p353 = pneg %p195
      %p354 = pneg %p192
      %p355 = pneg %p216
      %p356 = pneg %p213
      %p357 = pneg %p242
      %p358 = pneg %p239
      %p359 = scmp.lt.s32.totalorder %s22, 1
      %s360 = scalar_select %p359, %s22, 1
      %s361 = smul.addr %s360, 2
      %s362 = scalar_lea.vmem %s9, %s361
      %p363 = pneg %p268
      %p364 = pneg %p265
      %p365 = scmp.lt.s32.totalorder %s22, 1
      %s366 = scalar_select %p365, %s22, 1
      %s367 = smul.addr %s366, 2
      %s368 = smul.addr %s367, 4
      %s369 = scalar_lea.vmem %s10, %s368
      %p370 = scmp.lt.s32.totalorder %s22, 1
      %s371 = scalar_select %p370, %s22, 1
      %s372 = smul.addr %s371, 2
      %s373 = scalar_lea.vmem %s0, %s372
      %p374 = scmp.lt.s32.totalorder %s22, 1
      %s375 = scalar_select %p374, %s22, 1
      %s376 = smul.addr %s375, 2
      %s377 = smul.addr %s376, 4
      %s378 = scalar_lea.vmem %s1, %s377
      %p379 = scmp.lt.s32.totalorder %s22, 1
      %s380 = scalar_select %p379, %s22, 1
      %s381 = smul.addr %s380, 2
      %s382 = scalar_lea.vmem %s9, %s381
      %p383 = scmp.lt.s32.totalorder %s22, 1
      %s384 = scalar_select %p383, %s22, 1
      %s385 = smul.addr %s384, 2
      %s386 = smul.addr %s385, 4
      %s387 = scalar_lea.vmem %s10, %s386
      %v388 = vld [vmem:[%s373] sm:$0x3]
      %v390 = vperm.slane %v388, 1
      %391 = vrot.lane.b32.xlu0 %v390, 34
      %v392 = vpop.permute.xlu0 %391
      %v394 = vperm.slane %v388, 0
      %395 = vrot.lane.b32.xlu0 %v394, 34
      %v396 = vpop.permute.xlu0 %395
      %vm397 = vcmask 277504
      %v398 = vsel %vm397, %v396, %v392
      %v401 = vsel %vm397, %v392, %v396
      %v402 = vld [vmem:[%s2] ss:$8 sm:$0x3]
      %v404 = vperm.slane %v402, 0
      %v405 = vperm.slane %v402, 1
      %v408 = vmul.f32 %v401, %v404
      %v409 = vmul.f32 %v398, %v405
      %v412 = vrot.slane %v409, 7
      %vm413 = vcmask 1040384
      %v414 = vsel %vm413, %v408, %v412
      %v416 = vlaneseq
      %vm417 = vcmp.ge.s32.totalorder %v416, 0
      %vm418 = vcmp.lt.s32.totalorder %v416, 256
      %vm419 = vmand %vm417, %vm418
      %420 = vst.msk [vmem:[#allocation2] ss:$8 sm:$0x3] %vm419, %v414
      %421 = vst.msk [vmem:[#allocation2] ss:$8 sm:$0x0] %vm419, %v414
      %422 = vrot.lane.b32.xlu0 %v390, 33
      %v423 = vpop.permute.xlu0 %422
      %425 = vrot.lane.b32.xlu0 %v394, 33
      %v426 = vpop.permute.xlu0 %425
      %vm427 = vcmask 269312
      %v428 = vsel %vm427, %v426, %v423
      %v431 = vsel %vm427, %v423, %v426
      %s432 = scalar_lea.vmem %s2, 1
      %v433 = vld [vmem:[%s432] ss:$8 sm:$0x3]
      %v435 = vperm.slane %v433, 0
      %v436 = vperm.slane %v433, 1
      %v439 = vmul.f32 %v431, %v435
      %v440 = vmul.f32 %v428, %v436
      %v443 = vrot.slane %v440, 7
      %v444 = vsel %vm413, %v439, %v443
      %s446 = scalar_lea.vmem [#allocation2], 1
      %447 = vst.msk [vmem:[%s446] ss:$8 sm:$0x3] %vm419, %v444
      %448 = vst.msk [vmem:[%s446] ss:$8 sm:$0x0] %vm419, %v444
      %449 = vrot.lane.b32.xlu0 %v390, 32
      %v450 = vpop.permute.xlu0 %449
      %452 = vrot.lane.b32.xlu0 %v394, 32
      %v453 = vpop.permute.xlu0 %452
      %vm454 = vcmask 261120
      %v455 = vsel %vm454, %v453, %v450
      %v458 = vsel %vm454, %v450, %v453
      %s459 = scalar_lea.vmem %s2, 2
      %v460 = vld [vmem:[%s459] ss:$8 sm:$0x3]
      %v462 = vperm.slane %v460, 0
      %v463 = vperm.slane %v460, 1
      %v466 = vmul.f32 %v458, %v462
      %v467 = vmul.f32 %v455, %v463
      %v470 = vrot.slane %v467, 7
      %v471 = vsel %vm413, %v466, %v470
      %s473 = scalar_lea.vmem [#allocation2], 2
      %474 = vst.msk [vmem:[%s473] ss:$8 sm:$0x3] %vm419, %v471
      %475 = vst.msk [vmem:[%s473] ss:$8 sm:$0x0] %vm419, %v471
      %476 = vrot.lane.b32.xlu0 %v390, 31
      %v477 = vpop.permute.xlu0 %476
      %479 = vrot.lane.b32.xlu0 %v394, 31
      %v480 = vpop.permute.xlu0 %479
      %vm481 = vcmask 252928
      %v482 = vsel %vm481, %v480, %v477
      %v485 = vsel %vm481, %v477, %v480
      %s486 = scalar_lea.vmem %s2, 3
      %v487 = vld [vmem:[%s486] ss:$8 sm:$0x3]
      %v489 = vperm.slane %v487, 0
      %v490 = vperm.slane %v487, 1
      %v493 = vmul.f32 %v485, %v489
      %v494 = vmul.f32 %v482, %v490
      %v497 = vrot.slane %v494, 7
      %v498 = vsel %vm413, %v493, %v497
      %s500 = scalar_lea.vmem [#allocation2], 3
      %501 = vst.msk [vmem:[%s500] ss:$8 sm:$0x3] %vm419, %v498
      %502 = vst.msk [vmem:[%s500] ss:$8 sm:$0x0] %vm419, %v498
      %503 = vrot.lane.b32.xlu0 %v390, 30
      %v504 = vpop.permute.xlu0 %503
      %506 = vrot.lane.b32.xlu0 %v394, 30
      %v507 = vpop.permute.xlu0 %506
      %vm508 = vcmask 244736
      %v509 = vsel %vm508, %v507, %v504
      %v512 = vsel %vm508, %v504, %v507
      %s513 = scalar_lea.vmem %s2, 4
      %v514 = vld [vmem:[%s513] ss:$8 sm:$0x3]
      %v516 = vperm.slane %v514, 0
      %v517 = vperm.slane %v514, 1
      %v520 = vmul.f32 %v512, %v516
      %v521 = vmul.f32 %v509, %v517
      %v524 = vrot.slane %v521, 7
      %v525 = vsel %vm413, %v520, %v524
      %s527 = scalar_lea.vmem [#allocation2], 4
      %528 = vst.msk [vmem:[%s527] ss:$8 sm:$0x3] %vm419, %v525
      %529 = vst.msk [vmem:[%s527] ss:$8 sm:$0x0] %vm419, %v525
      %530 = vrot.lane.b32.xlu0 %v390, 18
      %v531 = vpop.permute.xlu0 %530
      %533 = vrot.lane.b32.xlu0 %v394, 18
      %v534 = vpop.permute.xlu0 %533
      %vm535 = vcmask 146432
      %v536 = vsel %vm535, %v534, %v531
      %v539 = vsel %vm535, %v531, %v534
      %s540 = scalar_lea.vmem %s2, 5
      %v541 = vld [vmem:[%s540] ss:$8 sm:$0x3]
      %v543 = vperm.slane %v541, 0
      %v544 = vperm.slane %v541, 1
      %v547 = vmul.f32 %v539, %v543
      %v548 = vmul.f32 %v536, %v544
      %v551 = vrot.slane %v548, 7
      %v552 = vsel %vm413, %v547, %v551
      %s554 = scalar_lea.vmem [#allocation2], 5
      %555 = vst.msk [vmem:[%s554] ss:$8 sm:$0x3] %vm419, %v552
      %556 = vst.msk [vmem:[%s554] ss:$8 sm:$0x0] %vm419, %v552
      %557 = vrot.lane.b32.xlu0 %v390, 17
      %v558 = vpop.permute.xlu0 %557
      %560 = vrot.lane.b32.xlu0 %v394, 17
      %v561 = vpop.permute.xlu0 %560
      %vm562 = vcmask 138240
      %v563 = vsel %vm562, %v561, %v558
      %v566 = vsel %vm562, %v558, %v561
      %s567 = scalar_lea.vmem %s2, 6
      %v568 = vld [vmem:[%s567] ss:$8 sm:$0x3]
      %v570 = vperm.slane %v568, 0
      %v571 = vperm.slane %v568, 1
      %v574 = vmul.f32 %v566, %v570
      %v575 = vmul.f32 %v563, %v571
      %v578 = vrot.slane %v575, 7
      %v579 = vsel %vm413, %v574, %v578
      %s581 = scalar_lea.vmem [#allocation2], 6
      %582 = vst.msk [vmem:[%s581] ss:$8 sm:$0x3] %vm419, %v579
      %583 = vst.msk [vmem:[%s581] ss:$8 sm:$0x0] %vm419, %v579
      %584 = vrot.lane.b32.xlu0 %v390, 16
      %v585 = vpop.permute.xlu0 %584
      %587 = vrot.lane.b32.xlu0 %v394, 16
      %v588 = vpop.permute.xlu0 %587
      %vm589 = vcmask 130048
      %v590 = vsel %vm589, %v588, %v585
      %v593 = vsel %vm589, %v585, %v588
      %s594 = scalar_lea.vmem %s2, 7
      %v595 = vld [vmem:[%s594] ss:$8 sm:$0x3]
      %v597 = vperm.slane %v595, 0
      %v598 = vperm.slane %v595, 1
      %v601 = vmul.f32 %v593, %v597
      %v602 = vmul.f32 %v590, %v598
      %v605 = vrot.slane %v602, 7
      %v606 = vsel %vm413, %v601, %v605
      %s608 = scalar_lea.vmem [#allocation2], 7
      %609 = vst.msk [vmem:[%s608] ss:$8 sm:$0x3] %vm419, %v606
      %610 = vst.msk [vmem:[%s608] ss:$8 sm:$0x0] %vm419, %v606
      %611 = vrot.lane.b32.xlu0 %v390, 15
      %v612 = vpop.permute.xlu0 %611
      %614 = vrot.lane.b32.xlu0 %v394, 15
      %v615 = vpop.permute.xlu0 %614
      %vm616 = vcmask 121856
      %v617 = vsel %vm616, %v615, %v612
      %v620 = vsel %vm616, %v612, %v615
      %s621 = scalar_lea.vmem %s2, 16
      %v622 = vld [vmem:[%s621] ss:$8 sm:$0x3]
      %v624 = vperm.slane %v622, 0
      %v625 = vperm.slane %v622, 1
      %v628 = vmul.f32 %v620, %v624
      %v629 = vmul.f32 %v617, %v625
      %v632 = vrot.slane %v629, 7
      %v633 = vsel %vm413, %v628, %v632
      %s635 = scalar_lea.vmem [#allocation2], 16
      %636 = vst.msk [vmem:[%s635] ss:$8 sm:$0x3] %vm419, %v633
      %637 = vst.msk [vmem:[%s635] ss:$8 sm:$0x0] %vm419, %v633
      %638 = vrot.lane.b32.xlu0 %v390, 14
      %v639 = vpop.permute.xlu0 %638
      %641 = vrot.lane.b32.xlu0 %v394, 14
      %v642 = vpop.permute.xlu0 %641
      %vm643 = vcmask 113664
      %v644 = vsel %vm643, %v642, %v639
      %v647 = vsel %vm643, %v639, %v642
      %s648 = scalar_lea.vmem %s2, 17
      %v649 = vld [vmem:[%s648] ss:$8 sm:$0x3]
      %v651 = vperm.slane %v649, 0
      %v652 = vperm.slane %v649, 1
      %v655 = vmul.f32 %v647, %v651
      %v656 = vmul.f32 %v644, %v652
      %v659 = vrot.slane %v656, 7
      %v660 = vsel %vm413, %v655, %v659
      %s662 = scalar_lea.vmem [#allocation2], 17
      %663 = vst.msk [vmem:[%s662] ss:$8 sm:$0x3] %vm419, %v660
      %664 = vst.msk [vmem:[%s662] ss:$8 sm:$0x0] %vm419, %v660
      %665 = vrot.lane.b32.xlu0 %v390, 2
      %v666 = vpop.permute.xlu0 %665
      %668 = vrot.lane.b32.xlu0 %v394, 2
      %v669 = vpop.permute.xlu0 %668
      %vm670 = vcmask 15360
      %v671 = vsel %vm670, %v669, %v666
      %v674 = vsel %vm670, %v666, %v669
      %s675 = scalar_lea.vmem %s2, 18
      %v676 = vld [vmem:[%s675] ss:$8 sm:$0x3]
      %v678 = vperm.slane %v676, 0
      %v679 = vperm.slane %v676, 1
      %v682 = vmul.f32 %v674, %v678
      %v683 = vmul.f32 %v671, %v679
      %v686 = vrot.slane %v683, 7
      %v687 = vsel %vm413, %v682, %v686
      %s689 = scalar_lea.vmem [#allocation2], 18
      %690 = vst.msk [vmem:[%s689] ss:$8 sm:$0x3] %vm419, %v687
      %691 = vst.msk [vmem:[%s689] ss:$8 sm:$0x0] %vm419, %v687
      %692 = vrot.lane.b32.xlu0 %v390, 1
      %v693 = vpop.permute.xlu0 %692
      %695 = vrot.lane.b32.xlu0 %v394, 1
      %v696 = vpop.permute.xlu0 %695
      %vm697 = vcmask 7168
      %v698 = vsel %vm697, %v696, %v693
      %v701 = vsel %vm697, %v693, %v696
      %s702 = scalar_lea.vmem %s2, 19
      %v703 = vld [vmem:[%s702] ss:$8 sm:$0x3]
      %v705 = vperm.slane %v703, 0
      %v706 = vperm.slane %v703, 1
      %v709 = vmul.f32 %v701, %v705
      %v710 = vmul.f32 %v698, %v706
      %v713 = vrot.slane %v710, 7
      %v714 = vsel %vm413, %v709, %v713
      %s716 = scalar_lea.vmem [#allocation2], 19
      %717 = vst.msk [vmem:[%s716] ss:$8 sm:$0x3] %vm419, %v714
      %718 = vst.msk [vmem:[%s716] ss:$8 sm:$0x0] %vm419, %v714
      %s719 = scalar_lea.vmem [#allocation2], 20
      %720 = vst.msk [vmem:[%s719] ss:$8 sm:$0x3] %vm419, %v388
      %721 = vst.msk [vmem:[%s719] ss:$8 sm:$0x0] %vm419, %v388
      %722 = vrot.lane.b32.xlu0 %v394, 127
      %v723 = vpop.permute.xlu0 %722
      %724 = vrot.lane.b32.xlu0 %v390, 127
      %v725 = vpop.permute.xlu0 %724
      %vm726 = vcmask 1039360
      %v727 = vsel %vm726, %v723, %v725
      %v731 = vsel %vm726, %v725, %v723
      %s732 = scalar_lea.vmem %s2, 21
      %v733 = vld [vmem:[%s732] ss:$8 sm:$0x3]
      %v735 = vperm.slane %v733, 0
      %v736 = vperm.slane %v733, 1
      %v739 = vmul.f32 %v727, %v735
      %v740 = vmul.f32 %v731, %v736
      %v743 = vrot.slane %v740, 7
      %v744 = vsel %vm413, %v739, %v743
      %s746 = scalar_lea.vmem [#allocation2], 21
      %747 = vst.msk [vmem:[%s746] ss:$8 sm:$0x3] %vm419, %v744
      %748 = vst.msk [vmem:[%s746] ss:$8 sm:$0x0] %vm419, %v744
      %749 = vrot.lane.b32.xlu0 %v394, 126
      %v750 = vpop.permute.xlu0 %749
      %751 = vrot.lane.b32.xlu0 %v390, 126
      %v752 = vpop.permute.xlu0 %751
      %vm753 = vcmask 1031168
      %v754 = vsel %vm753, %v750, %v752
      %v758 = vsel %vm753, %v752, %v750
      %s759 = scalar_lea.vmem %s2, 22
      %v760 = vld [vmem:[%s759] ss:$8 sm:$0x3]
      %v762 = vperm.slane %v760, 0
      %v763 = vperm.slane %v760, 1
      %v766 = vmul.f32 %v754, %v762
      %v767 = vmul.f32 %v758, %v763
      %v770 = vrot.slane %v767, 7
      %v771 = vsel %vm413, %v766, %v770
      %s773 = scalar_lea.vmem [#allocation2], 22
      %774 = vst.msk [vmem:[%s773] ss:$8 sm:$0x3] %vm419, %v771
      %775 = vst.msk [vmem:[%s773] ss:$8 sm:$0x0] %vm419, %v771
      %776 = vrot.lane.b32.xlu0 %v394, 114
      %v777 = vpop.permute.xlu0 %776
      %778 = vrot.lane.b32.xlu0 %v390, 114
      %v779 = vpop.permute.xlu0 %778
      %vm780 = vcmask 932864
      %v781 = vsel %vm780, %v777, %v779
      %v785 = vsel %vm780, %v779, %v777
      %s786 = scalar_lea.vmem %s2, 23
      %v787 = vld [vmem:[%s786] ss:$8 sm:$0x3]
      %v789 = vperm.slane %v787, 0
      %v790 = vperm.slane %v787, 1
      %v793 = vmul.f32 %v781, %v789
      %v794 = vmul.f32 %v785, %v790
      %v797 = vrot.slane %v794, 7
      %v798 = vsel %vm413, %v793, %v797
      %s800 = scalar_lea.vmem [#allocation2], 23
      %801 = vst.msk [vmem:[%s800] ss:$8 sm:$0x3] %vm419, %v798
      %802 = vst.msk [vmem:[%s800] ss:$8 sm:$0x0] %vm419, %v798
      %803 = vrot.lane.b32.xlu0 %v394, 113
      %v804 = vpop.permute.xlu0 %803
      %805 = vrot.lane.b32.xlu0 %v390, 113
      %v806 = vpop.permute.xlu0 %805
      %vm807 = vcmask 924672
      %v808 = vsel %vm807, %v804, %v806
      %v812 = vsel %vm807, %v806, %v804
      %s813 = scalar_lea.vmem %s2, 32
      %v814 = vld [vmem:[%s813] ss:$8 sm:$0x3]
      %v816 = vperm.slane %v814, 0
      %v817 = vperm.slane %v814, 1
      %v820 = vmul.f32 %v808, %v816
      %v821 = vmul.f32 %v812, %v817
      %v824 = vrot.slane %v821, 7
      %v825 = vsel %vm413, %v820, %v824
      %s827 = scalar_lea.vmem [#allocation2], 32
      %828 = vst.msk [vmem:[%s827] ss:$8 sm:$0x3] %vm419, %v825
      %829 = vst.msk [vmem:[%s827] ss:$8 sm:$0x0] %vm419, %v825
      %830 = vrot.lane.b32.xlu0 %v394, 112
      %v831 = vpop.permute.xlu0 %830
      %832 = vrot.lane.b32.xlu0 %v390, 112
      %v833 = vpop.permute.xlu0 %832
      %vm834 = vcmask 916480
      %v835 = vsel %vm834, %v831, %v833
      %v839 = vsel %vm834, %v833, %v831
      %s840 = scalar_lea.vmem %s2, 33
      %v841 = vld [vmem:[%s840] ss:$8 sm:$0x3]
      %v843 = vperm.slane %v841, 0
      %v844 = vperm.slane %v841, 1
      %v847 = vmul.f32 %v835, %v843
      %v848 = vmul.f32 %v839, %v844
      %v851 = vrot.slane %v848, 7
      %v852 = vsel %vm413, %v847, %v851
      %s854 = scalar_lea.vmem [#allocation2], 33
      %855 = vst.msk [vmem:[%s854] ss:$8 sm:$0x3] %vm419, %v852
      %856 = vst.msk [vmem:[%s854] ss:$8 sm:$0x0] %vm419, %v852
      %857 = vrot.lane.b32.xlu0 %v394, 111
      %v858 = vpop.permute.xlu0 %857
      %859 = vrot.lane.b32.xlu0 %v390, 111
      %v860 = vpop.permute.xlu0 %859
      %vm861 = vcmask 908288
      %v862 = vsel %vm861, %v858, %v860
      %v866 = vsel %vm861, %v860, %v858
      %s867 = scalar_lea.vmem %s2, 34
      %v868 = vld [vmem:[%s867] ss:$8 sm:$0x3]
      %v870 = vperm.slane %v868, 0
      %v871 = vperm.slane %v868, 1
      %v874 = vmul.f32 %v862, %v870
      %v875 = vmul.f32 %v866, %v871
      %v878 = vrot.slane %v875, 7
      %v879 = vsel %vm413, %v874, %v878
      %s881 = scalar_lea.vmem [#allocation2], 34
      %882 = vst.msk [vmem:[%s881] ss:$8 sm:$0x3] %vm419, %v879
      %883 = vst.msk [vmem:[%s881] ss:$8 sm:$0x0] %vm419, %v879
      %884 = vrot.lane.b32.xlu0 %v394, 110
      %v885 = vpop.permute.xlu0 %884
      %886 = vrot.lane.b32.xlu0 %v390, 110
      %v887 = vpop.permute.xlu0 %886
      %vm888 = vcmask 900096
      %v889 = vsel %vm888, %v885, %v887
      %v893 = vsel %vm888, %v887, %v885
      %s894 = scalar_lea.vmem %s2, 35
      %v895 = vld [vmem:[%s894] ss:$8 sm:$0x3]
      %v897 = vperm.slane %v895, 0
      %v898 = vperm.slane %v895, 1
      %v901 = vmul.f32 %v889, %v897
      %v902 = vmul.f32 %v893, %v898
      %v905 = vrot.slane %v902, 7
      %v906 = vsel %vm413, %v901, %v905
      %s908 = scalar_lea.vmem [#allocation2], 35
      %909 = vst.msk [vmem:[%s908] ss:$8 sm:$0x3] %vm419, %v906
      %910 = vst.msk [vmem:[%s908] ss:$8 sm:$0x0] %vm419, %v906
      %911 = vrot.lane.b32.xlu0 %v394, 98
      %v912 = vpop.permute.xlu0 %911
      %913 = vrot.lane.b32.xlu0 %v390, 98
      %v914 = vpop.permute.xlu0 %913
      %vm915 = vcmask 801792
      %v916 = vsel %vm915, %v912, %v914
      %v920 = vsel %vm915, %v914, %v912
      %s921 = scalar_lea.vmem %s2, 36
      %v922 = vld [vmem:[%s921] ss:$8 sm:$0x3]
      %v924 = vperm.slane %v922, 0
      %v925 = vperm.slane %v922, 1
      %v928 = vmul.f32 %v916, %v924
      %v929 = vmul.f32 %v920, %v925
      %v932 = vrot.slane %v929, 7
      %v933 = vsel %vm413, %v928, %v932
      %s935 = scalar_lea.vmem [#allocation2], 36
      %936 = vst.msk [vmem:[%s935] ss:$8 sm:$0x3] %vm419, %v933
      %937 = vst.msk [vmem:[%s935] ss:$8 sm:$0x0] %vm419, %v933
      %938 = vrot.lane.b32.xlu0 %v394, 97
      %v939 = vpop.permute.xlu0 %938
      %940 = vrot.lane.b32.xlu0 %v390, 97
      %v941 = vpop.permute.xlu0 %940
      %vm942 = vcmask 793600
      %v943 = vsel %vm942, %v939, %v941
      %v947 = vsel %vm942, %v941, %v939
      %s948 = scalar_lea.vmem %s2, 37
      %v949 = vld [vmem:[%s948] ss:$8 sm:$0x3]
      %v951 = vperm.slane %v949, 0
      %v952 = vperm.slane %v949, 1
      %v955 = vmul.f32 %v943, %v951
      %v956 = vmul.f32 %v947, %v952
      %v959 = vrot.slane %v956, 7
      %v960 = vsel %vm413, %v955, %v959
      %s962 = scalar_lea.vmem [#allocation2], 37
      %963 = vst.msk [vmem:[%s962] ss:$8 sm:$0x3] %vm419, %v960
      %964 = vst.msk [vmem:[%s962] ss:$8 sm:$0x0] %vm419, %v960
      %965 = vrot.lane.b32.xlu0 %v394, 96
      %v966 = vpop.permute.xlu0 %965
      %967 = vrot.lane.b32.xlu0 %v390, 96
      %v968 = vpop.permute.xlu0 %967
      %vm969 = vcmask 785408
      %v970 = vsel %vm969, %v966, %v968
      %v974 = vsel %vm969, %v968, %v966
      %s975 = scalar_lea.vmem %s2, 38
      %v976 = vld [vmem:[%s975] ss:$8 sm:$0x3]
      %v978 = vperm.slane %v976, 0
      %v979 = vperm.slane %v976, 1
      %v982 = vmul.f32 %v970, %v978
      %v983 = vmul.f32 %v974, %v979
      %v986 = vrot.slane %v983, 7
      %v987 = vsel %vm413, %v982, %v986
      %s989 = scalar_lea.vmem [#allocation2], 38
      %990 = vst.msk [vmem:[%s989] ss:$8 sm:$0x3] %vm419, %v987
      %991 = vst.msk [vmem:[%s989] ss:$8 sm:$0x0] %vm419, %v987
      %992 = vrot.lane.b32.xlu0 %v394, 95
      %v993 = vpop.permute.xlu0 %992
      %994 = vrot.lane.b32.xlu0 %v390, 95
      %v995 = vpop.permute.xlu0 %994
      %vm996 = vcmask 777216
      %v997 = vsel %vm996, %v993, %v995
      %v1001 = vsel %vm996, %v995, %v993
      %s1002 = scalar_lea.vmem %s2, 39
      %v1003 = vld [vmem:[%s1002] ss:$8 sm:$0x3]
      %v1005 = vperm.slane %v1003, 0
      %v1006 = vperm.slane %v1003, 1
      %v1009 = vmul.f32 %v997, %v1005
      %v1010 = vmul.f32 %v1001, %v1006
      %v1013 = vrot.slane %v1010, 7
      %v1014 = vsel %vm413, %v1009, %v1013
      %s1016 = scalar_lea.vmem [#allocation2], 39
      %1017 = vst.msk [vmem:[%s1016] ss:$8 sm:$0x3] %vm419, %v1014
      %1018 = vst.msk [vmem:[%s1016] ss:$8 sm:$0x0] %vm419, %v1014
      %1019 = vrot.lane.b32.xlu0 %v394, 94
      %v1020 = vpop.permute.xlu0 %1019
      %1021 = vrot.lane.b32.xlu0 %v390, 94
      %v1022 = vpop.permute.xlu0 %1021
      %vm1023 = vcmask 769024
      %v1024 = vsel %vm1023, %v1020, %v1022
      %v1028 = vsel %vm1023, %v1022, %v1020
      %s1029 = scalar_lea.vmem %s2, 48
      %v1030 = vld [vmem:[%s1029] ss:$8 sm:$0x3]
      %v1032 = vperm.slane %v1030, 0
      %v1033 = vperm.slane %v1030, 1
      %v1036 = vmul.f32 %v1024, %v1032
      %v1037 = vmul.f32 %v1028, %v1033
      %v1040 = vrot.slane %v1037, 7
      %v1041 = vsel %vm413, %v1036, %v1040
      %s1043 = scalar_lea.vmem [#allocation2], 48
      %1044 = vst.msk [vmem:[%s1043] ss:$8 sm:$0x3] %vm419, %v1041
      %1045 = vst.msk [vmem:[%s1043] ss:$8 sm:$0x0] %vm419, %v1041
      %v1046 = vld [vmem:[%s3] sm:$0xf]
      %v1047 = vld [vmem:[#allocation2] sm:$0xff]
      %v1048 = vld [vmem:[#allocation2 + $0x8] sm:$0xff]
      %v1049 = vld [vmem:[#allocation2 + $0x10] sm:$0xff]
      %v1050 = vld [vmem:[#allocation2 + $0x18] sm:$0xff]
      %v1051 = vld [vmem:[#allocation2 + $0x20] sm:$0xff]
      %v1052 = vld [vmem:[#allocation2 + $0x28] sm:$0xff]
      %v1053 = vld [vmem:[#allocation2 + $0x30] sm:$0x1]
      %v1054 = vld [vmem:[#allocation2 + $0x38] sm:$0x1]
      %v1055 = vld [vmem:[%s4] sm:$0xf]
      %1057 = vset.pattern.permute.xlu0 0
      %1058 = vperm.xlu0 %1057, %v1055
      %v1059 = vpop.permute.xlu0 %1058
      %vm1061 = vcmask 203776
      %v1063 = vsel %vm1061, %v1046, 0
      %v1066 = vsel %vm413, %v1053, 0
      %v1069 = vsel %vm413, %v1054, 0
      %1071 = vmatpush.msra.mxu0 0.0
      %1072 = vmatpush.msra.mxu0 0.0
      %1073 = vmatpush.msra.mxu0 0.0
      %1074 = vmatpush.msra.mxu0 0.0
      %1075 = vmatpush.msra.mxu0 0.0
      %1076 = vmatpush.msra.mxu0 0.0
      %1077 = vmatpush.msra.mxu0 0.0
      %1078 = vmatpush.msra.mxu0 0.0
      %1079 = vmatpush.msra.mxu0 0.0
      %1080 = vmatpush.msra.mxu0 0.0
      %1081 = vmatpush.msra.mxu0 0.0
      %1082 = vmatpush.msra.mxu0 0.0
      %1083 = vmatpush.msra.mxu0 %v1066
      %1084 = vmatpush.msra.mxu0 %v1051
      %1085 = vmatpush.msra.mxu0 %v1049
      %1086 = vmatpush.msra.mxu0 %v1047
      %1087 = vmatmul.f32.gmra.mxu0 %v1063
      %v1088 = vpop.f32.mrf.mxu0
      %v1089 = vadd.f32 %v1059, %v1088
      %1090 = vdwg.mxu0
      %1091 = vmatpush.msra.mxu0 0.0
      %1092 = vmatpush.msra.mxu0 0.0
      %1093 = vmatpush.msra.mxu0 0.0
      %1094 = vmatpush.msra.mxu0 0.0
      %1095 = vmatpush.msra.mxu0 0.0
      %1096 = vmatpush.msra.mxu0 0.0
      %1097 = vmatpush.msra.mxu0 0.0
      %1098 = vmatpush.msra.mxu0 0.0
      %1099 = vmatpush.msra.mxu0 0.0
      %1100 = vmatpush.msra.mxu0 0.0
      %1101 = vmatpush.msra.mxu0 0.0
      %1102 = vmatpush.msra.mxu0 0.0
      %1103 = vmatpush.msra.mxu0 %v1069
      %1104 = vmatpush.msra.mxu0 %v1052
      %1105 = vmatpush.msra.mxu0 %v1050
      %1106 = vmatpush.msra.mxu0 %v1048
      %1107 = vmatmul.f32.gmra.mxu0 %v1063
      %v1108 = vpop.f32.mrf.mxu0
      %v1109 = vadd.f32 %v1059, %v1108
      %1110 = vdwg.mxu0
      %v1111 = vmax.f32 %v1089, 0.0
      %v1112 = vmax.f32 %v1109, 0.0
      %v1113 = vld [vmem:[%s378] sm:$0xff]
      %s1115 = scalar_lea.vmem [#allocation1], 1
      %1116 = vst [vmem:[%s1115] ss:$2 sm:$0xff] %v1113
      %v1117 = vld.sshfl [vmem:[#allocation1] sm:$0xff pattern:$0x75316420]
      %v1118 = vld.sshfl [vmem:[#allocation1 + $0x8] sm:$0xff pattern:$0x75316420]
      %vm1121 = vcmask 1043456
      %v1122 = vsel %vm1121, %v1111, %v1117
      %v1123 = vsel %vm1121, %v1112, %v1118
      %1125 = vrot.lane.b32.xlu0 %v1123, 34
      %v1126 = vpop.permute.xlu0 %1125
      %1129 = vrot.lane.b32.xlu0 %v1122, 34
      %v1130 = vpop.permute.xlu0 %1129
      %v1131 = vsel %vm397, %v1130, %v1126
      %v1134 = vsel %vm397, %v1126, %v1130
      %v1135 = vld [vmem:[%s2] ss:$8 sm:$0x3]
      %v1137 = vperm.slane %v1135, 0
      %v1138 = vperm.slane %v1135, 1
      %v1141 = vmul.f32 %v1134, %v1137
      %v1142 = vmul.f32 %v1131, %v1138
      %1143 = vst [vmem:[#allocation2] sm:$0xff] %v1141
      %1144 = vst [vmem:[#allocation2 + $0x8] sm:$0xff] %v1142
      %1145 = vrot.lane.b32.xlu0 %v1123, 33
      %v1146 = vpop.permute.xlu0 %1145
      %1148 = vrot.lane.b32.xlu0 %v1122, 33
      %v1149 = vpop.permute.xlu0 %1148
      %v1150 = vsel %vm427, %v1149, %v1146
      %v1153 = vsel %vm427, %v1146, %v1149
      %v1154 = vld [vmem:[%s432] ss:$8 sm:$0x3]
      %v1156 = vperm.slane %v1154, 0
      %v1157 = vperm.slane %v1154, 1
      %v1160 = vmul.f32 %v1153, %v1156
      %v1161 = vmul.f32 %v1150, %v1157
      %1162 = vst [vmem:[#allocation2 + $0x10] sm:$0xff] %v1160
      %1163 = vst [vmem:[#allocation2 + $0x18] sm:$0xff] %v1161
      %1164 = vrot.lane.b32.xlu0 %v1123, 32
      %v1165 = vpop.permute.xlu0 %1164
      %1167 = vrot.lane.b32.xlu0 %v1122, 32
      %v1168 = vpop.permute.xlu0 %1167
      %v1169 = vsel %vm454, %v1168, %v1165
      %v1172 = vsel %vm454, %v1165, %v1168
      %v1173 = vld [vmem:[%s459] ss:$8 sm:$0x3]
      %v1175 = vperm.slane %v1173, 0
      %v1176 = vperm.slane %v1173, 1
      %v1179 = vmul.f32 %v1172, %v1175
      %v1180 = vmul.f32 %v1169, %v1176
      %1181 = vst [vmem:[#allocation2 + $0x20] sm:$0xff] %v1179
      %1182 = vst [vmem:[#allocation2 + $0x28] sm:$0xff] %v1180
      %1183 = vrot.lane.b32.xlu0 %v1123, 31
      %v1184 = vpop.permute.xlu0 %1183
      %1186 = vrot.lane.b32.xlu0 %v1122, 31
      %v1187 = vpop.permute.xlu0 %1186
      %v1188 = vsel %vm481, %v1187, %v1184
      %v1191 = vsel %vm481, %v1184, %v1187
      %v1192 = vld [vmem:[%s486] ss:$8 sm:$0x3]
      %v1194 = vperm.slane %v1192, 0
      %v1195 = vperm.slane %v1192, 1
      %v1198 = vmul.f32 %v1191, %v1194
      %v1199 = vmul.f32 %v1188, %v1195
      %1200 = vst [vmem:[#allocation2 + $0x30] sm:$0xff] %v1198
      %1201 = vst [vmem:[#allocation2 + $0x38] sm:$0xff] %v1199
      %1202 = vrot.lane.b32.xlu0 %v1123, 30
      %v1203 = vpop.permute.xlu0 %1202
      %1205 = vrot.lane.b32.xlu0 %v1122, 30
      %v1206 = vpop.permute.xlu0 %1205
      %v1207 = vsel %vm508, %v1206, %v1203
      %v1210 = vsel %vm508, %v1203, %v1206
      %v1211 = vld [vmem:[%s513] ss:$8 sm:$0x3]
      %v1213 = vperm.slane %v1211, 0
      %v1214 = vperm.slane %v1211, 1
      %v1217 = vmul.f32 %v1210, %v1213
      %v1218 = vmul.f32 %v1207, %v1214
      %1219 = vst [vmem:[#allocation2 + $0x40] sm:$0xff] %v1217
      %1220 = vst [vmem:[#allocation2 + $0x48] sm:$0xff] %v1218
      %1221 = vrot.lane.b32.xlu0 %v1123, 18
      %v1222 = vpop.permute.xlu0 %1221
      %1224 = vrot.lane.b32.xlu0 %v1122, 18
      %v1225 = vpop.permute.xlu0 %1224
      %v1226 = vsel %vm535, %v1225, %v1222
      %v1229 = vsel %vm535, %v1222, %v1225
      %v1230 = vld [vmem:[%s540] ss:$8 sm:$0x3]
      %v1232 = vperm.slane %v1230, 0
      %v1233 = vperm.slane %v1230, 1
      %v1236 = vmul.f32 %v1229, %v1232
      %v1237 = vmul.f32 %v1226, %v1233
      %1238 = vst [vmem:[#allocation2 + $0x50] sm:$0xff] %v1236
      %1239 = vst [vmem:[#allocation2 + $0x58] sm:$0xff] %v1237
      %1240 = vrot.lane.b32.xlu0 %v1123, 17
      %v1241 = vpop.permute.xlu0 %1240
      %1243 = vrot.lane.b32.xlu0 %v1122, 17
      %v1244 = vpop.permute.xlu0 %1243
      %v1245 = vsel %vm562, %v1244, %v1241
      %v1248 = vsel %vm562, %v1241, %v1244
      %v1249 = vld [vmem:[%s567] ss:$8 sm:$0x3]
      %v1251 = vperm.slane %v1249, 0
      %v1252 = vperm.slane %v1249, 1
      %v1255 = vmul.f32 %v1248, %v1251
      %v1256 = vmul.f32 %v1245, %v1252
      %1257 = vst [vmem:[#allocation2 + $0x60] sm:$0xff] %v1255
      %1258 = vst [vmem:[#allocation2 + $0x68] sm:$0xff] %v1256
      %1259 = vrot.lane.b32.xlu0 %v1123, 16
      %v1260 = vpop.permute.xlu0 %1259
      %1262 = vrot.lane.b32.xlu0 %v1122, 16
      %v1263 = vpop.permute.xlu0 %1262
      %v1264 = vsel %vm589, %v1263, %v1260
      %v1267 = vsel %vm589, %v1260, %v1263
      %v1268 = vld [vmem:[%s594] ss:$8 sm:$0x3]
      %v1270 = vperm.slane %v1268, 0
      %v1271 = vperm.slane %v1268, 1
      %v1274 = vmul.f32 %v1267, %v1270
      %v1275 = vmul.f32 %v1264, %v1271
      %1276 = vst [vmem:[#allocation2 + $0x70] sm:$0xff] %v1274
      %1277 = vst [vmem:[#allocation2 + $0x78] sm:$0xff] %v1275
      %1278 = vrot.lane.b32.xlu0 %v1123, 15
      %v1279 = vpop.permute.xlu0 %1278
      %1281 = vrot.lane.b32.xlu0 %v1122, 15
      %v1282 = vpop.permute.xlu0 %1281
      %v1283 = vsel %vm616, %v1282, %v1279
      %v1286 = vsel %vm616, %v1279, %v1282
      %v1287 = vld [vmem:[%s621] ss:$8 sm:$0x3]
      %v1289 = vperm.slane %v1287, 0
      %v1290 = vperm.slane %v1287, 1
      %v1293 = vmul.f32 %v1286, %v1289
      %v1294 = vmul.f32 %v1283, %v1290
      %1295 = vst [vmem:[#allocation2 + $0x80] sm:$0xff] %v1293
      %1296 = vst [vmem:[#allocation2 + $0x88] sm:$0xff] %v1294
      %1297 = vrot.lane.b32.xlu0 %v1123, 14
      %v1298 = vpop.permute.xlu0 %1297
      %1300 = vrot.lane.b32.xlu0 %v1122, 14
      %v1301 = vpop.permute.xlu0 %1300
      %v1302 = vsel %vm643, %v1301, %v1298
      %v1305 = vsel %vm643, %v1298, %v1301
      %v1306 = vld [vmem:[%s648] ss:$8 sm:$0x3]
      %v1308 = vperm.slane %v1306, 0
      %v1309 = vperm.slane %v1306, 1
      %v1312 = vmul.f32 %v1305, %v1308
      %v1313 = vmul.f32 %v1302, %v1309
      %1314 = vst [vmem:[#allocation2 + $0x90] sm:$0xff] %v1312
      %1315 = vst [vmem:[#allocation2 + $0x98] sm:$0xff] %v1313
      %1316 = vrot.lane.b32.xlu0 %v1123, 2
      %v1317 = vpop.permute.xlu0 %1316
      %1319 = vrot.lane.b32.xlu0 %v1122, 2
      %v1320 = vpop.permute.xlu0 %1319
      %v1321 = vsel %vm670, %v1320, %v1317
      %v1324 = vsel %vm670, %v1317, %v1320
      %v1325 = vld [vmem:[%s675] ss:$8 sm:$0x3]
      %v1327 = vperm.slane %v1325, 0
      %v1328 = vperm.slane %v1325, 1
      %v1331 = vmul.f32 %v1324, %v1327
      %v1332 = vmul.f32 %v1321, %v1328
      %1333 = vst [vmem:[#allocation2 + $0xa0] sm:$0xff] %v1331
      %1334 = vst [vmem:[#allocation2 + $0xa8] sm:$0xff] %v1332
      %1335 = vrot.lane.b32.xlu0 %v1123, 1
      %v1336 = vpop.permute.xlu0 %1335
      %1338 = vrot.lane.b32.xlu0 %v1122, 1
      %v1339 = vpop.permute.xlu0 %1338
      %v1340 = vsel %vm697, %v1339, %v1336
      %v1343 = vsel %vm697, %v1336, %v1339
      %v1344 = vld [vmem:[%s702] ss:$8 sm:$0x3]
      %v1346 = vperm.slane %v1344, 0
      %v1347 = vperm.slane %v1344, 1
      %v1350 = vmul.f32 %v1343, %v1346
      %v1351 = vmul.f32 %v1340, %v1347
      %1352 = vst [vmem:[#allocation2 + $0xb0] sm:$0xff] %v1350
      %1353 = vst [vmem:[#allocation2 + $0xb8] sm:$0xff] %v1351
      %1354 = vst [vmem:[#allocation2 + $0xc0] sm:$0xff] %v1122
      %1355 = vst [vmem:[#allocation2 + $0xc8] sm:$0xff] %v1123
      %1356 = vrot.lane.b32.xlu0 %v1122, 127
      %v1357 = vpop.permute.xlu0 %1356
      %1358 = vrot.lane.b32.xlu0 %v1123, 127
      %v1359 = vpop.permute.xlu0 %1358
      %v1360 = vsel %vm726, %v1357, %v1359
      %v1364 = vsel %vm726, %v1359, %v1357
      %v1365 = vld [vmem:[%s732] ss:$8 sm:$0x3]
      %v1367 = vperm.slane %v1365, 0
      %v1368 = vperm.slane %v1365, 1
      %v1371 = vmul.f32 %v1360, %v1367
      %v1372 = vmul.f32 %v1364, %v1368
      %1373 = vst [vmem:[#allocation2 + $0xd0] sm:$0xff] %v1371
      %1374 = vst [vmem:[#allocation2 + $0xd8] sm:$0xff] %v1372
      %1375 = vrot.lane.b32.xlu0 %v1122, 126
      %v1376 = vpop.permute.xlu0 %1375
      %1377 = vrot.lane.b32.xlu0 %v1123, 126
      %v1378 = vpop.permute.xlu0 %1377
      %v1379 = vsel %vm753, %v1376, %v1378
      %v1383 = vsel %vm753, %v1378, %v1376
      %v1384 = vld [vmem:[%s759] ss:$8 sm:$0x3]
      %v1386 = vperm.slane %v1384, 0
      %v1387 = vperm.slane %v1384, 1
      %v1390 = vmul.f32 %v1379, %v1386
      %v1391 = vmul.f32 %v1383, %v1387
      %1392 = vst [vmem:[#allocation2 + $0xe0] sm:$0xff] %v1390
      %1393 = vst [vmem:[#allocation2 + $0xe8] sm:$0xff] %v1391
      %1394 = vrot.lane.b32.xlu0 %v1122, 114
      %v1395 = vpop.permute.xlu0 %1394
      %1396 = vrot.lane.b32.xlu0 %v1123, 114
      %v1397 = vpop.permute.xlu0 %1396
      %v1398 = vsel %vm780, %v1395, %v1397
      %v1402 = vsel %vm780, %v1397, %v1395
      %v1403 = vld [vmem:[%s786] ss:$8 sm:$0x3]
      %v1405 = vperm.slane %v1403, 0
      %v1406 = vperm.slane %v1403, 1
      %v1409 = vmul.f32 %v1398, %v1405
      %v1410 = vmul.f32 %v1402, %v1406
      %1411 = vst [vmem:[#allocation2 + $0xf0] sm:$0xff] %v1409
      %1412 = vst [vmem:[#allocation2 + $0xf8] sm:$0xff] %v1410
      %1413 = vrot.lane.b32.xlu0 %v1122, 113
      %v1414 = vpop.permute.xlu0 %1413
      %1415 = vrot.lane.b32.xlu0 %v1123, 113
      %v1416 = vpop.permute.xlu0 %1415
      %v1417 = vsel %vm807, %v1414, %v1416
      %v1421 = vsel %vm807, %v1416, %v1414
      %v1422 = vld [vmem:[%s813] ss:$8 sm:$0x3]
      %v1424 = vperm.slane %v1422, 0
      %v1425 = vperm.slane %v1422, 1
      %v1428 = vmul.f32 %v1417, %v1424
      %v1429 = vmul.f32 %v1421, %v1425
      %1430 = vst [vmem:[#allocation2 + $0x100] sm:$0xff] %v1428
      %1431 = vst [vmem:[#allocation2 + $0x108] sm:$0xff] %v1429
      %1432 = vrot.lane.b32.xlu0 %v1122, 112
      %v1433 = vpop.permute.xlu0 %1432
      %1434 = vrot.lane.b32.xlu0 %v1123, 112
      %v1435 = vpop.permute.xlu0 %1434
      %v1436 = vsel %vm834, %v1433, %v1435
      %v1440 = vsel %vm834, %v1435, %v1433
      %v1441 = vld [vmem:[%s840] ss:$8 sm:$0x3]
      %v1443 = vperm.slane %v1441, 0
      %v1444 = vperm.slane %v1441, 1
      %v1447 = vmul.f32 %v1436, %v1443
      %v1448 = vmul.f32 %v1440, %v1444
      %1449 = vst [vmem:[#allocation2 + $0x110] sm:$0xff] %v1447
      %1450 = vst [vmem:[#allocation2 + $0x118] sm:$0xff] %v1448
      %1451 = vrot.lane.b32.xlu0 %v1122, 111
      %v1452 = vpop.permute.xlu0 %1451
      %1453 = vrot.lane.b32.xlu0 %v1123, 111
      %v1454 = vpop.permute.xlu0 %1453
      %v1455 = vsel %vm861, %v1452, %v1454
      %v1459 = vsel %vm861, %v1454, %v1452
      %v1460 = vld [vmem:[%s867] ss:$8 sm:$0x3]
      %v1462 = vperm.slane %v1460, 0
      %v1463 = vperm.slane %v1460, 1
      %v1466 = vmul.f32 %v1455, %v1462
      %v1467 = vmul.f32 %v1459, %v1463
      %1468 = vst [vmem:[#allocation2 + $0x120] sm:$0xff] %v1466
      %1469 = vst [vmem:[#allocation2 + $0x128] sm:$0xff] %v1467
      %1470 = vrot.lane.b32.xlu0 %v1122, 110
      %v1471 = vpop.permute.xlu0 %1470
      %1472 = vrot.lane.b32.xlu0 %v1123, 110
      %v1473 = vpop.permute.xlu0 %1472
      %v1474 = vsel %vm888, %v1471, %v1473
      %v1478 = vsel %vm888, %v1473, %v1471
      %v1479 = vld [vmem:[%s894] ss:$8 sm:$0x3]
      %v1481 = vperm.slane %v1479, 0
      %v1482 = vperm.slane %v1479, 1
      %v1485 = vmul.f32 %v1474, %v1481
      %v1486 = vmul.f32 %v1478, %v1482
      %1487 = vst [vmem:[#allocation2 + $0x130] sm:$0xff] %v1485
      %1488 = vst [vmem:[#allocation2 + $0x138] sm:$0xff] %v1486
      %1489 = vrot.lane.b32.xlu0 %v1122, 98
      %v1490 = vpop.permute.xlu0 %1489
      %1491 = vrot.lane.b32.xlu0 %v1123, 98
      %v1492 = vpop.permute.xlu0 %1491
      %v1493 = vsel %vm915, %v1490, %v1492
      %v1497 = vsel %vm915, %v1492, %v1490
      %v1498 = vld [vmem:[%s921] ss:$8 sm:$0x3]
      %v1500 = vperm.slane %v1498, 0
      %v1501 = vperm.slane %v1498, 1
      %v1504 = vmul.f32 %v1493, %v1500
      %v1505 = vmul.f32 %v1497, %v1501
      %1506 = vst [vmem:[#allocation2 + $0x140] sm:$0xff] %v1504
      %1507 = vst [vmem:[#allocation2 + $0x148] sm:$0xff] %v1505
      %1508 = vrot.lane.b32.xlu0 %v1122, 97
      %v1509 = vpop.permute.xlu0 %1508
      %1510 = vrot.lane.b32.xlu0 %v1123, 97
      %v1511 = vpop.permute.xlu0 %1510
      %v1512 = vsel %vm942, %v1509, %v1511
      %v1516 = vsel %vm942, %v1511, %v1509
      %v1517 = vld [vmem:[%s948] ss:$8 sm:$0x3]
      %v1519 = vperm.slane %v1517, 0
      %v1520 = vperm.slane %v1517, 1
      %v1523 = vmul.f32 %v1512, %v1519
      %v1524 = vmul.f32 %v1516, %v1520
      %1525 = vst [vmem:[#allocation2 + $0x150] sm:$0xff] %v1523
      %1526 = vst [vmem:[#allocation2 + $0x158] sm:$0xff] %v1524
      %1527 = vrot.lane.b32.xlu0 %v1122, 96
      %v1528 = vpop.permute.xlu0 %1527
      %1529 = vrot.lane.b32.xlu0 %v1123, 96
      %v1530 = vpop.permute.xlu0 %1529
      %v1531 = vsel %vm969, %v1528, %v1530
      %v1535 = vsel %vm969, %v1530, %v1528
      %v1536 = vld [vmem:[%s975] ss:$8 sm:$0x3]
      %v1538 = vperm.slane %v1536, 0
      %v1539 = vperm.slane %v1536, 1
      %v1542 = vmul.f32 %v1531, %v1538
      %v1543 = vmul.f32 %v1535, %v1539
      %1544 = vst [vmem:[#allocation2 + $0x160] sm:$0xff] %v1542
      %1545 = vst [vmem:[#allocation2 + $0x168] sm:$0xff] %v1543
      %1546 = vrot.lane.b32.xlu0 %v1122, 95
      %v1547 = vpop.permute.xlu0 %1546
      %1548 = vrot.lane.b32.xlu0 %v1123, 95
      %v1549 = vpop.permute.xlu0 %1548
      %v1550 = vsel %vm996, %v1547, %v1549
      %v1554 = vsel %vm996, %v1549, %v1547
      %v1555 = vld [vmem:[%s1002] ss:$8 sm:$0x3]
      %v1557 = vperm.slane %v1555, 0
      %v1558 = vperm.slane %v1555, 1
      %v1561 = vmul.f32 %v1550, %v1557
      %v1562 = vmul.f32 %v1554, %v1558
      %1563 = vst [vmem:[#allocation2 + $0x170] sm:$0xff] %v1561
      %1564 = vst [vmem:[#allocation2 + $0x178] sm:$0xff] %v1562
      %1565 = vrot.lane.b32.xlu0 %v1122, 94
      %v1566 = vpop.permute.xlu0 %1565
      %1567 = vrot.lane.b32.xlu0 %v1123, 94
      %v1568 = vpop.permute.xlu0 %1567
      %v1569 = vsel %vm1023, %v1566, %v1568
      %v1573 = vsel %vm1023, %v1568, %v1566
      %v1574 = vld [vmem:[%s1029] ss:$8 sm:$0x3]
      %v1576 = vperm.slane %v1574, 0
      %v1577 = vperm.slane %v1574, 1
      %v1580 = vmul.f32 %v1569, %v1576
      %v1581 = vmul.f32 %v1573, %v1577
      %1582 = vst [vmem:[#allocation2 + $0x180] sm:$0xff] %v1580
      %1583 = vst [vmem:[#allocation2 + $0x188] sm:$0xff] %v1581
      %v1584 = vld [vmem:[%s5] sm:$0xff]
      %v1585 = vld [vmem:[%s5 + $0x8] sm:$0xff]
      %v1586 = vld [vmem:[#allocation2] sm:$0xff]
      %v1587 = vld [vmem:[#allocation2 + $0x8] sm:$0xff]
      %v1588 = vld [vmem:[#allocation2 + $0x10] sm:$0xff]
      %v1589 = vld [vmem:[#allocation2 + $0x18] sm:$0xff]
      %v1590 = vld [vmem:[#allocation2 + $0x20] sm:$0xff]
      %v1591 = vld [vmem:[#allocation2 + $0x28] sm:$0xff]
      %v1592 = vld [vmem:[#allocation2 + $0x30] sm:$0xff]
      %v1593 = vld [vmem:[#allocation2 + $0x38] sm:$0xff]
      %v1594 = vld [vmem:[#allocation2 + $0x40] sm:$0xff]
      %v1595 = vld [vmem:[#allocation2 + $0x48] sm:$0xff]
      %v1596 = vld [vmem:[#allocation2 + $0x50] sm:$0xff]
      %v1597 = vld [vmem:[#allocation2 + $0x58] sm:$0xff]
      %v1598 = vld [vmem:[#allocation2 + $0x60] sm:$0xff]
      %v1599 = vld [vmem:[#allocation2 + $0x68] sm:$0xff]
      %v1600 = vld [vmem:[#allocation2 + $0x70] sm:$0xff]
      %v1601 = vld [vmem:[#allocation2 + $0x78] sm:$0xff]
      %v1602 = vld [vmem:[#allocation2 + $0x80] sm:$0xff]
      %v1603 = vld [vmem:[#allocation2 + $0x88] sm:$0xff]
      %v1604 = vld [vmem:[#allocation2 + $0x90] sm:$0xff]
      %v1605 = vld [vmem:[#allocation2 + $0x98] sm:$0xff]
      %v1606 = vld [vmem:[#allocation2 + $0xa0] sm:$0xff]
      %v1607 = vld [vmem:[#allocation2 + $0xa8] sm:$0xff]
      %v1608 = vld [vmem:[#allocation2 + $0xb0] sm:$0xff]
      %v1609 = vld [vmem:[#allocation2 + $0xb8] sm:$0xff]
      %v1610 = vld [vmem:[#allocation2 + $0xc0] sm:$0xff]
      %v1611 = vld [vmem:[#allocation2 + $0xc8] sm:$0xff]
      %v1612 = vld [vmem:[#allocation2 + $0xd0] sm:$0xff]
      %v1613 = vld [vmem:[#allocation2 + $0xd8] sm:$0xff]
      %v1614 = vld [vmem:[#allocation2 + $0xe0] sm:$0xff]
      %v1615 = vld [vmem:[#allocation2 + $0xe8] sm:$0xff]
      %v1616 = vld [vmem:[#allocation2 + $0xf0] sm:$0xff]
      %v1617 = vld [vmem:[#allocation2 + $0xf8] sm:$0xff]
      %v1618 = vld [vmem:[#allocation2 + $0x100] sm:$0xff]
      %v1619 = vld [vmem:[#allocation2 + $0x108] sm:$0xff]
      %v1620 = vld [vmem:[#allocation2 + $0x110] sm:$0xff]
      %v1621 = vld [vmem:[#allocation2 + $0x118] sm:$0xff]
      %v1622 = vld [vmem:[#allocation2 + $0x120] sm:$0xff]
      %v1623 = vld [vmem:[#allocation2 + $0x128] sm:$0xff]
      %v1624 = vld [vmem:[#allocation2 + $0x130] sm:$0xff]
      %v1625 = vld [vmem:[#allocation2 + $0x138] sm:$0xff]
      %v1626 = vld [vmem:[#allocation2 + $0x140] sm:$0xff]
      %v1627 = vld [vmem:[#allocation2 + $0x148] sm:$0xff]
      %v1628 = vld [vmem:[#allocation2 + $0x150] sm:$0xff]
      %v1629 = vld [vmem:[#allocation2 + $0x158] sm:$0xff]
      %v1630 = vld [vmem:[#allocation2 + $0x160] sm:$0xff]
      %v1631 = vld [vmem:[#allocation2 + $0x168] sm:$0xff]
      %v1632 = vld [vmem:[#allocation2 + $0x170] sm:$0xff]
      %v1633 = vld [vmem:[#allocation2 + $0x178] sm:$0xff]
      %v1634 = vld [vmem:[#allocation2 + $0x180] sm:$0xff]
      %v1635 = vld [vmem:[#allocation2 + $0x188] sm:$0xff]
      %v1636 = vld [vmem:[%s6] sm:$0xff]
      %1638 = vset.pattern.permute.xlu0 0
      %1639 = vperm.xlu0 %1638, %v1636
      %v1640 = vpop.permute.xlu0 %1639
      %vm1642 = vcmask 588800
      %v1644 = vsel %vm1642, %v1585, 0
      %1646 = vmatpush.msra.mxu0 %v1616
      %1647 = vmatpush.msra.mxu0 %v1614
      %1648 = vmatpush.msra.mxu0 %v1612
      %1649 = vmatpush.msra.mxu0 %v1610
      %1650 = vmatpush.msra.mxu0 %v1608
      %1651 = vmatpush.msra.mxu0 %v1606
      %1652 = vmatpush.msra.mxu0 %v1604
      %1653 = vmatpush.msra.mxu0 %v1602
      %1654 = vmatpush.msra.mxu0 %v1600
      %1655 = vmatpush.msra.mxu0 %v1598
      %1656 = vmatpush.msra.mxu0 %v1596
      %1657 = vmatpush.msra.mxu0 %v1594
      %1658 = vmatpush.msra.mxu0 %v1592
      %1659 = vmatpush.msra.mxu0 %v1590
      %1660 = vmatpush.msra.mxu0 %v1588
      %1661 = vmatpush.msra.mxu0 %v1586
      %1662 = vmatmul.f32.gmra.mxu0 %v1584
      %v1663 = vpop.f32.mrf.mxu0
      %v1664 = vadd.f32 %v1640, %v1663
      %1665 = vdwg.mxu0
      %1666 = vmatpush.msra.mxu0 0.0
      %1667 = vmatpush.msra.mxu0 0.0
      %1668 = vmatpush.msra.mxu0 0.0
      %1669 = vmatpush.msra.mxu0 0.0
      %1670 = vmatpush.msra.mxu0 0.0
      %1671 = vmatpush.msra.mxu0 0.0
      %1672 = vmatpush.msra.mxu0 0.0
      %1673 = vmatpush.msra.mxu0 %v1634
      %1674 = vmatpush.msra.mxu0 %v1632
      %1675 = vmatpush.msra.mxu0 %v1630
      %1676 = vmatpush.msra.mxu0 %v1628
      %1677 = vmatpush.msra.mxu0 %v1626
      %1678 = vmatpush.msra.mxu0 %v1624
      %1679 = vmatpush.msra.mxu0 %v1622
      %1680 = vmatpush.msra.mxu0 %v1620
      %1681 = vmatpush.msra.mxu0 %v1618
      %1682 = vmatmul.f32.gmra.mxu0 %v1644
      %v1683 = vpop.f32.mrf.mxu0
      %v1684 = vadd.f32 %v1664, %v1683
      %1685 = vdwg.mxu0
      %1686 = vmatpush.msra.mxu0 %v1617
      %1687 = vmatpush.msra.mxu0 %v1615
      %1688 = vmatpush.msra.mxu0 %v1613
      %1689 = vmatpush.msra.mxu0 %v1611
      %1690 = vmatpush.msra.mxu0 %v1609
      %1691 = vmatpush.msra.mxu0 %v1607
      %1692 = vmatpush.msra.mxu0 %v1605
      %1693 = vmatpush.msra.mxu0 %v1603
      %1694 = vmatpush.msra.mxu0 %v1601
      %1695 = vmatpush.msra.mxu0 %v1599
      %1696 = vmatpush.msra.mxu0 %v1597
      %1697 = vmatpush.msra.mxu0 %v1595
      %1698 = vmatpush.msra.mxu0 %v1593
      %1699 = vmatpush.msra.mxu0 %v1591
      %1700 = vmatpush.msra.mxu0 %v1589
      %1701 = vmatpush.msra.mxu0 %v1587
      %1702 = vmatmul.f32.gmra.mxu0 %v1584
      %v1703 = vpop.f32.mrf.mxu0
      %v1704 = vadd.f32 %v1640, %v1703
      %1705 = vdwg.mxu0
      %1706 = vmatpush.msra.mxu0 0.0
      %1707 = vmatpush.msra.mxu0 0.0
      %1708 = vmatpush.msra.mxu0 0.0
      %1709 = vmatpush.msra.mxu0 0.0
      %1710 = vmatpush.msra.mxu0 0.0
      %1711 = vmatpush.msra.mxu0 0.0
      %1712 = vmatpush.msra.mxu0 0.0
      %1713 = vmatpush.msra.mxu0 %v1635
      %1714 = vmatpush.msra.mxu0 %v1633
      %1715 = vmatpush.msra.mxu0 %v1631
      %1716 = vmatpush.msra.mxu0 %v1629
      %1717 = vmatpush.msra.mxu0 %v1627
      %1718 = vmatpush.msra.mxu0 %v1625
      %1719 = vmatpush.msra.mxu0 %v1623
      %1720 = vmatpush.msra.mxu0 %v1621
      %1721 = vmatpush.msra.mxu0 %v1619
      %1722 = vmatmul.f32.gmra.mxu0 %v1644
      %v1723 = vpop.f32.mrf.mxu0
      %v1724 = vadd.f32 %v1704, %v1723
      %1725 = vdwg.mxu0
      %v1726 = vmax.f32 %v1684, 0.0
      %v1727 = vmax.f32 %v1724, 0.0
      %1729 = vrot.lane.b32.xlu0 %v1727, 34
      %v1730 = vpop.permute.xlu0 %1729
      %1733 = vrot.lane.b32.xlu0 %v1726, 34
      %v1734 = vpop.permute.xlu0 %1733
      %v1735 = vsel %vm397, %v1734, %v1730
      %v1738 = vsel %vm397, %v1730, %v1734
      %v1739 = vld [vmem:[%s2] ss:$8 sm:$0x3]
      %v1741 = vperm.slane %v1739, 0
      %v1742 = vperm.slane %v1739, 1
      %v1745 = vmul.f32 %v1738, %v1741
      %v1746 = vmul.f32 %v1735, %v1742
      %1747 = vst [vmem:[#allocation2] sm:$0xff] %v1745
      %1748 = vst [vmem:[#allocation2 + $0x8] sm:$0xff] %v1746
      %1749 = vrot.lane.b32.xlu0 %v1727, 33
      %v1750 = vpop.permute.xlu0 %1749
      %1752 = vrot.lane.b32.xlu0 %v1726, 33
      %v1753 = vpop.permute.xlu0 %1752
      %v1754 = vsel %vm427, %v1753, %v1750
      %v1757 = vsel %vm427, %v1750, %v1753
      %v1758 = vld [vmem:[%s432] ss:$8 sm:$0x3]
      %v1760 = vperm.slane %v1758, 0
      %v1761 = vperm.slane %v1758, 1
      %v1764 = vmul.f32 %v1757, %v1760
      %v1765 = vmul.f32 %v1754, %v1761
      %1766 = vst [vmem:[#allocation2 + $0x10] sm:$0xff] %v1764
      %1767 = vst [vmem:[#allocation2 + $0x18] sm:$0xff] %v1765
      %1768 = vrot.lane.b32.xlu0 %v1727, 32
      %v1769 = vpop.permute.xlu0 %1768
      %1771 = vrot.lane.b32.xlu0 %v1726, 32
      %v1772 = vpop.permute.xlu0 %1771
      %v1773 = vsel %vm454, %v1772, %v1769
      %v1776 = vsel %vm454, %v1769, %v1772
      %v1777 = vld [vmem:[%s459] ss:$8 sm:$0x3]
      %v1779 = vperm.slane %v1777, 0
      %v1780 = vperm.slane %v1777, 1
      %v1783 = vmul.f32 %v1776, %v1779
      %v1784 = vmul.f32 %v1773, %v1780
      %1785 = vst [vmem:[#allocation2 + $0x20] sm:$0xff] %v1783
      %1786 = vst [vmem:[#allocation2 + $0x28] sm:$0xff] %v1784
      %1787 = vrot.lane.b32.xlu0 %v1727, 31
      %v1788 = vpop.permute.xlu0 %1787
      %1790 = vrot.lane.b32.xlu0 %v1726, 31
      %v1791 = vpop.permute.xlu0 %1790
      %v1792 = vsel %vm481, %v1791, %v1788
      %v1795 = vsel %vm481, %v1788, %v1791
      %v1796 = vld [vmem:[%s486] ss:$8 sm:$0x3]
      %v1798 = vperm.slane %v1796, 0
      %v1799 = vperm.slane %v1796, 1
      %v1802 = vmul.f32 %v1795, %v1798
      %v1803 = vmul.f32 %v1792, %v1799
      %1804 = vst [vmem:[#allocation2 + $0x30] sm:$0xff] %v1802
      %1805 = vst [vmem:[#allocation2 + $0x38] sm:$0xff] %v1803
      %1806 = vrot.lane.b32.xlu0 %v1727, 30
      %v1807 = vpop.permute.xlu0 %1806
      %1809 = vrot.lane.b32.xlu0 %v1726, 30
      %v1810 = vpop.permute.xlu0 %1809
      %v1811 = vsel %vm508, %v1810, %v1807
      %v1814 = vsel %vm508, %v1807, %v1810
      %v1815 = vld [vmem:[%s513] ss:$8 sm:$0x3]
      %v1817 = vperm.slane %v1815, 0
      %v1818 = vperm.slane %v1815, 1
      %v1821 = vmul.f32 %v1814, %v1817
      %v1822 = vmul.f32 %v1811, %v1818
      %1823 = vst [vmem:[#allocation2 + $0x40] sm:$0xff] %v1821
      %1824 = vst [vmem:[#allocation2 + $0x48] sm:$0xff] %v1822
      %1825 = vrot.lane.b32.xlu0 %v1727, 18
      %v1826 = vpop.permute.xlu0 %1825
      %1828 = vrot.lane.b32.xlu0 %v1726, 18
      %v1829 = vpop.permute.xlu0 %1828
      %v1830 = vsel %vm535, %v1829, %v1826
      %v1833 = vsel %vm535, %v1826, %v1829
      %v1834 = vld [vmem:[%s540] ss:$8 sm:$0x3]
      %v1836 = vperm.slane %v1834, 0
      %v1837 = vperm.slane %v1834, 1
      %v1840 = vmul.f32 %v1833, %v1836
      %v1841 = vmul.f32 %v1830, %v1837
      %1842 = vst [vmem:[#allocation2 + $0x50] sm:$0xff] %v1840
      %1843 = vst [vmem:[#allocation2 + $0x58] sm:$0xff] %v1841
      %1844 = vrot.lane.b32.xlu0 %v1727, 17
      %v1845 = vpop.permute.xlu0 %1844
      %1847 = vrot.lane.b32.xlu0 %v1726, 17
      %v1848 = vpop.permute.xlu0 %1847
      %v1849 = vsel %vm562, %v1848, %v1845
      %v1852 = vsel %vm562, %v1845, %v1848
      %v1853 = vld [vmem:[%s567] ss:$8 sm:$0x3]
      %v1855 = vperm.slane %v1853, 0
      %v1856 = vperm.slane %v1853, 1
      %v1859 = vmul.f32 %v1852, %v1855
      %v1860 = vmul.f32 %v1849, %v1856
      %1861 = vst [vmem:[#allocation2 + $0x60] sm:$0xff] %v1859
      %1862 = vst [vmem:[#allocation2 + $0x68] sm:$0xff] %v1860
      %1863 = vrot.lane.b32.xlu0 %v1727, 16
      %v1864 = vpop.permute.xlu0 %1863
      %1866 = vrot.lane.b32.xlu0 %v1726, 16
      %v1867 = vpop.permute.xlu0 %1866
      %v1868 = vsel %vm589, %v1867, %v1864
      %v1871 = vsel %vm589, %v1864, %v1867
      %v1872 = vld [vmem:[%s594] ss:$8 sm:$0x3]
      %v1874 = vperm.slane %v1872, 0
      %v1875 = vperm.slane %v1872, 1
      %v1878 = vmul.f32 %v1871, %v1874
      %v1879 = vmul.f32 %v1868, %v1875
      %1880 = vst [vmem:[#allocation2 + $0x70] sm:$0xff] %v1878
      %1881 = vst [vmem:[#allocation2 + $0x78] sm:$0xff] %v1879
      %1882 = vrot.lane.b32.xlu0 %v1727, 15
      %v1883 = vpop.permute.xlu0 %1882
      %1885 = vrot.lane.b32.xlu0 %v1726, 15
      %v1886 = vpop.permute.xlu0 %1885
      %v1887 = vsel %vm616, %v1886, %v1883
      %v1890 = vsel %vm616, %v1883, %v1886
      %v1891 = vld [vmem:[%s621] ss:$8 sm:$0x3]
      %v1893 = vperm.slane %v1891, 0
      %v1894 = vperm.slane %v1891, 1
      %v1897 = vmul.f32 %v1890, %v1893
      %v1898 = vmul.f32 %v1887, %v1894
      %1899 = vst [vmem:[#allocation2 + $0x80] sm:$0xff] %v1897
      %1900 = vst [vmem:[#allocation2 + $0x88] sm:$0xff] %v1898
      %1901 = vrot.lane.b32.xlu0 %v1727, 14
      %v1902 = vpop.permute.xlu0 %1901
      %1904 = vrot.lane.b32.xlu0 %v1726, 14
      %v1905 = vpop.permute.xlu0 %1904
      %v1906 = vsel %vm643, %v1905, %v1902
      %v1909 = vsel %vm643, %v1902, %v1905
      %v1910 = vld [vmem:[%s648] ss:$8 sm:$0x3]
      %v1912 = vperm.slane %v1910, 0
      %v1913 = vperm.slane %v1910, 1
      %v1916 = vmul.f32 %v1909, %v1912
      %v1917 = vmul.f32 %v1906, %v1913
      %1918 = vst [vmem:[#allocation2 + $0x90] sm:$0xff] %v1916
      %1919 = vst [vmem:[#allocation2 + $0x98] sm:$0xff] %v1917
      %1920 = vrot.lane.b32.xlu0 %v1727, 2
      %v1921 = vpop.permute.xlu0 %1920
      %1923 = vrot.lane.b32.xlu0 %v1726, 2
      %v1924 = vpop.permute.xlu0 %1923
      %v1925 = vsel %vm670, %v1924, %v1921
      %v1928 = vsel %vm670, %v1921, %v1924
      %v1929 = vld [vmem:[%s675] ss:$8 sm:$0x3]
      %v1931 = vperm.slane %v1929, 0
      %v1932 = vperm.slane %v1929, 1
      %v1935 = vmul.f32 %v1928, %v1931
      %v1936 = vmul.f32 %v1925, %v1932
      %1937 = vst [vmem:[#allocation2 + $0xa0] sm:$0xff] %v1935
      %1938 = vst [vmem:[#allocation2 + $0xa8] sm:$0xff] %v1936
      %1939 = vrot.lane.b32.xlu0 %v1727, 1
      %v1940 = vpop.permute.xlu0 %1939
      %1942 = vrot.lane.b32.xlu0 %v1726, 1
      %v1943 = vpop.permute.xlu0 %1942
      %v1944 = vsel %vm697, %v1943, %v1940
      %v1947 = vsel %vm697, %v1940, %v1943
      %v1948 = vld [vmem:[%s702] ss:$8 sm:$0x3]
      %v1950 = vperm.slane %v1948, 0
      %v1951 = vperm.slane %v1948, 1
      %v1954 = vmul.f32 %v1947, %v1950
      %v1955 = vmul.f32 %v1944, %v1951
      %1956 = vst [vmem:[#allocation2 + $0xb0] sm:$0xff] %v1954
      %1957 = vst [vmem:[#allocation2 + $0xb8] sm:$0xff] %v1955
      %1958 = vst [vmem:[#allocation2 + $0xc0] sm:$0xff] %v1726
      %1959 = vst [vmem:[#allocation2 + $0xc8] sm:$0xff] %v1727
      %1960 = vrot.lane.b32.xlu0 %v1726, 127
      %v1961 = vpop.permute.xlu0 %1960
      %1962 = vrot.lane.b32.xlu0 %v1727, 127
      %v1963 = vpop.permute.xlu0 %1962
      %v1964 = vsel %vm726, %v1961, %v1963
      %v1968 = vsel %vm726, %v1963, %v1961
      %v1969 = vld [vmem:[%s732] ss:$8 sm:$0x3]
      %v1971 = vperm.slane %v1969, 0
      %v1972 = vperm.slane %v1969, 1
      %v1975 = vmul.f32 %v1964, %v1971
      %v1976 = vmul.f32 %v1968, %v1972
      %1977 = vst [vmem:[#allocation2 + $0xd0] sm:$0xff] %v1975
      %1978 = vst [vmem:[#allocation2 + $0xd8] sm:$0xff] %v1976
      %1979 = vrot.lane.b32.xlu0 %v1726, 126
      %v1980 = vpop.permute.xlu0 %1979
      %1981 = vrot.lane.b32.xlu0 %v1727, 126
      %v1982 = vpop.permute.xlu0 %1981
      %v1983 = vsel %vm753, %v1980, %v1982
      %v1987 = vsel %vm753, %v1982, %v1980
      %v1988 = vld [vmem:[%s759] ss:$8 sm:$0x3]
      %v1990 = vperm.slane %v1988, 0
      %v1991 = vperm.slane %v1988, 1
      %v1994 = vmul.f32 %v1983, %v1990
      %v1995 = vmul.f32 %v1987, %v1991
      %1996 = vst [vmem:[#allocation2 + $0xe0] sm:$0xff] %v1994
      %1997 = vst [vmem:[#allocation2 + $0xe8] sm:$0xff] %v1995
      %1998 = vrot.lane.b32.xlu0 %v1726, 114
      %v1999 = vpop.permute.xlu0 %1998
      %2000 = vrot.lane.b32.xlu0 %v1727, 114
      %v2001 = vpop.permute.xlu0 %2000
      %v2002 = vsel %vm780, %v1999, %v2001
      %v2006 = vsel %vm780, %v2001, %v1999
      %v2007 = vld [vmem:[%s786] ss:$8 sm:$0x3]
      %v2009 = vperm.slane %v2007, 0
      %v2010 = vperm.slane %v2007, 1
      %v2013 = vmul.f32 %v2002, %v2009
      %v2014 = vmul.f32 %v2006, %v2010
      %2015 = vst [vmem:[#allocation2 + $0xf0] sm:$0xff] %v2013
      %2016 = vst [vmem:[#allocation2 + $0xf8] sm:$0xff] %v2014
      %2017 = vrot.lane.b32.xlu0 %v1726, 113
      %v2018 = vpop.permute.xlu0 %2017
      %2019 = vrot.lane.b32.xlu0 %v1727, 113
      %v2020 = vpop.permute.xlu0 %2019
      %v2021 = vsel %vm807, %v2018, %v2020
      %v2025 = vsel %vm807, %v2020, %v2018
      %v2026 = vld [vmem:[%s813] ss:$8 sm:$0x3]
      %v2028 = vperm.slane %v2026, 0
      %v2029 = vperm.slane %v2026, 1
      %v2032 = vmul.f32 %v2021, %v2028
      %v2033 = vmul.f32 %v2025, %v2029
      %2034 = vst [vmem:[#allocation2 + $0x100] sm:$0xff] %v2032
      %2035 = vst [vmem:[#allocation2 + $0x108] sm:$0xff] %v2033
      %2036 = vrot.lane.b32.xlu0 %v1726, 112
      %v2037 = vpop.permute.xlu0 %2036
      %2038 = vrot.lane.b32.xlu0 %v1727, 112
      %v2039 = vpop.permute.xlu0 %2038
      %v2040 = vsel %vm834, %v2037, %v2039
      %v2044 = vsel %vm834, %v2039, %v2037
      %v2045 = vld [vmem:[%s840] ss:$8 sm:$0x3]
      %v2047 = vperm.slane %v2045, 0
      %v2048 = vperm.slane %v2045, 1
      %v2051 = vmul.f32 %v2040, %v2047
      %v2052 = vmul.f32 %v2044, %v2048
      %2053 = vst [vmem:[#allocation2 + $0x110] sm:$0xff] %v2051
      %2054 = vst [vmem:[#allocation2 + $0x118] sm:$0xff] %v2052
      %2055 = vrot.lane.b32.xlu0 %v1726, 111
      %v2056 = vpop.permute.xlu0 %2055
      %2057 = vrot.lane.b32.xlu0 %v1727, 111
      %v2058 = vpop.permute.xlu0 %2057
      %v2059 = vsel %vm861, %v2056, %v2058
      %v2063 = vsel %vm861, %v2058, %v2056
      %v2064 = vld [vmem:[%s867] ss:$8 sm:$0x3]
      %v2066 = vperm.slane %v2064, 0
      %v2067 = vperm.slane %v2064, 1
      %v2070 = vmul.f32 %v2059, %v2066
      %v2071 = vmul.f32 %v2063, %v2067
      %2072 = vst [vmem:[#allocation2 + $0x120] sm:$0xff] %v2070
      %2073 = vst [vmem:[#allocation2 + $0x128] sm:$0xff] %v2071
      %2074 = vrot.lane.b32.xlu0 %v1726, 110
      %v2075 = vpop.permute.xlu0 %2074
      %2076 = vrot.lane.b32.xlu0 %v1727, 110
      %v2077 = vpop.permute.xlu0 %2076
      %v2078 = vsel %vm888, %v2075, %v2077
      %v2082 = vsel %vm888, %v2077, %v2075
      %v2083 = vld [vmem:[%s894] ss:$8 sm:$0x3]
      %v2085 = vperm.slane %v2083, 0
      %v2086 = vperm.slane %v2083, 1
      %v2089 = vmul.f32 %v2078, %v2085
      %v2090 = vmul.f32 %v2082, %v2086
      %2091 = vst [vmem:[#allocation2 + $0x130] sm:$0xff] %v2089
      %2092 = vst [vmem:[#allocation2 + $0x138] sm:$0xff] %v2090
      %2093 = vrot.lane.b32.xlu0 %v1726, 98
      %v2094 = vpop.permute.xlu0 %2093
      %2095 = vrot.lane.b32.xlu0 %v1727, 98
      %v2096 = vpop.permute.xlu0 %2095
      %v2097 = vsel %vm915, %v2094, %v2096
      %v2101 = vsel %vm915, %v2096, %v2094
      %v2102 = vld [vmem:[%s921] ss:$8 sm:$0x3]
      %v2104 = vperm.slane %v2102, 0
      %v2105 = vperm.slane %v2102, 1
      %v2108 = vmul.f32 %v2097, %v2104
      %v2109 = vmul.f32 %v2101, %v2105
      %2110 = vst [vmem:[#allocation2 + $0x140] sm:$0xff] %v2108
      %2111 = vst [vmem:[#allocation2 + $0x148] sm:$0xff] %v2109
      %2112 = vrot.lane.b32.xlu0 %v1726, 97
      %v2113 = vpop.permute.xlu0 %2112
      %2114 = vrot.lane.b32.xlu0 %v1727, 97
      %v2115 = vpop.permute.xlu0 %2114
      %v2116 = vsel %vm942, %v2113, %v2115
      %v2120 = vsel %vm942, %v2115, %v2113
      %v2121 = vld [vmem:[%s948] ss:$8 sm:$0x3]
      %v2123 = vperm.slane %v2121, 0
      %v2124 = vperm.slane %v2121, 1
      %v2127 = vmul.f32 %v2116, %v2123
      %v2128 = vmul.f32 %v2120, %v2124
      %2129 = vst [vmem:[#allocation2 + $0x150] sm:$0xff] %v2127
      %2130 = vst [vmem:[#allocation2 + $0x158] sm:$0xff] %v2128
      %2131 = vrot.lane.b32.xlu0 %v1726, 96
      %v2132 = vpop.permute.xlu0 %2131
      %2133 = vrot.lane.b32.xlu0 %v1727, 96
      %v2134 = vpop.permute.xlu0 %2133
      %v2135 = vsel %vm969, %v2132, %v2134
      %v2139 = vsel %vm969, %v2134, %v2132
      %v2140 = vld [vmem:[%s975] ss:$8 sm:$0x3]
      %v2142 = vperm.slane %v2140, 0
      %v2143 = vperm.slane %v2140, 1
      %v2146 = vmul.f32 %v2135, %v2142
      %v2147 = vmul.f32 %v2139, %v2143
      %2148 = vst [vmem:[#allocation2 + $0x160] sm:$0xff] %v2146
      %2149 = vst [vmem:[#allocation2 + $0x168] sm:$0xff] %v2147
      %2150 = vrot.lane.b32.xlu0 %v1726, 95
      %v2151 = vpop.permute.xlu0 %2150
      %2152 = vrot.lane.b32.xlu0 %v1727, 95
      %v2153 = vpop.permute.xlu0 %2152
      %v2154 = vsel %vm996, %v2151, %v2153
      %v2158 = vsel %vm996, %v2153, %v2151
      %v2159 = vld [vmem:[%s1002] ss:$8 sm:$0x3]
      %v2161 = vperm.slane %v2159, 0
      %v2162 = vperm.slane %v2159, 1
      %v2165 = vmul.f32 %v2154, %v2161
      %v2166 = vmul.f32 %v2158, %v2162
      %2167 = vst [vmem:[#allocation2 + $0x170] sm:$0xff] %v2165
      %2168 = vst [vmem:[#allocation2 + $0x178] sm:$0xff] %v2166
      %2169 = vrot.lane.b32.xlu0 %v1726, 94
      %v2170 = vpop.permute.xlu0 %2169
      %2171 = vrot.lane.b32.xlu0 %v1727, 94
      %v2172 = vpop.permute.xlu0 %2171
      %v2173 = vsel %vm1023, %v2170, %v2172
      %v2177 = vsel %vm1023, %v2172, %v2170
      %v2178 = vld [vmem:[%s1029] ss:$8 sm:$0x3]
      %v2180 = vperm.slane %v2178, 0
      %v2181 = vperm.slane %v2178, 1
      %v2184 = vmul.f32 %v2173, %v2180
      %v2185 = vmul.f32 %v2177, %v2181
      %2186 = vst [vmem:[#allocation2 + $0x180] sm:$0xff] %v2184
      %2187 = vst [vmem:[#allocation2 + $0x188] sm:$0xff] %v2185
      %v2188 = vld [vmem:[%s7] sm:$0x1f]
      %v2189 = vld [vmem:[%s7 + $0x8] sm:$0x1f]
      %v2190 = vld [vmem:[#allocation2] sm:$0xff]
      %v2191 = vld [vmem:[#allocation2 + $0x8] sm:$0xff]
      %v2192 = vld [vmem:[#allocation2 + $0x10] sm:$0xff]
      %v2193 = vld [vmem:[#allocation2 + $0x18] sm:$0xff]
      %v2194 = vld [vmem:[#allocation2 + $0x20] sm:$0xff]
      %v2195 = vld [vmem:[#allocation2 + $0x28] sm:$0xff]
      %v2196 = vld [vmem:[#allocation2 + $0x30] sm:$0xff]
      %v2197 = vld [vmem:[#allocation2 + $0x38] sm:$0xff]
      %v2198 = vld [vmem:[#allocation2 + $0x40] sm:$0xff]
      %v2199 = vld [vmem:[#allocation2 + $0x48] sm:$0xff]
      %v2200 = vld [vmem:[#allocation2 + $0x50] sm:$0xff]
      %v2201 = vld [vmem:[#allocation2 + $0x58] sm:$0xff]
      %v2202 = vld [vmem:[#allocation2 + $0x60] sm:$0xff]
      %v2203 = vld [vmem:[#allocation2 + $0x68] sm:$0xff]
      %v2204 = vld [vmem:[#allocation2 + $0x70] sm:$0xff]
      %v2205 = vld [vmem:[#allocation2 + $0x78] sm:$0xff]
      %v2206 = vld [vmem:[#allocation2 + $0x80] sm:$0xff]
      %v2207 = vld [vmem:[#allocation2 + $0x88] sm:$0xff]
      %v2208 = vld [vmem:[#allocation2 + $0x90] sm:$0xff]
      %v2209 = vld [vmem:[#allocation2 + $0x98] sm:$0xff]
      %v2210 = vld [vmem:[#allocation2 + $0xa0] sm:$0xff]
      %v2211 = vld [vmem:[#allocation2 + $0xa8] sm:$0xff]
      %v2212 = vld [vmem:[#allocation2 + $0xb0] sm:$0xff]
      %v2213 = vld [vmem:[#allocation2 + $0xb8] sm:$0xff]
      %v2214 = vld [vmem:[#allocation2 + $0xc0] sm:$0xff]
      %v2215 = vld [vmem:[#allocation2 + $0xc8] sm:$0xff]
      %v2216 = vld [vmem:[#allocation2 + $0xd0] sm:$0xff]
      %v2217 = vld [vmem:[#allocation2 + $0xd8] sm:$0xff]
      %v2218 = vld [vmem:[#allocation2 + $0xe0] sm:$0xff]
      %v2219 = vld [vmem:[#allocation2 + $0xe8] sm:$0xff]
      %v2220 = vld [vmem:[#allocation2 + $0xf0] sm:$0xff]
      %v2221 = vld [vmem:[#allocation2 + $0xf8] sm:$0xff]
      %v2222 = vld [vmem:[#allocation2 + $0x100] sm:$0xff]
      %v2223 = vld [vmem:[#allocation2 + $0x108] sm:$0xff]
      %v2224 = vld [vmem:[#allocation2 + $0x110] sm:$0xff]
      %v2225 = vld [vmem:[#allocation2 + $0x118] sm:$0xff]
      %v2226 = vld [vmem:[#allocation2 + $0x120] sm:$0xff]
      %v2227 = vld [vmem:[#allocation2 + $0x128] sm:$0xff]
      %v2228 = vld [vmem:[#allocation2 + $0x130] sm:$0xff]
      %v2229 = vld [vmem:[#allocation2 + $0x138] sm:$0xff]
      %v2230 = vld [vmem:[#allocation2 + $0x140] sm:$0xff]
      %v2231 = vld [vmem:[#allocation2 + $0x148] sm:$0xff]
      %v2232 = vld [vmem:[#allocation2 + $0x150] sm:$0xff]
      %v2233 = vld [vmem:[#allocation2 + $0x158] sm:$0xff]
      %v2234 = vld [vmem:[#allocation2 + $0x160] sm:$0xff]
      %v2235 = vld [vmem:[#allocation2 + $0x168] sm:$0xff]
      %v2236 = vld [vmem:[#allocation2 + $0x170] sm:$0xff]
      %v2237 = vld [vmem:[#allocation2 + $0x178] sm:$0xff]
      %v2238 = vld [vmem:[#allocation2 + $0x180] sm:$0xff]
      %v2239 = vld [vmem:[#allocation2 + $0x188] sm:$0xff]
      %v2240 = vld [vmem:[%s8] sm:$0x1f]
      %2242 = vset.pattern.permute.xlu0 0
      %2243 = vperm.xlu0 %2242, %v2240
      %v2244 = vpop.permute.xlu0 %2243
      %v2247 = vsel %vm1642, %v2189, 0
      %2249 = vmatpush.msra.mxu0 %v2220
      %2250 = vmatpush.msra.mxu0 %v2218
      %2251 = vmatpush.msra.mxu0 %v2216
      %2252 = vmatpush.msra.mxu0 %v2214
      %2253 = vmatpush.msra.mxu0 %v2212
      %2254 = vmatpush.msra.mxu0 %v2210
      %2255 = vmatpush.msra.mxu0 %v2208
      %2256 = vmatpush.msra.mxu0 %v2206
      %2257 = vmatpush.msra.mxu0 %v2204
      %2258 = vmatpush.msra.mxu0 %v2202
      %2259 = vmatpush.msra.mxu0 %v2200
      %2260 = vmatpush.msra.mxu0 %v2198
      %2261 = vmatpush.msra.mxu0 %v2196
      %2262 = vmatpush.msra.mxu0 %v2194
      %2263 = vmatpush.msra.mxu0 %v2192
      %2264 = vmatpush.msra.mxu0 %v2190
      %2265 = vmatmul.f32.gmra.mxu0 %v2188
      %v2266 = vpop.f32.mrf.mxu0
      %v2267 = vadd.f32 %v2244, %v2266
      %2268 = vdwg.mxu0
      %2269 = vmatpush.msra.mxu0 0.0
      %2270 = vmatpush.msra.mxu0 0.0
      %2271 = vmatpush.msra.mxu0 0.0
      %2272 = vmatpush.msra.mxu0 0.0
      %2273 = vmatpush.msra.mxu0 0.0
      %2274 = vmatpush.msra.mxu0 0.0
      %2275 = vmatpush.msra.mxu0 0.0
      %2276 = vmatpush.msra.mxu0 %v2238
      %2277 = vmatpush.msra.mxu0 %v2236
      %2278 = vmatpush.msra.mxu0 %v2234
      %2279 = vmatpush.msra.mxu0 %v2232
      %2280 = vmatpush.msra.mxu0 %v2230
      %2281 = vmatpush.msra.mxu0 %v2228
      %2282 = vmatpush.msra.mxu0 %v2226
      %2283 = vmatpush.msra.mxu0 %v2224
      %2284 = vmatpush.msra.mxu0 %v2222
      %2285 = vmatmul.f32.gmra.mxu0 %v2247
      %v2286 = vpop.f32.mrf.mxu0
      %v2287 = vadd.f32 %v2267, %v2286
      %2288 = vdwg.mxu0
      %2289 = vmatpush.msra.mxu0 %v2221
      %2290 = vmatpush.msra.mxu0 %v2219
      %2291 = vmatpush.msra.mxu0 %v2217
      %2292 = vmatpush.msra.mxu0 %v2215
      %2293 = vmatpush.msra.mxu0 %v2213
      %2294 = vmatpush.msra.mxu0 %v2211
      %2295 = vmatpush.msra.mxu0 %v2209
      %2296 = vmatpush.msra.mxu0 %v2207
      %2297 = vmatpush.msra.mxu0 %v2205
      %2298 = vmatpush.msra.mxu0 %v2203
      %2299 = vmatpush.msra.mxu0 %v2201
      %2300 = vmatpush.msra.mxu0 %v2199
      %2301 = vmatpush.msra.mxu0 %v2197
      %2302 = vmatpush.msra.mxu0 %v2195
      %2303 = vmatpush.msra.mxu0 %v2193
      %2304 = vmatpush.msra.mxu0 %v2191
      %2305 = vmatmul.f32.gmra.mxu0 %v2188
      %v2306 = vpop.f32.mrf.mxu0
      %v2307 = vadd.f32 %v2244, %v2306
      %2308 = vdwg.mxu0
      %2309 = vmatpush.msra.mxu0 0.0
      %2310 = vmatpush.msra.mxu0 0.0
      %2311 = vmatpush.msra.mxu0 0.0
      %2312 = vmatpush.msra.mxu0 0.0
      %2313 = vmatpush.msra.mxu0 0.0
      %2314 = vmatpush.msra.mxu0 0.0
      %2315 = vmatpush.msra.mxu0 0.0
      %2316 = vmatpush.msra.mxu0 %v2239
      %2317 = vmatpush.msra.mxu0 %v2237
      %2318 = vmatpush.msra.mxu0 %v2235
      %2319 = vmatpush.msra.mxu0 %v2233
      %2320 = vmatpush.msra.mxu0 %v2231
      %2321 = vmatpush.msra.mxu0 %v2229
      %2322 = vmatpush.msra.mxu0 %v2227
      %2323 = vmatpush.msra.mxu0 %v2225
      %2324 = vmatpush.msra.mxu0 %v2223
      %2325 = vmatmul.f32.gmra.mxu0 %v2247
      %v2326 = vpop.f32.mrf.mxu0
      %v2327 = vadd.f32 %v2307, %v2326
      %2328 = vdwg.mxu0
      %v2331 = vrot.slane %v2327, 7
      %v2332 = vsel %vm413, %v2287, %v2331
      %2334 = vst.msk [vmem:[%s382] sm:$0x3] %vm419, %v2332
      %v2335 = vrot.slane %v2327, 4
      %v2336 = vsel %vm1121, %v2287, %v2335
      %v2337 = vsel %vm1121, %v2335, %v2287
      %v2338 = vrot.slane %v2337, 4
      %vm2339 = vcmask 1042432
      %vm2340 = vcmask 1046532
      %vm2341 = vmor %vm2339, %vm2340
      %v2342 = vrot.slane %v2336, 5
      %v2343 = vrot.slane %v2342, 4
      %v2344 = vrot.slane %v2338, 5
      %v2345 = vsel %vm2341, %v2343, %v2344
      %2347 = vst [vmem:[%s387] sm:$0xff] %v2345
      %p2348 = scmp.lt.s32.totalorder %s22, 1
      %s2349 = scalar_select %p2348, %s22, 1
      %s2350 = smul.addr %s2349, 2
      %s2351 = scalar_lea.vmem %s9, %s2350
      %p2352 = scmp.lt.s32.totalorder %s22, 1
      %s2353 = scalar_select %p2352, %s22, 1
      %s2354 = smul.addr %s2353, 2
      %s2355 = smul.addr %s2354, 4
      %s2356 = scalar_lea.vmem %s10, %s2355
      // Predicated region
      $region57: #{convblock_forward.1} parent=55 // pred_check
        %p2357 = pneg %p239
      $region58: #{convblock_forward.1} parent=55 // pred_check_branch
        %2359 = sbr.rel (%p2357) target = $region60
      $region59: #{convblock_forward.1} parent=55 // pred_region
        _
      $region60: #{convblock_forward.1} parent=55 // pred_fallthru
        _
      // Predicated region
      $region61: #{convblock_forward.1} parent=55 // pred_check
        %p2360 = pneg %p265
      $region62: #{convblock_forward.1} parent=55 // pred_check_branch
        %2362 = sbr.rel (%p2360) target = $region64
      $region63: #{convblock_forward.1} parent=55 // pred_region
        _
      $region64: #{convblock_forward.1} parent=55 // pred_fallthru
        _
    $region56: #{convblock_forward.1} parent=5 // pred_fallthru
      _
    %p2363 = scmp.le.s32.totalorder 2, %s17
    // Predicated region
    $region65: #{convblock_forward.1} parent=5 // pred_check
      %p2364 = pneg %p2363
    $region66: #{convblock_forward.1} parent=5 // pred_check_branch
      %2366 = sbr.rel (%p2364) target = $region68
    $region67: #{convblock_forward.1} parent=5 // pred_region
      %s2367 = ssub.s32 %s17, 2
      // Predicated region
      $region69: #{convblock_forward.1} parent=67 // pred_check
        %p2368 = pneg %p245
      $region70: #{convblock_forward.1} parent=67 // pred_check_branch
        %2370 = sbr.rel (%p2368) target = $region72
      $region71: #{convblock_forward.1} parent=67 // pred_region
        %p2371 = scmp.lt.s32.totalorder %s23, 1
        %s2372 = scalar_select %p2371, %s23, 1
        %s2373 = smul.addr %s2372, 2
        %s2374 = scalar_lea.vmem %s9, %s2373
      $region72: #{convblock_forward.1} parent=67 // pred_fallthru
        _
      // Predicated region
      $region73: #{convblock_forward.1} parent=67 // pred_check
        %p2375 = pneg %p271
      $region74: #{convblock_forward.1} parent=67 // pred_check_branch
        %2377 = sbr.rel (%p2375) target = $region76
      $region75: #{convblock_forward.1} parent=67 // pred_region
        %p2378 = scmp.lt.s32.totalorder %s23, 1
        %s2379 = scalar_select %p2378, %s23, 1
        %s2380 = smul.addr %s2379, 2
        %s2381 = smul.addr %s2380, 4
        %s2382 = scalar_lea.vmem %s10, %s2381
      $region76: #{convblock_forward.1} parent=67 // pred_fallthru
        _
    $region68: #{convblock_forward.1} parent=5 // pred_fallthru
      _
  $region6: #{convblock_forward.1} parent=0 // loop_footer
    %s21 = sadd.s32 1, %s17
  $region7: #{convblock_forward.1} parent=0 // loop_footer_branch
    %16 = sbr.rel target = $region3
  $region8: #{convblock_forward.1} parent=0 // loop_exit
    _

</llo_original>
